<compile_context>
chip_gen: v6e
topology: v6e:2x2x1
jax: 0.10.0
libtpu: 0.0.40
codegen_flags: <defaults>
</compile_context>

<pallas_src>
import functools

import jax
import jax.numpy as jnp
from jax import lax
from jax.experimental import pallas as pl
from jax.experimental.pallas import tpu as pltpu

LANES = 128
DEFAULT_BLOCK_ROWS = 1024   # (1024, 128) f32 = 512 KiB per input block
NUM_SHARDS = 2              # leading 'parallel' grid axis (v7x megacore)

_VALID_LOSSES = ("smL1", "L1", "L2", "eigen")


def _make_kernel(loss_type, rows, block_rows, num_shards):
    """Kernel producing per-shard partial sums for the masked depth loss."""
    eigen = loss_type == "eigen"

    def kernel(t_ref, p_ref, out_ref, *accs):
        c = pl.program_id(0)            # shard index (parallel axis)
        i = pl.program_id(1)            # step within shard (reduction axis)

        @pl.when(i == 0)
        def _init():
            for a in accs:
                a[...] = jnp.zeros_like(a)

        t = t_ref[...].astype(jnp.float32)
        p = p_ref[...].astype(jnp.float32)

        # Logical (unclamped) block index -> row-level tail mask. The
        # index_map clamps the DMA so out-of-range blocks re-read valid data,
        # but this mask uses the logical index so duplicated / garbage rows
        # (and the <128-element wrapper pad, whose target is 0) never count.
        b = i * num_shards + c
        row_iota = lax.broadcasted_iota(jnp.int32, (block_rows, LANES), 0)
        in_bounds = (b * block_rows + row_iota) < rows
        mask = jnp.logical_and(t > 0.0, in_bounds)

        if eigen:
            acc_sq, acc_lin, acc_cnt = accs
            ts = jnp.where(mask, t, 1.0)
            ps = jnp.where(mask, p, 1.0)
            diff = jnp.log(ts / ps)      # masked lanes -> log(1) == 0
            acc_sq[...] += diff * diff
            acc_lin[...] += diff
        else:
            acc_loss, acc_cnt = accs
            diff = t - p
            if loss_type == "smL1":
                loss = jnp.sqrt((diff * 0.5) ** 2 + 1.0) - 1.0
            elif loss_type == "L1":
                loss = jnp.abs(diff)
            else:                        # L2
                loss = diff * diff
            acc_loss[...] += jnp.where(mask, loss, 0.0)
        acc_cnt[...] += jnp.where(mask, 1.0, 0.0)

        @pl.when(i == pl.num_programs(1) - 1)
        def _finalize():
            # One-time cross-sublane reduce per accumulator (epilogue only).
            for j, a in enumerate(accs):
                red = jnp.sum(a[...], axis=0, keepdims=True)       # (1, LANES)
                out_ref[:, j:j + 1, :] = red[None]                 # (1,1,LANES)

    return kernel


@functools.partial(jax.jit, static_argnames=("loss_type", "block_rows"))
def depth_loss(pred, target, loss_type="L1", block_rows=DEFAULT_BLOCK_ROWS):
    """Pallas implementation of DepthLoss(loss_type)(pred, target)."""
    if loss_type not in _VALID_LOSSES:
        raise ValueError(f"unknown loss_type {loss_type!r}")
    assert pred.shape == target.shape
    assert block_rows % 8 == 0
    eigen = loss_type == "eigen"

    def _prep(x):
        if not jnp.issubdtype(x.dtype, jnp.floating):
            x = x.astype(jnp.float32)
        return x.reshape(-1)

    flat_t = _prep(target)
    flat_p = _prep(pred)
    n = flat_t.shape[0]

    # Only a sub-128-element pad (when needed) so the flat array reshapes to
    # (rows, 128); padded targets are 0 -> removed by the t > 0 mask, and the
    # in-kernel row mask covers the block tail beyond `rows`.
    rem = (-n) % LANES
    if rem:
        flat_t = jnp.pad(flat_t, (0, rem))
        flat_p = jnp.pad(flat_p, (0, rem))
    t2 = flat_t.reshape(-1, LANES)
    p2 = flat_p.reshape(-1, LANES)
    rows = t2.shape[0]

    total_blocks = pl.cdiv(rows, block_rows)
    num_shards = min(NUM_SHARDS, total_blocks)
    steps = pl.cdiv(total_blocks, num_shards)
    n_acc = 3 if eigen else 2

    def in_map(c, i):
        # Clamp so the DMA never starts past the end of the array; the kernel
        # masks duplicated rows out using the logical block index.
        return (jnp.minimum(i * num_shards + c, total_blocks - 1), 0)

    itemsize = t2.dtype.itemsize + p2.dtype.itemsize
    cost = pl.CostEstimate(
        flops=(10 if eigen else 8) * rows * LANES,
        transcendentals=(rows * LANES) if loss_type in ("eigen", "smL1") else 0,
        bytes_accessed=rows * LANES * itemsize + num_shards * n_acc * LANES * 4,
    )

    partials = pl.pallas_call(
        _make_kernel(loss_type, rows, block_rows, num_shards),
        out_shape=jax.ShapeDtypeStruct((num_shards, n_acc, LANES), jnp.float32),
        grid_spec=pltpu.PrefetchScalarGridSpec(
            num_scalar_prefetch=0,
            grid=(num_shards, steps),
            in_specs=[
                pl.BlockSpec((block_rows, LANES), in_map),
                pl.BlockSpec((block_rows, LANES), in_map),
            ],
            out_specs=pl.BlockSpec((1, n_acc, LANES), lambda c, i: (c, 0, 0)),
            scratch_shapes=[pltpu.VMEM((block_rows, LANES), jnp.float32)
                            for _ in range(n_acc)],
        ),
        compiler_params=pltpu.CompilerParams(
            dimension_semantics=("parallel", "arbitrary")),
        cost_estimate=cost,
    )(t2, p2)

    sums = jnp.sum(partials, axis=(0, 2))          # (n_acc,)
    cnt = sums[-1]
    if eigen:
        loss1 = sums[0] / cnt
        loss2 = (sums[1] * sums[1]) / (cnt * cnt)
        val = loss1 + 0.5 * loss2
    else:
        val = sums[0] / cnt                         # mean over masked elements
    # Empty mask: PyTorch returns (pred * 0).sum() == 0.0
    return jnp.where(cnt > 0.0, val, 0.0)


def _ref_depth_loss(pred, target, loss_type):
    """Pure-JAX reference reproducing the PyTorch semantics."""
    t = target.reshape(-1).astype(jnp.float32)
    p = pred.reshape(-1).astype(jnp.float32)
    mask = t > 0.0
    cnt = jnp.sum(mask.astype(jnp.float32))
    if loss_type in ("smL1", "L1", "L2"):
        diff = t - p
        if loss_type == "smL1":
            loss = jnp.sqrt((diff / 2.0) ** 2 + 1.0) - 1.0
        elif loss_type == "L1":
            loss = jnp.abs(diff)
        else:
            loss = diff ** 2
        val = jnp.sum(jnp.where(mask, loss, 0.0)) / cnt
    else:  # eigen
        diff = jnp.where(mask,
                         jnp.log(jnp.where(mask, t, 1.0))
                         - jnp.log(jnp.where(mask, p, 1.0)), 0.0)
        loss1 = jnp.sum(diff ** 2) / cnt
        loss2 = jnp.sum(diff) ** 2 / cnt ** 2
        val = loss1 + 0.5 * loss2
    return jnp.where(cnt > 0.0, val, 0.0)


if __name__ == "__main__":
    key = jax.random.PRNGKey(0)
    k1, k2, k3, k4 = jax.random.split(key, 4)

    def check(pred, target, lt, **kw):
        got = jax.block_until_ready(depth_loss(pred, target, loss_type=lt, **kw))
        want = jax.block_until_ready(_ref_depth_loss(pred, target, lt))
        assert jnp.allclose(got, want, rtol=1e-4, atol=1e-5), (lt, got, want)

    # Nx1xHxW depth maps; target mixes positive and zero/negative values so
    # the masking path is exercised.
    pred = jax.random.uniform(k1, (2, 1, 16, 16), jnp.float32,
                              minval=0.1, maxval=3.0)
    target = jax.random.uniform(k2, (2, 1, 16, 16), jnp.float32,
                                minval=-0.5, maxval=2.0)
    for lt in ("smL1", "L1", "L2", "eigen"):
        check(pred, target, lt)

    # Ragged tail: numel not a multiple of 128 (wrapper pad + row mask path).
    pred_r = jax.random.uniform(k3, (2, 1, 15, 17), jnp.float32,
                                minval=0.1, maxval=3.0)
    target_r = jax.random.uniform(k4, (2, 1, 15, 17), jnp.float32,
                                  minval=-0.5, maxval=2.0)
    for lt in ("L1", "eigen"):
        check(pred_r, target_r, lt)

    # Multi-block + shard path (tiny block_rows so a small shape produces
    # several grid steps per shard and an odd block count -> exercises clamp).
    pred_m = jax.random.uniform(k1, (2, 1, 40, 64), jnp.float32,
                                minval=0.1, maxval=3.0)
    target_m = jax.random.uniform(k2, (2, 1, 40, 64), jnp.float32,
                                  minval=-0.5, maxval=2.0)
    for lt in ("smL1", "L1", "L2", "eigen"):
        check(pred_m, target_m, lt, block_rows=8)

    # bf16 inputs: half the HBM read traffic, upcast happens in-kernel.
    check(pred_m.astype(jnp.bfloat16), target_m.astype(jnp.bfloat16), "L1")
    check(pred_m.astype(jnp.bfloat16), target_m.astype(jnp.bfloat16), "eigen")

    # Empty mask -> PyTorch returns (pred * 0).sum() == 0.0
    zero_t = -jnp.ones((2, 1, 16, 16), jnp.float32)
    got = jax.block_until_ready(depth_loss(pred, zero_t, loss_type="L1"))
    assert got == 0.0, got

    print("KERNEL_OK")
</pallas_src>

<mosaic_0001>
module attributes {stable_mosaic.version = 11 : i64} {
  func.func @kernel(%arg0: i32, %arg1: i32, %arg2: memref<1024x128xf32, #tpu.memory_space<vmem>>, %arg3: memref<1024x128xf32, #tpu.memory_space<vmem>>, %arg4: memref<1x2x128xf32, #tpu.memory_space<vmem>>, %arg5: memref<1024x128xf32, #tpu.memory_space<vmem>>, %arg6: memref<1024x128xf32, #tpu.memory_space<vmem>>) attributes {dimension_semantics = [#tpu.dimension_semantics<parallel>, #tpu.dimension_semantics<arbitrary>], iteration_bounds = array<i64: 1, 1>, scalar_prefetch = 0 : i64, scratch_operands = 2 : i64, tpu.core_type = #tpu.core_type<tc>, window_params = [{transform_indices = @transform_0, window_bounds = array<i64: 1024, 128>}, {transform_indices = @transform_1, window_bounds = array<i64: 1024, 128>}, {transform_indices = @transform_2, window_bounds = array<i64: 1, 2, 128>}]} {
    %c0_i32 = arith.constant 0 : i32
    %0 = arith.cmpi eq, %arg1, %c0_i32 : i32
    %1 = arith.extui %0 : i1 to i32
    %c0_i32_0 = arith.constant 0 : i32
    %2 = arith.cmpi ne, %1, %c0_i32_0 : i32
    scf.if %2 {
      %cst_20 = arith.constant 0.000000e+00 : f32
      %39 = vector.broadcast %cst_20 : f32 to vector<1024x128xf32>
      %c0_21 = arith.constant 0 : index
      %c0_22 = arith.constant 0 : index
      %40 = vector.load %arg5[%c0_21, %c0_22] : memref<1024x128xf32, #tpu.memory_space<vmem>>, vector<1024x128xf32>
      tpu.vector_store %arg5[%c0_21, %c0_22], %39 {strides = array<i32>} : memref<1024x128xf32, #tpu.memory_space<vmem>>, vector<1024x128xf32>,
      %cst_23 = arith.constant 0.000000e+00 : f32
      %41 = vector.broadcast %cst_23 : f32 to vector<1024x128xf32>
      %c0_24 = arith.constant 0 : index
      %c0_25 = arith.constant 0 : index
      %42 = vector.load %arg6[%c0_24, %c0_25] : memref<1024x128xf32, #tpu.memory_space<vmem>>, vector<1024x128xf32>
      tpu.vector_store %arg6[%c0_24, %c0_25], %41 {strides = array<i32>} : memref<1024x128xf32, #tpu.memory_space<vmem>>, vector<1024x128xf32>,
    } else {
    }
    %c0 = arith.constant 0 : index
    %c0_1 = arith.constant 0 : index
    %3 = vector.load %arg2[%c0, %c0_1] : memref<1024x128xf32, #tpu.memory_space<vmem>>, vector<1024x128xf32>
    %c0_2 = arith.constant 0 : index
    %c0_3 = arith.constant 0 : index
    %4 = vector.load %arg3[%c0_2, %c0_3] : memref<1024x128xf32, #tpu.memory_space<vmem>>, vector<1024x128xf32>
    %c1_i32 = arith.constant 1 : i32
    %5 = arith.muli %arg1, %c1_i32 : i32
    %6 = arith.addi %5, %arg0 : i32
    %7 = tpu.iota {dimensions = array<i32: 0>} : vector<1024x128xi32>
    %c1024_i32 = arith.constant 1024 : i32
    %8 = arith.muli %6, %c1024_i32 : i32
    %9 = vector.broadcast %8 : i32 to vector<1024x128xi32>
    %10 = arith.addi %9, %7 : vector<1024x128xi32>
    %c4_i32 = arith.constant 4 : i32
    %11 = vector.broadcast %c4_i32 : i32 to vector<1024x128xi32>
    %12 = arith.cmpi slt, %10, %11 : vector<1024x128xi32>
    %cst = arith.constant 0.000000e+00 : f32
    %13 = vector.broadcast %cst : f32 to vector<1024x128xf32>
    %14 = arith.cmpf ogt, %3, %13 : vector<1024x128xf32>
    %15 = arith.andi %14, %12 : vector<1024x128xi1>
    %16 = arith.subf %3, %4 : vector<1024x128xf32>
    %cst_4 = arith.constant 5.000000e-01 : f32
    %17 = vector.broadcast %cst_4 : f32 to vector<1024x128xf32>
    %18 = arith.mulf %16, %17 : vector<1024x128xf32>
    %19 = arith.mulf %18, %18 : vector<1024x128xf32>
    %cst_5 = arith.constant 1.000000e+00 : f32
    %20 = vector.broadcast %cst_5 : f32 to vector<1024x128xf32>
    %21 = arith.addf %19, %20 : vector<1024x128xf32>
    %22 = math.sqrt %21 : vector<1024x128xf32>
    %cst_6 = arith.constant 1.000000e+00 : f32
    %23 = vector.broadcast %cst_6 : f32 to vector<1024x128xf32>
    %24 = arith.subf %22, %23 : vector<1024x128xf32>
    %c0_7 = arith.constant 0 : index
    %c0_8 = arith.constant 0 : index
    %25 = vector.load %arg5[%c0_7, %c0_8] : memref<1024x128xf32, #tpu.memory_space<vmem>>, vector<1024x128xf32>
    %cst_9 = arith.constant 0.000000e+00 : f32
    %26 = vector.broadcast %cst_9 : f32 to vector<1024x128xf32>
    %27 = arith.select %15, %24, %26 : vector<1024x128xi1>, vector<1024x128xf32>
    %28 = arith.addf %25, %27 : vector<1024x128xf32>
    %c0_10 = arith.constant 0 : index
    %c0_11 = arith.constant 0 : index
    %29 = vector.load %arg5[%c0_10, %c0_11] : memref<1024x128xf32, #tpu.memory_space<vmem>>, vector<1024x128xf32>
    tpu.vector_store %arg5[%c0_10, %c0_11], %28 {strides = array<i32>} : memref<1024x128xf32, #tpu.memory_space<vmem>>, vector<1024x128xf32>,
    %c0_12 = arith.constant 0 : index
    %c0_13 = arith.constant 0 : index
    %30 = vector.load %arg6[%c0_12, %c0_13] : memref<1024x128xf32, #tpu.memory_space<vmem>>, vector<1024x128xf32>
    %cst_14 = arith.constant 1.000000e+00 : f32
    %cst_15 = arith.constant 0.000000e+00 : f32
    %31 = vector.broadcast %cst_14 : f32 to vector<1024x128xf32>
    %32 = vector.broadcast %cst_15 : f32 to vector<1024x128xf32>
    %33 = arith.select %15, %31, %32 : vector<1024x128xi1>, vector<1024x128xf32>
    %34 = arith.addf %30, %33 : vector<1024x128xf32>
    %c0_16 = arith.constant 0 : index
    %c0_17 = arith.constant 0 : index
    %35 = vector.load %arg6[%c0_16, %c0_17] : memref<1024x128xf32, #tpu.memory_space<vmem>>, vector<1024x128xf32>
    tpu.vector_store %arg6[%c0_16, %c0_17], %34 {strides = array<i32>} : memref<1024x128xf32, #tpu.memory_space<vmem>>, vector<1024x128xf32>,
    %c0_i32_18 = arith.constant 0 : i32
    %36 = arith.cmpi eq, %arg1, %c0_i32_18 : i32
    %37 = arith.extui %36 : i1 to i32
    %c0_i32_19 = arith.constant 0 : i32
    %38 = arith.cmpi ne, %37, %c0_i32_19 : i32
    scf.if %38 {
      %c0_20 = arith.constant 0 : index
      %c0_21 = arith.constant 0 : index
      %39 = vector.load %arg5[%c0_20, %c0_21] : memref<1024x128xf32, #tpu.memory_space<vmem>>, vector<1024x128xf32>
      %cst_22 = arith.constant dense<0.000000e+00> : vector<128xf32>
      %40 = vector.multi_reduction <add>, %39, %cst_22 [0] : vector<1024x128xf32> to vector<128xf32>
      %41 = vector.shape_cast %40 : vector<128xf32> to vector<1x128xf32>
      %42 = vector.shape_cast %41 : vector<1x128xf32> to vector<1x1x128xf32>
      %c0_23 = arith.constant 0 : index
      %c0_24 = arith.constant 0 : index
      %c0_25 = arith.constant 0 : index
      %43 = vector.load %arg4[%c0_23, %c0_24, %c0_25] : memref<1x2x128xf32, #tpu.memory_space<vmem>>, vector<1x1x128xf32>
      tpu.vector_store %arg4[%c0_23, %c0_24, %c0_25], %42 {strides = array<i32>} : memref<1x2x128xf32, #tpu.memory_space<vmem>>, vector<1x1x128xf32>,
      %c0_26 = arith.constant 0 : index
      %c0_27 = arith.constant 0 : index
      %44 = vector.load %arg6[%c0_26, %c0_27] : memref<1024x128xf32, #tpu.memory_space<vmem>>, vector<1024x128xf32>
      %cst_28 = arith.constant dense<0.000000e+00> : vector<128xf32>
      %45 = vector.multi_reduction <add>, %44, %cst_28 [0] : vector<1024x128xf32> to vector<128xf32>
      %46 = vector.shape_cast %45 : vector<128xf32> to vector<1x128xf32>
      %47 = vector.shape_cast %46 : vector<1x128xf32> to vector<1x1x128xf32>
      %c0_29 = arith.constant 0 : index
      %c1 = arith.constant 1 : index
      %c0_30 = arith.constant 0 : index
      %48 = vector.load %arg4[%c0_29, %c1, %c0_30] : memref<1x2x128xf32, #tpu.memory_space<vmem>>, vector<1x1x128xf32>
      tpu.vector_store %arg4[%c0_29, %c1, %c0_30], %47 {strides = array<i32>} : memref<1x2x128xf32, #tpu.memory_space<vmem>>, vector<1x1x128xf32>,
    } else {
    }
    return
  }
  func.func @transform_0(%arg0: i32, %arg1: i32) -> (i32, i32) {
    %c1_i32 = arith.constant 1 : i32
    %0 = arith.muli %arg1, %c1_i32 : i32
    %1 = arith.addi %0, %arg0 : i32
    %c0_i32 = arith.constant 0 : i32
    %2 = arith.minsi %1, %c0_i32 : i32
    %c0_i32_0 = arith.constant 0 : i32
    %c0_i32_1 = arith.constant 0 : i32
    return %2, %c0_i32_0 : i32, i32
  }
  func.func @transform_1(%arg0: i32, %arg1: i32) -> (i32, i32) {
    %c1_i32 = arith.constant 1 : i32
    %0 = arith.muli %arg1, %c1_i32 : i32
    %1 = arith.addi %0, %arg0 : i32
    %c0_i32 = arith.constant 0 : i32
    %2 = arith.minsi %1, %c0_i32 : i32
    %c0_i32_0 = arith.constant 0 : i32
    %c0_i32_1 = arith.constant 0 : i32
    return %2, %c0_i32_0 : i32, i32
  }
  func.func @transform_2(%arg0: i32, %arg1: i32) -> (i32, i32, i32) {
    %c0_i32 = arith.constant 0 : i32
    %c0_i32_0 = arith.constant 0 : i32
    %c0_i32_1 = arith.constant 0 : i32
    return %arg0, %c0_i32, %c0_i32_0 : i32, i32, i32
  }
}

</mosaic_0001>

<llo_original>
// kernel: depth_loss.1
$region0: #{depth_loss.1}
  #allocation0 [shape = 'u32[]', space=smem, size = 0x4, offset = 0x4, fixed_abs, tag = 'smem constant byte address 0x4 - core index']
  #allocation1 [shape = 'u32[144,128]{1,0:T(1,128)}', space=vmem, size = 0x12000, scoped, tag = 'internal scratch']
  #allocation2 [shape = 'f32[1024,128]{1,0:T(8,128)}', space=vmem, size = 0x80000, scoped, tag = 'scratch operand']
  #allocation3 [shape = 'f32[1024,128]{1,0:T(8,128)}', space=vmem, size = 0x80000, scoped, tag = 'scratch operand']
  %s0 = inlined_call_operand.vmem [shape: f32[4,128], index: 0, kind: input, shape index: {}]
  %s1 = inlined_call_operand.vmem [shape: f32[4,128], index: 1, kind: input, shape index: {}]
  %s2 = inlined_call_operand.vmem [shape: f32[1,2,128], index: 2, kind: output, shape index: {}]
  %s3 = sld [smem:[#allocation0]]
  $region26: #{depth_loss.1} parent=0
    _
  %s5 = ssub.s32 1, %s3
  %s6 = scalar_select 0, %s5, %s3
  // Predicated region
  $region2: #{depth_loss.1} parent=0 // pred_check
    _
  $region3: #{depth_loss.1} parent=0 // pred_check_branch
    %8 = sbr.rel (0) target = $region5
  $region4: #{depth_loss.1} parent=0 // pred_region
    %s9 = sadd.s32 0, 0
    %p10 = scmp.lt.s32.totalorder %s9, 0
    %s11 = scalar_select %p10, %s9, 0
    %s12 = smul.u32 256, %s11
    %s13 = ssub.s32 1, %s12
    %s14 = smul.u32 64, %s13
    %p15 = scmp.lt.s32.totalorder %s12, 0
    %s16 = scalar_select %p15, %s12, 0
    %s17 = smul.addr %s16, 4
    %s18 = scalar_lea.vmem %s0, %s17
    %s19 = sadd.s32 0, 0
    %p20 = scmp.lt.s32.totalorder %s19, 0
    %s21 = scalar_select %p20, %s19, 0
    %s22 = smul.u32 256, %s21
    %s23 = ssub.s32 1, %s22
    %s24 = smul.u32 64, %s23
  $region5: #{depth_loss.1} parent=0 // pred_fallthru
    _
  // Predicated region
  $region6: #{depth_loss.1} parent=0 // pred_check
    _
  $region7: #{depth_loss.1} parent=0 // pred_check_branch
    %26 = sbr.rel (0) target = $region9
  $region8: #{depth_loss.1} parent=0 // pred_region
    %s27 = sadd.s32 0, 0
    %p28 = scmp.lt.s32.totalorder %s27, 0
    %s29 = scalar_select %p28, %s27, 0
    %s30 = smul.u32 256, %s29
    %s31 = ssub.s32 1, %s30
    %s32 = smul.u32 64, %s31
    %p33 = scmp.lt.s32.totalorder %s30, 0
    %s34 = scalar_select %p33, %s30, 0
    %s35 = smul.addr %s34, 4
    %s36 = scalar_lea.vmem %s1, %s35
    %s37 = sadd.s32 0, 0
    %p38 = scmp.lt.s32.totalorder %s37, 0
    %s39 = scalar_select %p38, %s37, 0
    %s40 = smul.u32 256, %s39
    %s41 = ssub.s32 1, %s40
    %s42 = smul.u32 64, %s41
  $region9: #{depth_loss.1} parent=0 // pred_fallthru
    _
  %s43 = sadd.s32 0, 0
  %p44 = scmp.lt.s32.totalorder %s43, 0
  %s45 = scalar_select %p44, %s43, 0
  %s46 = smul.u32 256, %s45
  %s47 = ssub.s32 1, %s46
  %s48 = smul.u32 64, %s47
  %p49 = scmp.lt.s32.totalorder %s46, 0
  %s50 = scalar_select %p49, %s46, 0
  %s51 = smul.addr %s50, 4
  %s52 = scalar_lea.vmem %s0, %s51
  %s53 = sadd.s32 0, 0
  %p54 = scmp.lt.s32.totalorder %s53, 0
  %s55 = scalar_select %p54, %s53, 0
  %s56 = smul.u32 256, %s55
  %s57 = ssub.s32 1, %s56
  %s58 = smul.u32 64, %s57
  %p59 = scmp.lt.s32.totalorder %s56, 0
  %s60 = scalar_select %p59, %s56, 0
  %s61 = smul.addr %s60, 4
  %s62 = scalar_lea.vmem %s1, %s61
  %s63 = sadd.s32 0, 0
  %p64 = scmp.lt.s32.totalorder %s63, 0
  %s65 = scalar_select %p64, %s63, 0
  %s66 = smul.u32 256, %s65
  %s67 = ssub.s32 1, %s66
  %s68 = smul.u32 64, %s67
  %p69 = scmp.lt.s32.totalorder %s66, 0
  %s70 = scalar_select %p69, %s66, 0
  %s71 = smul.addr %s70, 4
  %s72 = scalar_lea.vmem %s0, %s71
  %s73 = sadd.s32 0, 0
  %p74 = scmp.lt.s32.totalorder %s73, 0
  %s75 = scalar_select %p74, %s73, 0
  %s76 = smul.u32 256, %s75
  %s77 = ssub.s32 1, %s76
  %s78 = smul.u32 64, %s77
  %s79 = sadd.s32 0, 0
  %p80 = scmp.lt.s32.totalorder %s79, 0
  %s81 = scalar_select %p80, %s79, 0
  %s82 = smul.u32 256, %s81
  %s83 = ssub.s32 1, %s82
  %s84 = smul.u32 64, %s83
  %p85 = scmp.lt.s32.totalorder %s82, 0
  %s86 = scalar_select %p85, %s82, 0
  %s87 = smul.addr %s86, 4
  %s88 = scalar_lea.vmem %s1, %s87
  %s89 = sadd.s32 0, 0
  %p90 = scmp.lt.s32.totalorder %s89, 0
  %s91 = scalar_select %p90, %s89, 0
  %s92 = smul.u32 256, %s91
  %s93 = ssub.s32 1, %s92
  %s94 = smul.u32 64, %s93
  %p95 = scmp.eq.s32.totalorder 0, 0
  // Predicated region
  $region10: #{depth_loss.1} parent=0 // pred_check
    %p96 = pneg %p95
  $region11: #{depth_loss.1} parent=0 // pred_check_branch
    %98 = sbr.rel (%p96) target = $region13
  $region12: #{depth_loss.1} parent=0 // pred_region
    %99 = vst [vmem:[#allocation2] sm:$0xff] 0.0
    %100 = vst [vmem:[#allocation2 + $0x8] sm:$0xff] 0.0
    %101 = vst [vmem:[#allocation2 + $0x10] sm:$0xff] 0.0
    %102 = vst [vmem:[#allocation2 + $0x18] sm:$0xff] 0.0
    %103 = vst [vmem:[#allocation2 + $0x20] sm:$0xff] 0.0
    %104 = vst [vmem:[#allocation2 + $0x28] sm:$0xff] 0.0
    %105 = vst [vmem:[#allocation2 + $0x30] sm:$0xff] 0.0
    %106 = vst [vmem:[#allocation2 + $0x38] sm:$0xff] 0.0
    %107 = vst [vmem:[#allocation2 + $0x40] sm:$0xff] 0.0
    %108 = vst [vmem:[#allocation2 + $0x48] sm:$0xff] 0.0
    %109 = vst [vmem:[#allocation2 + $0x50] sm:$0xff] 0.0
    %110 = vst [vmem:[#allocation2 + $0x58] sm:$0xff] 0.0
    %111 = vst [vmem:[#allocation2 + $0x60] sm:$0xff] 0.0
    %112 = vst [vmem:[#allocation2 + $0x68] sm:$0xff] 0.0
    %113 = vst [vmem:[#allocation2 + $0x70] sm:$0xff] 0.0
    %114 = vst [vmem:[#allocation2 + $0x78] sm:$0xff] 0.0
    %115 = vst [vmem:[#allocation2 + $0x80] sm:$0xff] 0.0
    %116 = vst [vmem:[#allocation2 + $0x88] sm:$0xff] 0.0
    %117 = vst [vmem:[#allocation2 + $0x90] sm:$0xff] 0.0
    %118 = vst [vmem:[#allocation2 + $0x98] sm:$0xff] 0.0
    %119 = vst [vmem:[#allocation2 + $0xa0] sm:$0xff] 0.0
    %120 = vst [vmem:[#allocation2 + $0xa8] sm:$0xff] 0.0
    %121 = vst [vmem:[#allocation2 + $0xb0] sm:$0xff] 0.0
    %122 = vst [vmem:[#allocation2 + $0xb8] sm:$0xff] 0.0
    %123 = vst [vmem:[#allocation2 + $0xc0] sm:$0xff] 0.0
    %124 = vst [vmem:[#allocation2 + $0xc8] sm:$0xff] 0.0
    %125 = vst [vmem:[#allocation2 + $0xd0] sm:$0xff] 0.0
    %126 = vst [vmem:[#allocation2 + $0xd8] sm:$0xff] 0.0
    %127 = vst [vmem:[#allocation2 + $0xe0] sm:$0xff] 0.0
    %128 = vst [vmem:[#allocation2 + $0xe8] sm:$0xff] 0.0
    %129 = vst [vmem:[#allocation2 + $0xf0] sm:$0xff] 0.0
    %130 = vst [vmem:[#allocation2 + $0xf8] sm:$0xff] 0.0
    %131 = vst [vmem:[#allocation2 + $0x100] sm:$0xff] 0.0
    %132 = vst [vmem:[#allocation2 + $0x108] sm:$0xff] 0.0
    %133 = vst [vmem:[#allocation2 + $0x110] sm:$0xff] 0.0
    %134 = vst [vmem:[#allocation2 + $0x118] sm:$0xff] 0.0
    %135 = vst [vmem:[#allocation2 + $0x120] sm:$0xff] 0.0
    %136 = vst [vmem:[#allocation2 + $0x128] sm:$0xff] 0.0
    %137 = vst [vmem:[#allocation2 + $0x130] sm:$0xff] 0.0
    %138 = vst [vmem:[#allocation2 + $0x138] sm:$0xff] 0.0
    %139 = vst [vmem:[#allocation2 + $0x140] sm:$0xff] 0.0
    %140 = vst [vmem:[#allocation2 + $0x148] sm:$0xff] 0.0
    %141 = vst [vmem:[#allocation2 + $0x150] sm:$0xff] 0.0
    %142 = vst [vmem:[#allocation2 + $0x158] sm:$0xff] 0.0
    %143 = vst [vmem:[#allocation2 + $0x160] sm:$0xff] 0.0
    %144 = vst [vmem:[#allocation2 + $0x168] sm:$0xff] 0.0
    %145 = vst [vmem:[#allocation2 + $0x170] sm:$0xff] 0.0
    %146 = vst [vmem:[#allocation2 + $0x178] sm:$0xff] 0.0
    %147 = vst [vmem:[#allocation2 + $0x180] sm:$0xff] 0.0
    %148 = vst [vmem:[#allocation2 + $0x188] sm:$0xff] 0.0
    %149 = vst [vmem:[#allocation2 + $0x190] sm:$0xff] 0.0
    %150 = vst [vmem:[#allocation2 + $0x198] sm:$0xff] 0.0
    %151 = vst [vmem:[#allocation2 + $0x1a0] sm:$0xff] 0.0
    %152 = vst [vmem:[#allocation2 + $0x1a8] sm:$0xff] 0.0
    %153 = vst [vmem:[#allocation2 + $0x1b0] sm:$0xff] 0.0
    %154 = vst [vmem:[#allocation2 + $0x1b8] sm:$0xff] 0.0
    %155 = vst [vmem:[#allocation2 + $0x1c0] sm:$0xff] 0.0
    %156 = vst [vmem:[#allocation2 + $0x1c8] sm:$0xff] 0.0
    %157 = vst [vmem:[#allocation2 + $0x1d0] sm:$0xff] 0.0
    %158 = vst [vmem:[#allocation2 + $0x1d8] sm:$0xff] 0.0
    %159 = vst [vmem:[#allocation2 + $0x1e0] sm:$0xff] 0.0
    %160 = vst [vmem:[#allocation2 + $0x1e8] sm:$0xff] 0.0
    %161 = vst [vmem:[#allocation2 + $0x1f0] sm:$0xff] 0.0
    %162 = vst [vmem:[#allocation2 + $0x1f8] sm:$0xff] 0.0
    %163 = vst [vmem:[#allocation2 + $0x200] sm:$0xff] 0.0
    %164 = vst [vmem:[#allocation2 + $0x208] sm:$0xff] 0.0
    %165 = vst [vmem:[#allocation2 + $0x210] sm:$0xff] 0.0
    %166 = vst [vmem:[#allocation2 + $0x218] sm:$0xff] 0.0
    %167 = vst [vmem:[#allocation2 + $0x220] sm:$0xff] 0.0
    %168 = vst [vmem:[#allocation2 + $0x228] sm:$0xff] 0.0
    %169 = vst [vmem:[#allocation2 + $0x230] sm:$0xff] 0.0
    %170 = vst [vmem:[#allocation2 + $0x238] sm:$0xff] 0.0
    %171 = vst [vmem:[#allocation2 + $0x240] sm:$0xff] 0.0
    %172 = vst [vmem:[#allocation2 + $0x248] sm:$0xff] 0.0
    %173 = vst [vmem:[#allocation2 + $0x250] sm:$0xff] 0.0
    %174 = vst [vmem:[#allocation2 + $0x258] sm:$0xff] 0.0
    %175 = vst [vmem:[#allocation2 + $0x260] sm:$0xff] 0.0
    %176 = vst [vmem:[#allocation2 + $0x268] sm:$0xff] 0.0
    %177 = vst [vmem:[#allocation2 + $0x270] sm:$0xff] 0.0
    %178 = vst [vmem:[#allocation2 + $0x278] sm:$0xff] 0.0
    %179 = vst [vmem:[#allocation2 + $0x280] sm:$0xff] 0.0
    %180 = vst [vmem:[#allocation2 + $0x288] sm:$0xff] 0.0
    %181 = vst [vmem:[#allocation2 + $0x290] sm:$0xff] 0.0
    %182 = vst [vmem:[#allocation2 + $0x298] sm:$0xff] 0.0
    %183 = vst [vmem:[#allocation2 + $0x2a0] sm:$0xff] 0.0
    %184 = vst [vmem:[#allocation2 + $0x2a8] sm:$0xff] 0.0
    %185 = vst [vmem:[#allocation2 + $0x2b0] sm:$0xff] 0.0
    %186 = vst [vmem:[#allocation2 + $0x2b8] sm:$0xff] 0.0
    %187 = vst [vmem:[#allocation2 + $0x2c0] sm:$0xff] 0.0
    %188 = vst [vmem:[#allocation2 + $0x2c8] sm:$0xff] 0.0
    %189 = vst [vmem:[#allocation2 + $0x2d0] sm:$0xff] 0.0
    %190 = vst [vmem:[#allocation2 + $0x2d8] sm:$0xff] 0.0
    %191 = vst [vmem:[#allocation2 + $0x2e0] sm:$0xff] 0.0
    %192 = vst [vmem:[#allocation2 + $0x2e8] sm:$0xff] 0.0
    %193 = vst [vmem:[#allocation2 + $0x2f0] sm:$0xff] 0.0
    %194 = vst [vmem:[#allocation2 + $0x2f8] sm:$0xff] 0.0
    %195 = vst [vmem:[#allocation2 + $0x300] sm:$0xff] 0.0
    %196 = vst [vmem:[#allocation2 + $0x308] sm:$0xff] 0.0
    %197 = vst [vmem:[#allocation2 + $0x310] sm:$0xff] 0.0
    %198 = vst [vmem:[#allocation2 + $0x318] sm:$0xff] 0.0
    %199 = vst [vmem:[#allocation2 + $0x320] sm:$0xff] 0.0
    %200 = vst [vmem:[#allocation2 + $0x328] sm:$0xff] 0.0
    %201 = vst [vmem:[#allocation2 + $0x330] sm:$0xff] 0.0
    %202 = vst [vmem:[#allocation2 + $0x338] sm:$0xff] 0.0
    %203 = vst [vmem:[#allocation2 + $0x340] sm:$0xff] 0.0
    %204 = vst [vmem:[#allocation2 + $0x348] sm:$0xff] 0.0
    %205 = vst [vmem:[#allocation2 + $0x350] sm:$0xff] 0.0
    %206 = vst [vmem:[#allocation2 + $0x358] sm:$0xff] 0.0
    %207 = vst [vmem:[#allocation2 + $0x360] sm:$0xff] 0.0
    %208 = vst [vmem:[#allocation2 + $0x368] sm:$0xff] 0.0
    %209 = vst [vmem:[#allocation2 + $0x370] sm:$0xff] 0.0
    %210 = vst [vmem:[#allocation2 + $0x378] sm:$0xff] 0.0
    %211 = vst [vmem:[#allocation2 + $0x380] sm:$0xff] 0.0
    %212 = vst [vmem:[#allocation2 + $0x388] sm:$0xff] 0.0
    %213 = vst [vmem:[#allocation2 + $0x390] sm:$0xff] 0.0
    %214 = vst [vmem:[#allocation2 + $0x398] sm:$0xff] 0.0
    %215 = vst [vmem:[#allocation2 + $0x3a0] sm:$0xff] 0.0
    %216 = vst [vmem:[#allocation2 + $0x3a8] sm:$0xff] 0.0
    %217 = vst [vmem:[#allocation2 + $0x3b0] sm:$0xff] 0.0
    %218 = vst [vmem:[#allocation2 + $0x3b8] sm:$0xff] 0.0
    %219 = vst [vmem:[#allocation2 + $0x3c0] sm:$0xff] 0.0
    %220 = vst [vmem:[#allocation2 + $0x3c8] sm:$0xff] 0.0
    %221 = vst [vmem:[#allocation2 + $0x3d0] sm:$0xff] 0.0
    %222 = vst [vmem:[#allocation2 + $0x3d8] sm:$0xff] 0.0
    %223 = vst [vmem:[#allocation2 + $0x3e0] sm:$0xff] 0.0
    %224 = vst [vmem:[#allocation2 + $0x3e8] sm:$0xff] 0.0
    %225 = vst [vmem:[#allocation2 + $0x3f0] sm:$0xff] 0.0
    %226 = vst [vmem:[#allocation2 + $0x3f8] sm:$0xff] 0.0
    %227 = vst [vmem:[#allocation3] sm:$0xff] 0.0
    %228 = vst [vmem:[#allocation3 + $0x8] sm:$0xff] 0.0
    %229 = vst [vmem:[#allocation3 + $0x10] sm:$0xff] 0.0
    %230 = vst [vmem:[#allocation3 + $0x18] sm:$0xff] 0.0
    %231 = vst [vmem:[#allocation3 + $0x20] sm:$0xff] 0.0
    %232 = vst [vmem:[#allocation3 + $0x28] sm:$0xff] 0.0
    %233 = vst [vmem:[#allocation3 + $0x30] sm:$0xff] 0.0
    %234 = vst [vmem:[#allocation3 + $0x38] sm:$0xff] 0.0
    %235 = vst [vmem:[#allocation3 + $0x40] sm:$0xff] 0.0
    %236 = vst [vmem:[#allocation3 + $0x48] sm:$0xff] 0.0
    %237 = vst [vmem:[#allocation3 + $0x50] sm:$0xff] 0.0
    %238 = vst [vmem:[#allocation3 + $0x58] sm:$0xff] 0.0
    %239 = vst [vmem:[#allocation3 + $0x60] sm:$0xff] 0.0
    %240 = vst [vmem:[#allocation3 + $0x68] sm:$0xff] 0.0
    %241 = vst [vmem:[#allocation3 + $0x70] sm:$0xff] 0.0
    %242 = vst [vmem:[#allocation3 + $0x78] sm:$0xff] 0.0
    %243 = vst [vmem:[#allocation3 + $0x80] sm:$0xff] 0.0
    %244 = vst [vmem:[#allocation3 + $0x88] sm:$0xff] 0.0
    %245 = vst [vmem:[#allocation3 + $0x90] sm:$0xff] 0.0
    %246 = vst [vmem:[#allocation3 + $0x98] sm:$0xff] 0.0
    %247 = vst [vmem:[#allocation3 + $0xa0] sm:$0xff] 0.0
    %248 = vst [vmem:[#allocation3 + $0xa8] sm:$0xff] 0.0
    %249 = vst [vmem:[#allocation3 + $0xb0] sm:$0xff] 0.0
    %250 = vst [vmem:[#allocation3 + $0xb8] sm:$0xff] 0.0
    %251 = vst [vmem:[#allocation3 + $0xc0] sm:$0xff] 0.0
    %252 = vst [vmem:[#allocation3 + $0xc8] sm:$0xff] 0.0
    %253 = vst [vmem:[#allocation3 + $0xd0] sm:$0xff] 0.0
    %254 = vst [vmem:[#allocation3 + $0xd8] sm:$0xff] 0.0
    %255 = vst [vmem:[#allocation3 + $0xe0] sm:$0xff] 0.0
    %256 = vst [vmem:[#allocation3 + $0xe8] sm:$0xff] 0.0
    %257 = vst [vmem:[#allocation3 + $0xf0] sm:$0xff] 0.0
    %258 = vst [vmem:[#allocation3 + $0xf8] sm:$0xff] 0.0
    %259 = vst [vmem:[#allocation3 + $0x100] sm:$0xff] 0.0
    %260 = vst [vmem:[#allocation3 + $0x108] sm:$0xff] 0.0
    %261 = vst [vmem:[#allocation3 + $0x110] sm:$0xff] 0.0
    %262 = vst [vmem:[#allocation3 + $0x118] sm:$0xff] 0.0
    %263 = vst [vmem:[#allocation3 + $0x120] sm:$0xff] 0.0
    %264 = vst [vmem:[#allocation3 + $0x128] sm:$0xff] 0.0
    %265 = vst [vmem:[#allocation3 + $0x130] sm:$0xff] 0.0
    %266 = vst [vmem:[#allocation3 + $0x138] sm:$0xff] 0.0
    %267 = vst [vmem:[#allocation3 + $0x140] sm:$0xff] 0.0
    %268 = vst [vmem:[#allocation3 + $0x148] sm:$0xff] 0.0
    %269 = vst [vmem:[#allocation3 + $0x150] sm:$0xff] 0.0
    %270 = vst [vmem:[#allocation3 + $0x158] sm:$0xff] 0.0
    %271 = vst [vmem:[#allocation3 + $0x160] sm:$0xff] 0.0
    %272 = vst [vmem:[#allocation3 + $0x168] sm:$0xff] 0.0
    %273 = vst [vmem:[#allocation3 + $0x170] sm:$0xff] 0.0
    %274 = vst [vmem:[#allocation3 + $0x178] sm:$0xff] 0.0
    %275 = vst [vmem:[#allocation3 + $0x180] sm:$0xff] 0.0
    %276 = vst [vmem:[#allocation3 + $0x188] sm:$0xff] 0.0
    %277 = vst [vmem:[#allocation3 + $0x190] sm:$0xff] 0.0
    %278 = vst [vmem:[#allocation3 + $0x198] sm:$0xff] 0.0
    %279 = vst [vmem:[#allocation3 + $0x1a0] sm:$0xff] 0.0
    %280 = vst [vmem:[#allocation3 + $0x1a8] sm:$0xff] 0.0
    %281 = vst [vmem:[#allocation3 + $0x1b0] sm:$0xff] 0.0
    %282 = vst [vmem:[#allocation3 + $0x1b8] sm:$0xff] 0.0
    %283 = vst [vmem:[#allocation3 + $0x1c0] sm:$0xff] 0.0
    %284 = vst [vmem:[#allocation3 + $0x1c8] sm:$0xff] 0.0
    %285 = vst [vmem:[#allocation3 + $0x1d0] sm:$0xff] 0.0
    %286 = vst [vmem:[#allocation3 + $0x1d8] sm:$0xff] 0.0
    %287 = vst [vmem:[#allocation3 + $0x1e0] sm:$0xff] 0.0
    %288 = vst [vmem:[#allocation3 + $0x1e8] sm:$0xff] 0.0
    %289 = vst [vmem:[#allocation3 + $0x1f0] sm:$0xff] 0.0
    %290 = vst [vmem:[#allocation3 + $0x1f8] sm:$0xff] 0.0
    %291 = vst [vmem:[#allocation3 + $0x200] sm:$0xff] 0.0
    %292 = vst [vmem:[#allocation3 + $0x208] sm:$0xff] 0.0
    %293 = vst [vmem:[#allocation3 + $0x210] sm:$0xff] 0.0
    %294 = vst [vmem:[#allocation3 + $0x218] sm:$0xff] 0.0
    %295 = vst [vmem:[#allocation3 + $0x220] sm:$0xff] 0.0
    %296 = vst [vmem:[#allocation3 + $0x228] sm:$0xff] 0.0
    %297 = vst [vmem:[#allocation3 + $0x230] sm:$0xff] 0.0
    %298 = vst [vmem:[#allocation3 + $0x238] sm:$0xff] 0.0
    %299 = vst [vmem:[#allocation3 + $0x240] sm:$0xff] 0.0
    %300 = vst [vmem:[#allocation3 + $0x248] sm:$0xff] 0.0
    %301 = vst [vmem:[#allocation3 + $0x250] sm:$0xff] 0.0
    %302 = vst [vmem:[#allocation3 + $0x258] sm:$0xff] 0.0
    %303 = vst [vmem:[#allocation3 + $0x260] sm:$0xff] 0.0
    %304 = vst [vmem:[#allocation3 + $0x268] sm:$0xff] 0.0
    %305 = vst [vmem:[#allocation3 + $0x270] sm:$0xff] 0.0
    %306 = vst [vmem:[#allocation3 + $0x278] sm:$0xff] 0.0
    %307 = vst [vmem:[#allocation3 + $0x280] sm:$0xff] 0.0
    %308 = vst [vmem:[#allocation3 + $0x288] sm:$0xff] 0.0
    %309 = vst [vmem:[#allocation3 + $0x290] sm:$0xff] 0.0
    %310 = vst [vmem:[#allocation3 + $0x298] sm:$0xff] 0.0
    %311 = vst [vmem:[#allocation3 + $0x2a0] sm:$0xff] 0.0
    %312 = vst [vmem:[#allocation3 + $0x2a8] sm:$0xff] 0.0
    %313 = vst [vmem:[#allocation3 + $0x2b0] sm:$0xff] 0.0
    %314 = vst [vmem:[#allocation3 + $0x2b8] sm:$0xff] 0.0
    %315 = vst [vmem:[#allocation3 + $0x2c0] sm:$0xff] 0.0
    %316 = vst [vmem:[#allocation3 + $0x2c8] sm:$0xff] 0.0
    %317 = vst [vmem:[#allocation3 + $0x2d0] sm:$0xff] 0.0
    %318 = vst [vmem:[#allocation3 + $0x2d8] sm:$0xff] 0.0
    %319 = vst [vmem:[#allocation3 + $0x2e0] sm:$0xff] 0.0
    %320 = vst [vmem:[#allocation3 + $0x2e8] sm:$0xff] 0.0
    %321 = vst [vmem:[#allocation3 + $0x2f0] sm:$0xff] 0.0
    %322 = vst [vmem:[#allocation3 + $0x2f8] sm:$0xff] 0.0
    %323 = vst [vmem:[#allocation3 + $0x300] sm:$0xff] 0.0
    %324 = vst [vmem:[#allocation3 + $0x308] sm:$0xff] 0.0
    %325 = vst [vmem:[#allocation3 + $0x310] sm:$0xff] 0.0
    %326 = vst [vmem:[#allocation3 + $0x318] sm:$0xff] 0.0
    %327 = vst [vmem:[#allocation3 + $0x320] sm:$0xff] 0.0
    %328 = vst [vmem:[#allocation3 + $0x328] sm:$0xff] 0.0
    %329 = vst [vmem:[#allocation3 + $0x330] sm:$0xff] 0.0
    %330 = vst [vmem:[#allocation3 + $0x338] sm:$0xff] 0.0
    %331 = vst [vmem:[#allocation3 + $0x340] sm:$0xff] 0.0
    %332 = vst [vmem:[#allocation3 + $0x348] sm:$0xff] 0.0
    %333 = vst [vmem:[#allocation3 + $0x350] sm:$0xff] 0.0
    %334 = vst [vmem:[#allocation3 + $0x358] sm:$0xff] 0.0
    %335 = vst [vmem:[#allocation3 + $0x360] sm:$0xff] 0.0
    %336 = vst [vmem:[#allocation3 + $0x368] sm:$0xff] 0.0
    %337 = vst [vmem:[#allocation3 + $0x370] sm:$0xff] 0.0
    %338 = vst [vmem:[#allocation3 + $0x378] sm:$0xff] 0.0
    %339 = vst [vmem:[#allocation3 + $0x380] sm:$0xff] 0.0
    %340 = vst [vmem:[#allocation3 + $0x388] sm:$0xff] 0.0
    %341 = vst [vmem:[#allocation3 + $0x390] sm:$0xff] 0.0
    %342 = vst [vmem:[#allocation3 + $0x398] sm:$0xff] 0.0
    %343 = vst [vmem:[#allocation3 + $0x3a0] sm:$0xff] 0.0
    %344 = vst [vmem:[#allocation3 + $0x3a8] sm:$0xff] 0.0
    %345 = vst [vmem:[#allocation3 + $0x3b0] sm:$0xff] 0.0
    %346 = vst [vmem:[#allocation3 + $0x3b8] sm:$0xff] 0.0
    %347 = vst [vmem:[#allocation3 + $0x3c0] sm:$0xff] 0.0
    %348 = vst [vmem:[#allocation3 + $0x3c8] sm:$0xff] 0.0
    %349 = vst [vmem:[#allocation3 + $0x3d0] sm:$0xff] 0.0
    %350 = vst [vmem:[#allocation3 + $0x3d8] sm:$0xff] 0.0
    %351 = vst [vmem:[#allocation3 + $0x3e0] sm:$0xff] 0.0
    %352 = vst [vmem:[#allocation3 + $0x3e8] sm:$0xff] 0.0
    %353 = vst [vmem:[#allocation3 + $0x3f0] sm:$0xff] 0.0
    %354 = vst [vmem:[#allocation3 + $0x3f8] sm:$0xff] 0.0
  $region13: #{depth_loss.1} parent=0 // pred_fallthru
    _
  %v355 = vld [vmem:[%s72] sm:$0xff]
  %v356 = vld [vmem:[%s72 + $0x8] sm:$0xff]
  %v357 = vld [vmem:[%s72 + $0x10] sm:$0xff]
  %v358 = vld [vmem:[%s72 + $0x18] sm:$0xff]
  %v359 = vld [vmem:[%s72 + $0x20] sm:$0xff]
  %v360 = vld [vmem:[%s72 + $0x28] sm:$0xff]
  %v361 = vld [vmem:[%s72 + $0x30] sm:$0xff]
  %v362 = vld [vmem:[%s72 + $0x38] sm:$0xff]
  %v363 = vld [vmem:[%s72 + $0x40] sm:$0xff]
  %v364 = vld [vmem:[%s72 + $0x48] sm:$0xff]
  %v365 = vld [vmem:[%s72 + $0x50] sm:$0xff]
  %v366 = vld [vmem:[%s72 + $0x58] sm:$0xff]
  %v367 = vld [vmem:[%s72 + $0x60] sm:$0xff]
  %v368 = vld [vmem:[%s72 + $0x68] sm:$0xff]
  %v369 = vld [vmem:[%s72 + $0x70] sm:$0xff]
  %v370 = vld [vmem:[%s72 + $0x78] sm:$0xff]
  %v371 = vld [vmem:[%s72 + $0x80] sm:$0xff]
  %v372 = vld [vmem:[%s72 + $0x88] sm:$0xff]
  %v373 = vld [vmem:[%s72 + $0x90] sm:$0xff]
  %v374 = vld [vmem:[%s72 + $0x98] sm:$0xff]
  %v375 = vld [vmem:[%s72 + $0xa0] sm:$0xff]
  %v376 = vld [vmem:[%s72 + $0xa8] sm:$0xff]
  %v377 = vld [vmem:[%s72 + $0xb0] sm:$0xff]
  %v378 = vld [vmem:[%s72 + $0xb8] sm:$0xff]
  %v379 = vld [vmem:[%s72 + $0xc0] sm:$0xff]
  %v380 = vld [vmem:[%s72 + $0xc8] sm:$0xff]
  %v381 = vld [vmem:[%s72 + $0xd0] sm:$0xff]
  %v382 = vld [vmem:[%s72 + $0xd8] sm:$0xff]
  %v383 = vld [vmem:[%s72 + $0xe0] sm:$0xff]
  %v384 = vld [vmem:[%s72 + $0xe8] sm:$0xff]
  %v385 = vld [vmem:[%s72 + $0xf0] sm:$0xff]
  %v386 = vld [vmem:[%s72 + $0xf8] sm:$0xff]
  %v387 = vld [vmem:[%s72 + $0x100] sm:$0xff]
  %v388 = vld [vmem:[%s72 + $0x108] sm:$0xff]
  %v389 = vld [vmem:[%s72 + $0x110] sm:$0xff]
  %v390 = vld [vmem:[%s72 + $0x118] sm:$0xff]
  %v391 = vld [vmem:[%s72 + $0x120] sm:$0xff]
  %v392 = vld [vmem:[%s72 + $0x128] sm:$0xff]
  %v393 = vld [vmem:[%s72 + $0x130] sm:$0xff]
  %v394 = vld [vmem:[%s72 + $0x138] sm:$0xff]
  %v395 = vld [vmem:[%s72 + $0x140] sm:$0xff]
  %v396 = vld [vmem:[%s72 + $0x148] sm:$0xff]
  %v397 = vld [vmem:[%s72 + $0x150] sm:$0xff]
  %v398 = vld [vmem:[%s72 + $0x158] sm:$0xff]
  %v399 = vld [vmem:[%s72 + $0x160] sm:$0xff]
  %v400 = vld [vmem:[%s72 + $0x168] sm:$0xff]
  %v401 = vld [vmem:[%s72 + $0x170] sm:$0xff]
  %v402 = vld [vmem:[%s72 + $0x178] sm:$0xff]
  %v403 = vld [vmem:[%s72 + $0x180] sm:$0xff]
  %v404 = vld [vmem:[%s72 + $0x188] sm:$0xff]
  %v405 = vld [vmem:[%s72 + $0x190] sm:$0xff]
  %v406 = vld [vmem:[%s72 + $0x198] sm:$0xff]
  %v407 = vld [vmem:[%s72 + $0x1a0] sm:$0xff]
  %v408 = vld [vmem:[%s72 + $0x1a8] sm:$0xff]
  %v409 = vld [vmem:[%s72 + $0x1b0] sm:$0xff]
  %v410 = vld [vmem:[%s72 + $0x1b8] sm:$0xff]
  %v411 = vld [vmem:[%s72 + $0x1c0] sm:$0xff]
  %v412 = vld [vmem:[%s72 + $0x1c8] sm:$0xff]
  %v413 = vld [vmem:[%s72 + $0x1d0] sm:$0xff]
  %v414 = vld [vmem:[%s72 + $0x1d8] sm:$0xff]
  %v415 = vld [vmem:[%s72 + $0x1e0] sm:$0xff]
  %v416 = vld [vmem:[%s72 + $0x1e8] sm:$0xff]
  %v417 = vld [vmem:[%s72 + $0x1f0] sm:$0xff]
  %v418 = vld [vmem:[%s72 + $0x1f8] sm:$0xff]
  %v419 = vld [vmem:[%s72 + $0x200] sm:$0xff]
  %v420 = vld [vmem:[%s72 + $0x208] sm:$0xff]
  %v421 = vld [vmem:[%s72 + $0x210] sm:$0xff]
  %v422 = vld [vmem:[%s72 + $0x218] sm:$0xff]
  %v423 = vld [vmem:[%s72 + $0x220] sm:$0xff]
  %v424 = vld [vmem:[%s72 + $0x228] sm:$0xff]
  %v425 = vld [vmem:[%s72 + $0x230] sm:$0xff]
  %v426 = vld [vmem:[%s72 + $0x238] sm:$0xff]
  %v427 = vld [vmem:[%s72 + $0x240] sm:$0xff]
  %v428 = vld [vmem:[%s72 + $0x248] sm:$0xff]
  %v429 = vld [vmem:[%s72 + $0x250] sm:$0xff]
  %v430 = vld [vmem:[%s72 + $0x258] sm:$0xff]
  %v431 = vld [vmem:[%s72 + $0x260] sm:$0xff]
  %v432 = vld [vmem:[%s72 + $0x268] sm:$0xff]
  %v433 = vld [vmem:[%s72 + $0x270] sm:$0xff]
  %v434 = vld [vmem:[%s72 + $0x278] sm:$0xff]
  %v435 = vld [vmem:[%s72 + $0x280] sm:$0xff]
  %v436 = vld [vmem:[%s72 + $0x288] sm:$0xff]
  %v437 = vld [vmem:[%s72 + $0x290] sm:$0xff]
  %v438 = vld [vmem:[%s72 + $0x298] sm:$0xff]
  %v439 = vld [vmem:[%s72 + $0x2a0] sm:$0xff]
  %v440 = vld [vmem:[%s72 + $0x2a8] sm:$0xff]
  %v441 = vld [vmem:[%s72 + $0x2b0] sm:$0xff]
  %v442 = vld [vmem:[%s72 + $0x2b8] sm:$0xff]
  %v443 = vld [vmem:[%s72 + $0x2c0] sm:$0xff]
  %v444 = vld [vmem:[%s72 + $0x2c8] sm:$0xff]
  %v445 = vld [vmem:[%s72 + $0x2d0] sm:$0xff]
  %v446 = vld [vmem:[%s72 + $0x2d8] sm:$0xff]
  %v447 = vld [vmem:[%s72 + $0x2e0] sm:$0xff]
  %v448 = vld [vmem:[%s72 + $0x2e8] sm:$0xff]
  %v449 = vld [vmem:[%s72 + $0x2f0] sm:$0xff]
  %v450 = vld [vmem:[%s72 + $0x2f8] sm:$0xff]
  %v451 = vld [vmem:[%s72 + $0x300] sm:$0xff]
  %v452 = vld [vmem:[%s72 + $0x308] sm:$0xff]
  %v453 = vld [vmem:[%s72 + $0x310] sm:$0xff]
  %v454 = vld [vmem:[%s72 + $0x318] sm:$0xff]
  %v455 = vld [vmem:[%s72 + $0x320] sm:$0xff]
  %v456 = vld [vmem:[%s72 + $0x328] sm:$0xff]
  %v457 = vld [vmem:[%s72 + $0x330] sm:$0xff]
  %v458 = vld [vmem:[%s72 + $0x338] sm:$0xff]
  %v459 = vld [vmem:[%s72 + $0x340] sm:$0xff]
  %v460 = vld [vmem:[%s72 + $0x348] sm:$0xff]
  %v461 = vld [vmem:[%s72 + $0x350] sm:$0xff]
  %v462 = vld [vmem:[%s72 + $0x358] sm:$0xff]
  %v463 = vld [vmem:[%s72 + $0x360] sm:$0xff]
  %v464 = vld [vmem:[%s72 + $0x368] sm:$0xff]
  %v465 = vld [vmem:[%s72 + $0x370] sm:$0xff]
  %v466 = vld [vmem:[%s72 + $0x378] sm:$0xff]
  %v467 = vld [vmem:[%s72 + $0x380] sm:$0xff]
  %v468 = vld [vmem:[%s72 + $0x388] sm:$0xff]
  %v469 = vld [vmem:[%s72 + $0x390] sm:$0xff]
  %v470 = vld [vmem:[%s72 + $0x398] sm:$0xff]
  %v471 = vld [vmem:[%s72 + $0x3a0] sm:$0xff]
  %v472 = vld [vmem:[%s72 + $0x3a8] sm:$0xff]
  %v473 = vld [vmem:[%s72 + $0x3b0] sm:$0xff]
  %v474 = vld [vmem:[%s72 + $0x3b8] sm:$0xff]
  %v475 = vld [vmem:[%s72 + $0x3c0] sm:$0xff]
  %v476 = vld [vmem:[%s72 + $0x3c8] sm:$0xff]
  %v477 = vld [vmem:[%s72 + $0x3d0] sm:$0xff]
  %v478 = vld [vmem:[%s72 + $0x3d8] sm:$0xff]
  %v479 = vld [vmem:[%s72 + $0x3e0] sm:$0xff]
  %v480 = vld [vmem:[%s72 + $0x3e8] sm:$0xff]
  %v481 = vld [vmem:[%s72 + $0x3f0] sm:$0xff]
  %v482 = vld [vmem:[%s72 + $0x3f8] sm:$0xff]
  %v483 = vld [vmem:[%s88] sm:$0xff]
  %v484 = vld [vmem:[%s88 + $0x8] sm:$0xff]
  %v485 = vld [vmem:[%s88 + $0x10] sm:$0xff]
  %v486 = vld [vmem:[%s88 + $0x18] sm:$0xff]
  %v487 = vld [vmem:[%s88 + $0x20] sm:$0xff]
  %v488 = vld [vmem:[%s88 + $0x28] sm:$0xff]
  %v489 = vld [vmem:[%s88 + $0x30] sm:$0xff]
  %v490 = vld [vmem:[%s88 + $0x38] sm:$0xff]
  %v491 = vld [vmem:[%s88 + $0x40] sm:$0xff]
  %v492 = vld [vmem:[%s88 + $0x48] sm:$0xff]
  %v493 = vld [vmem:[%s88 + $0x50] sm:$0xff]
  %v494 = vld [vmem:[%s88 + $0x58] sm:$0xff]
  %v495 = vld [vmem:[%s88 + $0x60] sm:$0xff]
  %v496 = vld [vmem:[%s88 + $0x68] sm:$0xff]
  %v497 = vld [vmem:[%s88 + $0x70] sm:$0xff]
  %v498 = vld [vmem:[%s88 + $0x78] sm:$0xff]
  %v499 = vld [vmem:[%s88 + $0x80] sm:$0xff]
  %v500 = vld [vmem:[%s88 + $0x88] sm:$0xff]
  %v501 = vld [vmem:[%s88 + $0x90] sm:$0xff]
  %v502 = vld [vmem:[%s88 + $0x98] sm:$0xff]
  %v503 = vld [vmem:[%s88 + $0xa0] sm:$0xff]
  %v504 = vld [vmem:[%s88 + $0xa8] sm:$0xff]
  %v505 = vld [vmem:[%s88 + $0xb0] sm:$0xff]
  %v506 = vld [vmem:[%s88 + $0xb8] sm:$0xff]
  %v507 = vld [vmem:[%s88 + $0xc0] sm:$0xff]
  %v508 = vld [vmem:[%s88 + $0xc8] sm:$0xff]
  %v509 = vld [vmem:[%s88 + $0xd0] sm:$0xff]
  %v510 = vld [vmem:[%s88 + $0xd8] sm:$0xff]
  %v511 = vld [vmem:[%s88 + $0xe0] sm:$0xff]
  %v512 = vld [vmem:[%s88 + $0xe8] sm:$0xff]
  %v513 = vld [vmem:[%s88 + $0xf0] sm:$0xff]
  %v514 = vld [vmem:[%s88 + $0xf8] sm:$0xff]
  %v515 = vld [vmem:[%s88 + $0x100] sm:$0xff]
  %v516 = vld [vmem:[%s88 + $0x108] sm:$0xff]
  %v517 = vld [vmem:[%s88 + $0x110] sm:$0xff]
  %v518 = vld [vmem:[%s88 + $0x118] sm:$0xff]
  %v519 = vld [vmem:[%s88 + $0x120] sm:$0xff]
  %v520 = vld [vmem:[%s88 + $0x128] sm:$0xff]
  %v521 = vld [vmem:[%s88 + $0x130] sm:$0xff]
  %v522 = vld [vmem:[%s88 + $0x138] sm:$0xff]
  %v523 = vld [vmem:[%s88 + $0x140] sm:$0xff]
  %v524 = vld [vmem:[%s88 + $0x148] sm:$0xff]
  %v525 = vld [vmem:[%s88 + $0x150] sm:$0xff]
  %v526 = vld [vmem:[%s88 + $0x158] sm:$0xff]
  %v527 = vld [vmem:[%s88 + $0x160] sm:$0xff]
  %v528 = vld [vmem:[%s88 + $0x168] sm:$0xff]
  %v529 = vld [vmem:[%s88 + $0x170] sm:$0xff]
  %v530 = vld [vmem:[%s88 + $0x178] sm:$0xff]
  %v531 = vld [vmem:[%s88 + $0x180] sm:$0xff]
  %v532 = vld [vmem:[%s88 + $0x188] sm:$0xff]
  %v533 = vld [vmem:[%s88 + $0x190] sm:$0xff]
  %v534 = vld [vmem:[%s88 + $0x198] sm:$0xff]
  %v535 = vld [vmem:[%s88 + $0x1a0] sm:$0xff]
  %v536 = vld [vmem:[%s88 + $0x1a8] sm:$0xff]
  %v537 = vld [vmem:[%s88 + $0x1b0] sm:$0xff]
  %v538 = vld [vmem:[%s88 + $0x1b8] sm:$0xff]
  %v539 = vld [vmem:[%s88 + $0x1c0] sm:$0xff]
  %v540 = vld [vmem:[%s88 + $0x1c8] sm:$0xff]
  %v541 = vld [vmem:[%s88 + $0x1d0] sm:$0xff]
  %v542 = vld [vmem:[%s88 + $0x1d8] sm:$0xff]
  %v543 = vld [vmem:[%s88 + $0x1e0] sm:$0xff]
  %v544 = vld [vmem:[%s88 + $0x1e8] sm:$0xff]
  %v545 = vld [vmem:[%s88 + $0x1f0] sm:$0xff]
  %v546 = vld [vmem:[%s88 + $0x1f8] sm:$0xff]
  %v547 = vld [vmem:[%s88 + $0x200] sm:$0xff]
  %v548 = vld [vmem:[%s88 + $0x208] sm:$0xff]
  %v549 = vld [vmem:[%s88 + $0x210] sm:$0xff]
  %v550 = vld [vmem:[%s88 + $0x218] sm:$0xff]
  %v551 = vld [vmem:[%s88 + $0x220] sm:$0xff]
  %v552 = vld [vmem:[%s88 + $0x228] sm:$0xff]
  %v553 = vld [vmem:[%s88 + $0x230] sm:$0xff]
  %v554 = vld [vmem:[%s88 + $0x238] sm:$0xff]
  %v555 = vld [vmem:[%s88 + $0x240] sm:$0xff]
  %v556 = vld [vmem:[%s88 + $0x248] sm:$0xff]
  %v557 = vld [vmem:[%s88 + $0x250] sm:$0xff]
  %v558 = vld [vmem:[%s88 + $0x258] sm:$0xff]
  %v559 = vld [vmem:[%s88 + $0x260] sm:$0xff]
  %v560 = vld [vmem:[%s88 + $0x268] sm:$0xff]
  %v561 = vld [vmem:[%s88 + $0x270] sm:$0xff]
  %v562 = vld [vmem:[%s88 + $0x278] sm:$0xff]
  %v563 = vld [vmem:[%s88 + $0x280] sm:$0xff]
  %v564 = vld [vmem:[%s88 + $0x288] sm:$0xff]
  %v565 = vld [vmem:[%s88 + $0x290] sm:$0xff]
  %v566 = vld [vmem:[%s88 + $0x298] sm:$0xff]
  %v567 = vld [vmem:[%s88 + $0x2a0] sm:$0xff]
  %v568 = vld [vmem:[%s88 + $0x2a8] sm:$0xff]
  %v569 = vld [vmem:[%s88 + $0x2b0] sm:$0xff]
  %v570 = vld [vmem:[%s88 + $0x2b8] sm:$0xff]
  %v571 = vld [vmem:[%s88 + $0x2c0] sm:$0xff]
  %v572 = vld [vmem:[%s88 + $0x2c8] sm:$0xff]
  %v573 = vld [vmem:[%s88 + $0x2d0] sm:$0xff]
  %v574 = vld [vmem:[%s88 + $0x2d8] sm:$0xff]
  %v575 = vld [vmem:[%s88 + $0x2e0] sm:$0xff]
  %v576 = vld [vmem:[%s88 + $0x2e8] sm:$0xff]
  %v577 = vld [vmem:[%s88 + $0x2f0] sm:$0xff]
  %v578 = vld [vmem:[%s88 + $0x2f8] sm:$0xff]
  %v579 = vld [vmem:[%s88 + $0x300] sm:$0xff]
  %v580 = vld [vmem:[%s88 + $0x308] sm:$0xff]
  %v581 = vld [vmem:[%s88 + $0x310] sm:$0xff]
  %v582 = vld [vmem:[%s88 + $0x318] sm:$0xff]
  %v583 = vld [vmem:[%s88 + $0x320] sm:$0xff]
  %v584 = vld [vmem:[%s88 + $0x328] sm:$0xff]
  %v585 = vld [vmem:[%s88 + $0x330] sm:$0xff]
  %v586 = vld [vmem:[%s88 + $0x338] sm:$0xff]
  %v587 = vld [vmem:[%s88 + $0x340] sm:$0xff]
  %v588 = vld [vmem:[%s88 + $0x348] sm:$0xff]
  %v589 = vld [vmem:[%s88 + $0x350] sm:$0xff]
  %v590 = vld [vmem:[%s88 + $0x358] sm:$0xff]
  %v591 = vld [vmem:[%s88 + $0x360] sm:$0xff]
  %v592 = vld [vmem:[%s88 + $0x368] sm:$0xff]
  %v593 = vld [vmem:[%s88 + $0x370] sm:$0xff]
  %v594 = vld [vmem:[%s88 + $0x378] sm:$0xff]
  %v595 = vld [vmem:[%s88 + $0x380] sm:$0xff]
  %v596 = vld [vmem:[%s88 + $0x388] sm:$0xff]
  %v597 = vld [vmem:[%s88 + $0x390] sm:$0xff]
  %v598 = vld [vmem:[%s88 + $0x398] sm:$0xff]
  %v599 = vld [vmem:[%s88 + $0x3a0] sm:$0xff]
  %v600 = vld [vmem:[%s88 + $0x3a8] sm:$0xff]
  %v601 = vld [vmem:[%s88 + $0x3b0] sm:$0xff]
  %v602 = vld [vmem:[%s88 + $0x3b8] sm:$0xff]
  %v603 = vld [vmem:[%s88 + $0x3c0] sm:$0xff]
  %v604 = vld [vmem:[%s88 + $0x3c8] sm:$0xff]
  %v605 = vld [vmem:[%s88 + $0x3d0] sm:$0xff]
  %v606 = vld [vmem:[%s88 + $0x3d8] sm:$0xff]
  %v607 = vld [vmem:[%s88 + $0x3e0] sm:$0xff]
  %v608 = vld [vmem:[%s88 + $0x3e8] sm:$0xff]
  %v609 = vld [vmem:[%s88 + $0x3f0] sm:$0xff]
  %v610 = vld [vmem:[%s88 + $0x3f8] sm:$0xff]
  %s611 = sadd.s32 0, 0
  %v612 = vlaneseq
  %v613 = vshrl.u32 %v612, 7
  %v614 = vadd.s32 %v613, 8
  %v615 = vadd.s32 %v613, 16
  %v616 = vadd.s32 %v613, 24
  %v617 = vadd.s32 %v613, 32
  %v618 = vadd.s32 %v613, 40
  %v619 = vadd.s32 %v613, 48
  %v620 = vadd.s32 %v613, 56
  %v621 = vadd.s32 %v613, 64
  %v622 = vadd.s32 %v613, 72
  %v623 = vadd.s32 %v613, 80
  %v624 = vadd.s32 %v613, 88
  %v625 = vadd.s32 %v613, 96
  %v626 = vadd.s32 %v613, 104
  %v627 = vadd.s32 %v613, 112
  %v628 = vadd.s32 %v613, 120
  %v629 = vadd.s32 %v613, 128
  %v630 = vadd.s32 %v613, 136
  %v631 = vadd.s32 %v613, 144
  %v632 = vadd.s32 %v613, 152
  %v633 = vadd.s32 %v613, 160
  %v634 = vadd.s32 %v613, 168
  %v635 = vadd.s32 %v613, 176
  %v636 = vadd.s32 %v613, 184
  %v637 = vadd.s32 %v613, 192
  %v638 = vadd.s32 %v613, 200
  %v639 = vadd.s32 %v613, 208
  %v640 = vadd.s32 %v613, 216
  %v641 = vadd.s32 %v613, 224
  %v642 = vadd.s32 %v613, 232
  %v643 = vadd.s32 %v613, 240
  %v644 = vadd.s32 %v613, 248
  %v645 = vadd.s32 %v613, 256
  %v646 = vadd.s32 %v613, 264
  %v647 = vadd.s32 %v613, 272
  %v648 = vadd.s32 %v613, 280
  %v649 = vadd.s32 %v613, 288
  %v650 = vadd.s32 %v613, 296
  %v651 = vadd.s32 %v613, 304
  %v652 = vadd.s32 %v613, 312
  %v653 = vadd.s32 %v613, 320
  %v654 = vadd.s32 %v613, 328
  %v655 = vadd.s32 %v613, 336
  %v656 = vadd.s32 %v613, 344
  %v657 = vadd.s32 %v613, 352
  %v658 = vadd.s32 %v613, 360
  %v659 = vadd.s32 %v613, 368
  %v660 = vadd.s32 %v613, 376
  %v661 = vadd.s32 %v613, 384
  %v662 = vadd.s32 %v613, 392
  %v663 = vadd.s32 %v613, 400
  %v664 = vadd.s32 %v613, 408
  %v665 = vadd.s32 %v613, 416
  %v666 = vadd.s32 %v613, 424
  %v667 = vadd.s32 %v613, 432
  %v668 = vadd.s32 %v613, 440
  %v669 = vadd.s32 %v613, 448
  %v670 = vadd.s32 %v613, 456
  %v671 = vadd.s32 %v613, 464
  %v672 = vadd.s32 %v613, 472
  %v673 = vadd.s32 %v613, 480
  %v674 = vadd.s32 %v613, 488
  %v675 = vadd.s32 %v613, 496
  %v676 = vadd.s32 %v613, 504
  %v677 = vadd.s32 %v613, 512
  %v678 = vadd.s32 %v613, 520
  %v679 = vadd.s32 %v613, 528
  %v680 = vadd.s32 %v613, 536
  %v681 = vadd.s32 %v613, 544
  %v682 = vadd.s32 %v613, 552
  %v683 = vadd.s32 %v613, 560
  %v684 = vadd.s32 %v613, 568
  %v685 = vadd.s32 %v613, 576
  %v686 = vadd.s32 %v613, 584
  %v687 = vadd.s32 %v613, 592
  %v688 = vadd.s32 %v613, 600
  %v689 = vadd.s32 %v613, 608
  %v690 = vadd.s32 %v613, 616
  %v691 = vadd.s32 %v613, 624
  %v692 = vadd.s32 %v613, 632
  %v693 = vadd.s32 %v613, 640
  %v694 = vadd.s32 %v613, 648
  %v695 = vadd.s32 %v613, 656
  %v696 = vadd.s32 %v613, 664
  %v697 = vadd.s32 %v613, 672
  %v698 = vadd.s32 %v613, 680
  %v699 = vadd.s32 %v613, 688
  %v700 = vadd.s32 %v613, 696
  %v701 = vadd.s32 %v613, 704
  %v702 = vadd.s32 %v613, 712
  %v703 = vadd.s32 %v613, 720
  %v704 = vadd.s32 %v613, 728
  %v705 = vadd.s32 %v613, 736
  %v706 = vadd.s32 %v613, 744
  %v707 = vadd.s32 %v613, 752
  %v708 = vadd.s32 %v613, 760
  %v709 = vadd.s32 %v613, 768
  %v710 = vadd.s32 %v613, 776
  %v711 = vadd.s32 %v613, 784
  %v712 = vadd.s32 %v613, 792
  %v713 = vadd.s32 %v613, 800
  %v714 = vadd.s32 %v613, 808
  %v715 = vadd.s32 %v613, 816
  %v716 = vadd.s32 %v613, 824
  %v717 = vadd.s32 %v613, 832
  %v718 = vadd.s32 %v613, 840
  %v719 = vadd.s32 %v613, 848
  %v720 = vadd.s32 %v613, 856
  %v721 = vadd.s32 %v613, 864
  %v722 = vadd.s32 %v613, 872
  %v723 = vadd.s32 %v613, 880
  %v724 = vadd.s32 %v613, 888
  %v725 = vadd.s32 %v613, 896
  %v726 = vadd.s32 %v613, 904
  %v727 = vadd.s32 %v613, 912
  %v728 = vadd.s32 %v613, 920
  %v729 = vadd.s32 %v613, 928
  %v730 = vadd.s32 %v613, 936
  %v731 = vadd.s32 %v613, 944
  %v732 = vadd.s32 %v613, 952
  %v733 = vadd.s32 %v613, 960
  %v734 = vadd.s32 %v613, 968
  %v735 = vadd.s32 %v613, 976
  %v736 = vadd.s32 %v613, 984
  %v737 = vadd.s32 %v613, 992
  %v738 = vadd.s32 %v613, 1000
  %v739 = vadd.s32 %v613, 1008
  %v740 = vadd.s32 %v613, 1016
  %s741 = smul.u32 %s611, 1024
  %v742 = vstv %s741
  %v743 = vadd.s32 %v742, %v613
  %v744 = vadd.s32 %v742, %v614
  %v745 = vadd.s32 %v742, %v615
  %v746 = vadd.s32 %v742, %v616
  %v747 = vadd.s32 %v742, %v617
  %v748 = vadd.s32 %v742, %v618
  %v749 = vadd.s32 %v742, %v619
  %v750 = vadd.s32 %v742, %v620
  %v751 = vadd.s32 %v742, %v621
  %v752 = vadd.s32 %v742, %v622
  %v753 = vadd.s32 %v742, %v623
  %v754 = vadd.s32 %v742, %v624
  %v755 = vadd.s32 %v742, %v625
  %v756 = vadd.s32 %v742, %v626
  %v757 = vadd.s32 %v742, %v627
  %v758 = vadd.s32 %v742, %v628
  %v759 = vadd.s32 %v742, %v629
  %v760 = vadd.s32 %v742, %v630
  %v761 = vadd.s32 %v742, %v631
  %v762 = vadd.s32 %v742, %v632
  %v763 = vadd.s32 %v742, %v633
  %v764 = vadd.s32 %v742, %v634
  %v765 = vadd.s32 %v742, %v635
  %v766 = vadd.s32 %v742, %v636
  %v767 = vadd.s32 %v742, %v637
  %v768 = vadd.s32 %v742, %v638
  %v769 = vadd.s32 %v742, %v639
  %v770 = vadd.s32 %v742, %v640
  %v771 = vadd.s32 %v742, %v641
  %v772 = vadd.s32 %v742, %v642
  %v773 = vadd.s32 %v742, %v643
  %v774 = vadd.s32 %v742, %v644
  %v775 = vadd.s32 %v742, %v645
  %v776 = vadd.s32 %v742, %v646
  %v777 = vadd.s32 %v742, %v647
  %v778 = vadd.s32 %v742, %v648
  %v779 = vadd.s32 %v742, %v649
  %v780 = vadd.s32 %v742, %v650
  %v781 = vadd.s32 %v742, %v651
  %v782 = vadd.s32 %v742, %v652
  %v783 = vadd.s32 %v742, %v653
  %v784 = vadd.s32 %v742, %v654
  %v785 = vadd.s32 %v742, %v655
  %v786 = vadd.s32 %v742, %v656
  %v787 = vadd.s32 %v742, %v657
  %v788 = vadd.s32 %v742, %v658
  %v789 = vadd.s32 %v742, %v659
  %v790 = vadd.s32 %v742, %v660
  %v791 = vadd.s32 %v742, %v661
  %v792 = vadd.s32 %v742, %v662
  %v793 = vadd.s32 %v742, %v663
  %v794 = vadd.s32 %v742, %v664
  %v795 = vadd.s32 %v742, %v665
  %v796 = vadd.s32 %v742, %v666
  %v797 = vadd.s32 %v742, %v667
  %v798 = vadd.s32 %v742, %v668
  %v799 = vadd.s32 %v742, %v669
  %v800 = vadd.s32 %v742, %v670
  %v801 = vadd.s32 %v742, %v671
  %v802 = vadd.s32 %v742, %v672
  %v803 = vadd.s32 %v742, %v673
  %v804 = vadd.s32 %v742, %v674
  %v805 = vadd.s32 %v742, %v675
  %v806 = vadd.s32 %v742, %v676
  %v807 = vadd.s32 %v742, %v677
  %v808 = vadd.s32 %v742, %v678
  %v809 = vadd.s32 %v742, %v679
  %v810 = vadd.s32 %v742, %v680
  %v811 = vadd.s32 %v742, %v681
  %v812 = vadd.s32 %v742, %v682
  %v813 = vadd.s32 %v742, %v683
  %v814 = vadd.s32 %v742, %v684
  %v815 = vadd.s32 %v742, %v685
  %v816 = vadd.s32 %v742, %v686
  %v817 = vadd.s32 %v742, %v687
  %v818 = vadd.s32 %v742, %v688
  %v819 = vadd.s32 %v742, %v689
  %v820 = vadd.s32 %v742, %v690
  %v821 = vadd.s32 %v742, %v691
  %v822 = vadd.s32 %v742, %v692
  %v823 = vadd.s32 %v742, %v693
  %v824 = vadd.s32 %v742, %v694
  %v825 = vadd.s32 %v742, %v695
  %v826 = vadd.s32 %v742, %v696
  %v827 = vadd.s32 %v742, %v697
  %v828 = vadd.s32 %v742, %v698
  %v829 = vadd.s32 %v742, %v699
  %v830 = vadd.s32 %v742, %v700
  %v831 = vadd.s32 %v742, %v701
  %v832 = vadd.s32 %v742, %v702
  %v833 = vadd.s32 %v742, %v703
  %v834 = vadd.s32 %v742, %v704
  %v835 = vadd.s32 %v742, %v705
  %v836 = vadd.s32 %v742, %v706
  %v837 = vadd.s32 %v742, %v707
  %v838 = vadd.s32 %v742, %v708
  %v839 = vadd.s32 %v742, %v709
  %v840 = vadd.s32 %v742, %v710
  %v841 = vadd.s32 %v742, %v711
  %v842 = vadd.s32 %v742, %v712
  %v843 = vadd.s32 %v742, %v713
  %v844 = vadd.s32 %v742, %v714
  %v845 = vadd.s32 %v742, %v715
  %v846 = vadd.s32 %v742, %v716
  %v847 = vadd.s32 %v742, %v717
  %v848 = vadd.s32 %v742, %v718
  %v849 = vadd.s32 %v742, %v719
  %v850 = vadd.s32 %v742, %v720
  %v851 = vadd.s32 %v742, %v721
  %v852 = vadd.s32 %v742, %v722
  %v853 = vadd.s32 %v742, %v723
  %v854 = vadd.s32 %v742, %v724
  %v855 = vadd.s32 %v742, %v725
  %v856 = vadd.s32 %v742, %v726
  %v857 = vadd.s32 %v742, %v727
  %v858 = vadd.s32 %v742, %v728
  %v859 = vadd.s32 %v742, %v729
  %v860 = vadd.s32 %v742, %v730
  %v861 = vadd.s32 %v742, %v731
  %v862 = vadd.s32 %v742, %v732
  %v863 = vadd.s32 %v742, %v733
  %v864 = vadd.s32 %v742, %v734
  %v865 = vadd.s32 %v742, %v735
  %v866 = vadd.s32 %v742, %v736
  %v867 = vadd.s32 %v742, %v737
  %v868 = vadd.s32 %v742, %v738
  %v869 = vadd.s32 %v742, %v739
  %v870 = vadd.s32 %v742, %v740
  %vm871 = vcmp.lt.s32.totalorder %v743, 4
  %vm872 = vcmp.lt.s32.totalorder %v744, 4
  %vm873 = vcmp.lt.s32.totalorder %v745, 4
  %vm874 = vcmp.lt.s32.totalorder %v746, 4
  %vm875 = vcmp.lt.s32.totalorder %v747, 4
  %vm876 = vcmp.lt.s32.totalorder %v748, 4
  %vm877 = vcmp.lt.s32.totalorder %v749, 4
  %vm878 = vcmp.lt.s32.totalorder %v750, 4
  %vm879 = vcmp.lt.s32.totalorder %v751, 4
  %vm880 = vcmp.lt.s32.totalorder %v752, 4
  %vm881 = vcmp.lt.s32.totalorder %v753, 4
  %vm882 = vcmp.lt.s32.totalorder %v754, 4
  %vm883 = vcmp.lt.s32.totalorder %v755, 4
  %vm884 = vcmp.lt.s32.totalorder %v756, 4
  %vm885 = vcmp.lt.s32.totalorder %v757, 4
  %vm886 = vcmp.lt.s32.totalorder %v758, 4
  %vm887 = vcmp.lt.s32.totalorder %v759, 4
  %vm888 = vcmp.lt.s32.totalorder %v760, 4
  %vm889 = vcmp.lt.s32.totalorder %v761, 4
  %vm890 = vcmp.lt.s32.totalorder %v762, 4
  %vm891 = vcmp.lt.s32.totalorder %v763, 4
  %vm892 = vcmp.lt.s32.totalorder %v764, 4
  %vm893 = vcmp.lt.s32.totalorder %v765, 4
  %vm894 = vcmp.lt.s32.totalorder %v766, 4
  %vm895 = vcmp.lt.s32.totalorder %v767, 4
  %vm896 = vcmp.lt.s32.totalorder %v768, 4
  %vm897 = vcmp.lt.s32.totalorder %v769, 4
  %vm898 = vcmp.lt.s32.totalorder %v770, 4
  %vm899 = vcmp.lt.s32.totalorder %v771, 4
  %vm900 = vcmp.lt.s32.totalorder %v772, 4
  %vm901 = vcmp.lt.s32.totalorder %v773, 4
  %vm902 = vcmp.lt.s32.totalorder %v774, 4
  %vm903 = vcmp.lt.s32.totalorder %v775, 4
  %vm904 = vcmp.lt.s32.totalorder %v776, 4
  %vm905 = vcmp.lt.s32.totalorder %v777, 4
  %vm906 = vcmp.lt.s32.totalorder %v778, 4
  %vm907 = vcmp.lt.s32.totalorder %v779, 4
  %vm908 = vcmp.lt.s32.totalorder %v780, 4
  %vm909 = vcmp.lt.s32.totalorder %v781, 4
  %vm910 = vcmp.lt.s32.totalorder %v782, 4
  %vm911 = vcmp.lt.s32.totalorder %v783, 4
  %vm912 = vcmp.lt.s32.totalorder %v784, 4
  %vm913 = vcmp.lt.s32.totalorder %v785, 4
  %vm914 = vcmp.lt.s32.totalorder %v786, 4
  %vm915 = vcmp.lt.s32.totalorder %v787, 4
  %vm916 = vcmp.lt.s32.totalorder %v788, 4
  %vm917 = vcmp.lt.s32.totalorder %v789, 4
  %vm918 = vcmp.lt.s32.totalorder %v790, 4
  %vm919 = vcmp.lt.s32.totalorder %v791, 4
  %vm920 = vcmp.lt.s32.totalorder %v792, 4
  %vm921 = vcmp.lt.s32.totalorder %v793, 4
  %vm922 = vcmp.lt.s32.totalorder %v794, 4
  %vm923 = vcmp.lt.s32.totalorder %v795, 4
  %vm924 = vcmp.lt.s32.totalorder %v796, 4
  %vm925 = vcmp.lt.s32.totalorder %v797, 4
  %vm926 = vcmp.lt.s32.totalorder %v798, 4
  %vm927 = vcmp.lt.s32.totalorder %v799, 4
  %vm928 = vcmp.lt.s32.totalorder %v800, 4
  %vm929 = vcmp.lt.s32.totalorder %v801, 4
  %vm930 = vcmp.lt.s32.totalorder %v802, 4
  %vm931 = vcmp.lt.s32.totalorder %v803, 4
  %vm932 = vcmp.lt.s32.totalorder %v804, 4
  %vm933 = vcmp.lt.s32.totalorder %v805, 4
  %vm934 = vcmp.lt.s32.totalorder %v806, 4
  %vm935 = vcmp.lt.s32.totalorder %v807, 4
  %vm936 = vcmp.lt.s32.totalorder %v808, 4
  %vm937 = vcmp.lt.s32.totalorder %v809, 4
  %vm938 = vcmp.lt.s32.totalorder %v810, 4
  %vm939 = vcmp.lt.s32.totalorder %v811, 4
  %vm940 = vcmp.lt.s32.totalorder %v812, 4
  %vm941 = vcmp.lt.s32.totalorder %v813, 4
  %vm942 = vcmp.lt.s32.totalorder %v814, 4
  %vm943 = vcmp.lt.s32.totalorder %v815, 4
  %vm944 = vcmp.lt.s32.totalorder %v816, 4
  %vm945 = vcmp.lt.s32.totalorder %v817, 4
  %vm946 = vcmp.lt.s32.totalorder %v818, 4
  %vm947 = vcmp.lt.s32.totalorder %v819, 4
  %vm948 = vcmp.lt.s32.totalorder %v820, 4
  %vm949 = vcmp.lt.s32.totalorder %v821, 4
  %vm950 = vcmp.lt.s32.totalorder %v822, 4
  %vm951 = vcmp.lt.s32.totalorder %v823, 4
  %vm952 = vcmp.lt.s32.totalorder %v824, 4
  %vm953 = vcmp.lt.s32.totalorder %v825, 4
  %vm954 = vcmp.lt.s32.totalorder %v826, 4
  %vm955 = vcmp.lt.s32.totalorder %v827, 4
  %vm956 = vcmp.lt.s32.totalorder %v828, 4
  %vm957 = vcmp.lt.s32.totalorder %v829, 4
  %vm958 = vcmp.lt.s32.totalorder %v830, 4
  %vm959 = vcmp.lt.s32.totalorder %v831, 4
  %vm960 = vcmp.lt.s32.totalorder %v832, 4
  %vm961 = vcmp.lt.s32.totalorder %v833, 4
  %vm962 = vcmp.lt.s32.totalorder %v834, 4
  %vm963 = vcmp.lt.s32.totalorder %v835, 4
  %vm964 = vcmp.lt.s32.totalorder %v836, 4
  %vm965 = vcmp.lt.s32.totalorder %v837, 4
  %vm966 = vcmp.lt.s32.totalorder %v838, 4
  %vm967 = vcmp.lt.s32.totalorder %v839, 4
  %vm968 = vcmp.lt.s32.totalorder %v840, 4
  %vm969 = vcmp.lt.s32.totalorder %v841, 4
  %vm970 = vcmp.lt.s32.totalorder %v842, 4
  %vm971 = vcmp.lt.s32.totalorder %v843, 4
  %vm972 = vcmp.lt.s32.totalorder %v844, 4
  %vm973 = vcmp.lt.s32.totalorder %v845, 4
  %vm974 = vcmp.lt.s32.totalorder %v846, 4
  %vm975 = vcmp.lt.s32.totalorder %v847, 4
  %vm976 = vcmp.lt.s32.totalorder %v848, 4
  %vm977 = vcmp.lt.s32.totalorder %v849, 4
  %vm978 = vcmp.lt.s32.totalorder %v850, 4
  %vm979 = vcmp.lt.s32.totalorder %v851, 4
  %vm980 = vcmp.lt.s32.totalorder %v852, 4
  %vm981 = vcmp.lt.s32.totalorder %v853, 4
  %vm982 = vcmp.lt.s32.totalorder %v854, 4
  %vm983 = vcmp.lt.s32.totalorder %v855, 4
  %vm984 = vcmp.lt.s32.totalorder %v856, 4
  %vm985 = vcmp.lt.s32.totalorder %v857, 4
  %vm986 = vcmp.lt.s32.totalorder %v858, 4
  %vm987 = vcmp.lt.s32.totalorder %v859, 4
  %vm988 = vcmp.lt.s32.totalorder %v860, 4
  %vm989 = vcmp.lt.s32.totalorder %v861, 4
  %vm990 = vcmp.lt.s32.totalorder %v862, 4
  %vm991 = vcmp.lt.s32.totalorder %v863, 4
  %vm992 = vcmp.lt.s32.totalorder %v864, 4
  %vm993 = vcmp.lt.s32.totalorder %v865, 4
  %vm994 = vcmp.lt.s32.totalorder %v866, 4
  %vm995 = vcmp.lt.s32.totalorder %v867, 4
  %vm996 = vcmp.lt.s32.totalorder %v868, 4
  %vm997 = vcmp.lt.s32.totalorder %v869, 4
  %vm998 = vcmp.lt.s32.totalorder %v870, 4
  %vm999 = vcmp.gt.f32.partialorder %v355, 0.0
  %vm1000 = vcmp.gt.f32.partialorder %v356, 0.0
  %vm1001 = vcmp.gt.f32.partialorder %v357, 0.0
  %vm1002 = vcmp.gt.f32.partialorder %v358, 0.0
  %vm1003 = vcmp.gt.f32.partialorder %v359, 0.0
  %vm1004 = vcmp.gt.f32.partialorder %v360, 0.0
  %vm1005 = vcmp.gt.f32.partialorder %v361, 0.0
  %vm1006 = vcmp.gt.f32.partialorder %v362, 0.0
  %vm1007 = vcmp.gt.f32.partialorder %v363, 0.0
  %vm1008 = vcmp.gt.f32.partialorder %v364, 0.0
  %vm1009 = vcmp.gt.f32.partialorder %v365, 0.0
  %vm1010 = vcmp.gt.f32.partialorder %v366, 0.0
  %vm1011 = vcmp.gt.f32.partialorder %v367, 0.0
  %vm1012 = vcmp.gt.f32.partialorder %v368, 0.0
  %vm1013 = vcmp.gt.f32.partialorder %v369, 0.0
  %vm1014 = vcmp.gt.f32.partialorder %v370, 0.0
  %vm1015 = vcmp.gt.f32.partialorder %v371, 0.0
  %vm1016 = vcmp.gt.f32.partialorder %v372, 0.0
  %vm1017 = vcmp.gt.f32.partialorder %v373, 0.0
  %vm1018 = vcmp.gt.f32.partialorder %v374, 0.0
  %vm1019 = vcmp.gt.f32.partialorder %v375, 0.0
  %vm1020 = vcmp.gt.f32.partialorder %v376, 0.0
  %vm1021 = vcmp.gt.f32.partialorder %v377, 0.0
  %vm1022 = vcmp.gt.f32.partialorder %v378, 0.0
  %vm1023 = vcmp.gt.f32.partialorder %v379, 0.0
  %vm1024 = vcmp.gt.f32.partialorder %v380, 0.0
  %vm1025 = vcmp.gt.f32.partialorder %v381, 0.0
  %vm1026 = vcmp.gt.f32.partialorder %v382, 0.0
  %vm1027 = vcmp.gt.f32.partialorder %v383, 0.0
  %vm1028 = vcmp.gt.f32.partialorder %v384, 0.0
  %vm1029 = vcmp.gt.f32.partialorder %v385, 0.0
  %vm1030 = vcmp.gt.f32.partialorder %v386, 0.0
  %vm1031 = vcmp.gt.f32.partialorder %v387, 0.0
  %vm1032 = vcmp.gt.f32.partialorder %v388, 0.0
  %vm1033 = vcmp.gt.f32.partialorder %v389, 0.0
  %vm1034 = vcmp.gt.f32.partialorder %v390, 0.0
  %vm1035 = vcmp.gt.f32.partialorder %v391, 0.0
  %vm1036 = vcmp.gt.f32.partialorder %v392, 0.0
  %vm1037 = vcmp.gt.f32.partialorder %v393, 0.0
  %vm1038 = vcmp.gt.f32.partialorder %v394, 0.0
  %vm1039 = vcmp.gt.f32.partialorder %v395, 0.0
  %vm1040 = vcmp.gt.f32.partialorder %v396, 0.0
  %vm1041 = vcmp.gt.f32.partialorder %v397, 0.0
  %vm1042 = vcmp.gt.f32.partialorder %v398, 0.0
  %vm1043 = vcmp.gt.f32.partialorder %v399, 0.0
  %vm1044 = vcmp.gt.f32.partialorder %v400, 0.0
  %vm1045 = vcmp.gt.f32.partialorder %v401, 0.0
  %vm1046 = vcmp.gt.f32.partialorder %v402, 0.0
  %vm1047 = vcmp.gt.f32.partialorder %v403, 0.0
  %vm1048 = vcmp.gt.f32.partialorder %v404, 0.0
  %vm1049 = vcmp.gt.f32.partialorder %v405, 0.0
  %vm1050 = vcmp.gt.f32.partialorder %v406, 0.0
  %vm1051 = vcmp.gt.f32.partialorder %v407, 0.0
  %vm1052 = vcmp.gt.f32.partialorder %v408, 0.0
  %vm1053 = vcmp.gt.f32.partialorder %v409, 0.0
  %vm1054 = vcmp.gt.f32.partialorder %v410, 0.0
  %vm1055 = vcmp.gt.f32.partialorder %v411, 0.0
  %vm1056 = vcmp.gt.f32.partialorder %v412, 0.0
  %vm1057 = vcmp.gt.f32.partialorder %v413, 0.0
  %vm1058 = vcmp.gt.f32.partialorder %v414, 0.0
  %vm1059 = vcmp.gt.f32.partialorder %v415, 0.0
  %vm1060 = vcmp.gt.f32.partialorder %v416, 0.0
  %vm1061 = vcmp.gt.f32.partialorder %v417, 0.0
  %vm1062 = vcmp.gt.f32.partialorder %v418, 0.0
  %vm1063 = vcmp.gt.f32.partialorder %v419, 0.0
  %vm1064 = vcmp.gt.f32.partialorder %v420, 0.0
  %vm1065 = vcmp.gt.f32.partialorder %v421, 0.0
  %vm1066 = vcmp.gt.f32.partialorder %v422, 0.0
  %vm1067 = vcmp.gt.f32.partialorder %v423, 0.0
  %vm1068 = vcmp.gt.f32.partialorder %v424, 0.0
  %vm1069 = vcmp.gt.f32.partialorder %v425, 0.0
  %vm1070 = vcmp.gt.f32.partialorder %v426, 0.0
  %vm1071 = vcmp.gt.f32.partialorder %v427, 0.0
  %vm1072 = vcmp.gt.f32.partialorder %v428, 0.0
  %vm1073 = vcmp.gt.f32.partialorder %v429, 0.0
  %vm1074 = vcmp.gt.f32.partialorder %v430, 0.0
  %vm1075 = vcmp.gt.f32.partialorder %v431, 0.0
  %vm1076 = vcmp.gt.f32.partialorder %v432, 0.0
  %vm1077 = vcmp.gt.f32.partialorder %v433, 0.0
  %vm1078 = vcmp.gt.f32.partialorder %v434, 0.0
  %vm1079 = vcmp.gt.f32.partialorder %v435, 0.0
  %vm1080 = vcmp.gt.f32.partialorder %v436, 0.0
  %vm1081 = vcmp.gt.f32.partialorder %v437, 0.0
  %vm1082 = vcmp.gt.f32.partialorder %v438, 0.0
  %vm1083 = vcmp.gt.f32.partialorder %v439, 0.0
  %vm1084 = vcmp.gt.f32.partialorder %v440, 0.0
  %vm1085 = vcmp.gt.f32.partialorder %v441, 0.0
  %vm1086 = vcmp.gt.f32.partialorder %v442, 0.0
  %vm1087 = vcmp.gt.f32.partialorder %v443, 0.0
  %vm1088 = vcmp.gt.f32.partialorder %v444, 0.0
  %vm1089 = vcmp.gt.f32.partialorder %v445, 0.0
  %vm1090 = vcmp.gt.f32.partialorder %v446, 0.0
  %vm1091 = vcmp.gt.f32.partialorder %v447, 0.0
  %vm1092 = vcmp.gt.f32.partialorder %v448, 0.0
  %vm1093 = vcmp.gt.f32.partialorder %v449, 0.0
  %vm1094 = vcmp.gt.f32.partialorder %v450, 0.0
  %vm1095 = vcmp.gt.f32.partialorder %v451, 0.0
  %vm1096 = vcmp.gt.f32.partialorder %v452, 0.0
  %vm1097 = vcmp.gt.f32.partialorder %v453, 0.0
  %vm1098 = vcmp.gt.f32.partialorder %v454, 0.0
  %vm1099 = vcmp.gt.f32.partialorder %v455, 0.0
  %vm1100 = vcmp.gt.f32.partialorder %v456, 0.0
  %vm1101 = vcmp.gt.f32.partialorder %v457, 0.0
  %vm1102 = vcmp.gt.f32.partialorder %v458, 0.0
  %vm1103 = vcmp.gt.f32.partialorder %v459, 0.0
  %vm1104 = vcmp.gt.f32.partialorder %v460, 0.0
  %vm1105 = vcmp.gt.f32.partialorder %v461, 0.0
  %vm1106 = vcmp.gt.f32.partialorder %v462, 0.0
  %vm1107 = vcmp.gt.f32.partialorder %v463, 0.0
  %vm1108 = vcmp.gt.f32.partialorder %v464, 0.0
  %vm1109 = vcmp.gt.f32.partialorder %v465, 0.0
  %vm1110 = vcmp.gt.f32.partialorder %v466, 0.0
  %vm1111 = vcmp.gt.f32.partialorder %v467, 0.0
  %vm1112 = vcmp.gt.f32.partialorder %v468, 0.0
  %vm1113 = vcmp.gt.f32.partialorder %v469, 0.0
  %vm1114 = vcmp.gt.f32.partialorder %v470, 0.0
  %vm1115 = vcmp.gt.f32.partialorder %v471, 0.0
  %vm1116 = vcmp.gt.f32.partialorder %v472, 0.0
  %vm1117 = vcmp.gt.f32.partialorder %v473, 0.0
  %vm1118 = vcmp.gt.f32.partialorder %v474, 0.0
  %vm1119 = vcmp.gt.f32.partialorder %v475, 0.0
  %vm1120 = vcmp.gt.f32.partialorder %v476, 0.0
  %vm1121 = vcmp.gt.f32.partialorder %v477, 0.0
  %vm1122 = vcmp.gt.f32.partialorder %v478, 0.0
  %vm1123 = vcmp.gt.f32.partialorder %v479, 0.0
  %vm1124 = vcmp.gt.f32.partialorder %v480, 0.0
  %vm1125 = vcmp.gt.f32.partialorder %v481, 0.0
  %vm1126 = vcmp.gt.f32.partialorder %v482, 0.0
  %vm1127 = vmand %vm999, %vm871
  %vm1128 = vmand %vm1000, %vm872
  %vm1129 = vmand %vm1001, %vm873
  %vm1130 = vmand %vm1002, %vm874
  %vm1131 = vmand %vm1003, %vm875
  %vm1132 = vmand %vm1004, %vm876
  %vm1133 = vmand %vm1005, %vm877
  %vm1134 = vmand %vm1006, %vm878
  %vm1135 = vmand %vm1007, %vm879
  %vm1136 = vmand %vm1008, %vm880
  %vm1137 = vmand %vm1009, %vm881
  %vm1138 = vmand %vm1010, %vm882
  %vm1139 = vmand %vm1011, %vm883
  %vm1140 = vmand %vm1012, %vm884
  %vm1141 = vmand %vm1013, %vm885
  %vm1142 = vmand %vm1014, %vm886
  %vm1143 = vmand %vm1015, %vm887
  %vm1144 = vmand %vm1016, %vm888
  %vm1145 = vmand %vm1017, %vm889
  %vm1146 = vmand %vm1018, %vm890
  %vm1147 = vmand %vm1019, %vm891
  %vm1148 = vmand %vm1020, %vm892
  %vm1149 = vmand %vm1021, %vm893
  %vm1150 = vmand %vm1022, %vm894
  %vm1151 = vmand %vm1023, %vm895
  %vm1152 = vmand %vm1024, %vm896
  %vm1153 = vmand %vm1025, %vm897
  %vm1154 = vmand %vm1026, %vm898
  %vm1155 = vmand %vm1027, %vm899
  %vm1156 = vmand %vm1028, %vm900
  %vm1157 = vmand %vm1029, %vm901
  %vm1158 = vmand %vm1030, %vm902
  %vm1159 = vmand %vm1031, %vm903
  %vm1160 = vmand %vm1032, %vm904
  %vm1161 = vmand %vm1033, %vm905
  %vm1162 = vmand %vm1034, %vm906
  %vm1163 = vmand %vm1035, %vm907
  %vm1164 = vmand %vm1036, %vm908
  %vm1165 = vmand %vm1037, %vm909
  %vm1166 = vmand %vm1038, %vm910
  %vm1167 = vmand %vm1039, %vm911
  %vm1168 = vmand %vm1040, %vm912
  %vm1169 = vmand %vm1041, %vm913
  %vm1170 = vmand %vm1042, %vm914
  %vm1171 = vmand %vm1043, %vm915
  %vm1172 = vmand %vm1044, %vm916
  %vm1173 = vmand %vm1045, %vm917
  %vm1174 = vmand %vm1046, %vm918
  %vm1175 = vmand %vm1047, %vm919
  %vm1176 = vmand %vm1048, %vm920
  %vm1177 = vmand %vm1049, %vm921
  %vm1178 = vmand %vm1050, %vm922
  %vm1179 = vmand %vm1051, %vm923
  %vm1180 = vmand %vm1052, %vm924
  %vm1181 = vmand %vm1053, %vm925
  %vm1182 = vmand %vm1054, %vm926
  %vm1183 = vmand %vm1055, %vm927
  %vm1184 = vmand %vm1056, %vm928
  %vm1185 = vmand %vm1057, %vm929
  %vm1186 = vmand %vm1058, %vm930
  %vm1187 = vmand %vm1059, %vm931
  %vm1188 = vmand %vm1060, %vm932
  %vm1189 = vmand %vm1061, %vm933
  %vm1190 = vmand %vm1062, %vm934
  %vm1191 = vmand %vm1063, %vm935
  %vm1192 = vmand %vm1064, %vm936
  %vm1193 = vmand %vm1065, %vm937
  %vm1194 = vmand %vm1066, %vm938
  %vm1195 = vmand %vm1067, %vm939
  %vm1196 = vmand %vm1068, %vm940
  %vm1197 = vmand %vm1069, %vm941
  %vm1198 = vmand %vm1070, %vm942
  %vm1199 = vmand %vm1071, %vm943
  %vm1200 = vmand %vm1072, %vm944
  %vm1201 = vmand %vm1073, %vm945
  %vm1202 = vmand %vm1074, %vm946
  %vm1203 = vmand %vm1075, %vm947
  %vm1204 = vmand %vm1076, %vm948
  %vm1205 = vmand %vm1077, %vm949
  %vm1206 = vmand %vm1078, %vm950
  %vm1207 = vmand %vm1079, %vm951
  %vm1208 = vmand %vm1080, %vm952
  %vm1209 = vmand %vm1081, %vm953
  %vm1210 = vmand %vm1082, %vm954
  %vm1211 = vmand %vm1083, %vm955
  %vm1212 = vmand %vm1084, %vm956
  %vm1213 = vmand %vm1085, %vm957
  %vm1214 = vmand %vm1086, %vm958
  %vm1215 = vmand %vm1087, %vm959
  %vm1216 = vmand %vm1088, %vm960
  %vm1217 = vmand %vm1089, %vm961
  %vm1218 = vmand %vm1090, %vm962
  %vm1219 = vmand %vm1091, %vm963
  %vm1220 = vmand %vm1092, %vm964
  %vm1221 = vmand %vm1093, %vm965
  %vm1222 = vmand %vm1094, %vm966
  %vm1223 = vmand %vm1095, %vm967
  %vm1224 = vmand %vm1096, %vm968
  %vm1225 = vmand %vm1097, %vm969
  %vm1226 = vmand %vm1098, %vm970
  %vm1227 = vmand %vm1099, %vm971
  %vm1228 = vmand %vm1100, %vm972
  %vm1229 = vmand %vm1101, %vm973
  %vm1230 = vmand %vm1102, %vm974
  %vm1231 = vmand %vm1103, %vm975
  %vm1232 = vmand %vm1104, %vm976
  %vm1233 = vmand %vm1105, %vm977
  %vm1234 = vmand %vm1106, %vm978
  %vm1235 = vmand %vm1107, %vm979
  %vm1236 = vmand %vm1108, %vm980
  %vm1237 = vmand %vm1109, %vm981
  %vm1238 = vmand %vm1110, %vm982
  %vm1239 = vmand %vm1111, %vm983
  %vm1240 = vmand %vm1112, %vm984
  %vm1241 = vmand %vm1113, %vm985
  %vm1242 = vmand %vm1114, %vm986
  %vm1243 = vmand %vm1115, %vm987
  %vm1244 = vmand %vm1116, %vm988
  %vm1245 = vmand %vm1117, %vm989
  %vm1246 = vmand %vm1118, %vm990
  %vm1247 = vmand %vm1119, %vm991
  %vm1248 = vmand %vm1120, %vm992
  %vm1249 = vmand %vm1121, %vm993
  %vm1250 = vmand %vm1122, %vm994
  %vm1251 = vmand %vm1123, %vm995
  %vm1252 = vmand %vm1124, %vm996
  %vm1253 = vmand %vm1125, %vm997
  %vm1254 = vmand %vm1126, %vm998
  %v1255 = vsub.f32 %v355, %v483
  %v1256 = vsub.f32 %v356, %v484
  %v1257 = vsub.f32 %v357, %v485
  %v1258 = vsub.f32 %v358, %v486
  %v1259 = vsub.f32 %v359, %v487
  %v1260 = vsub.f32 %v360, %v488
  %v1261 = vsub.f32 %v361, %v489
  %v1262 = vsub.f32 %v362, %v490
  %v1263 = vsub.f32 %v363, %v491
  %v1264 = vsub.f32 %v364, %v492
  %v1265 = vsub.f32 %v365, %v493
  %v1266 = vsub.f32 %v366, %v494
  %v1267 = vsub.f32 %v367, %v495
  %v1268 = vsub.f32 %v368, %v496
  %v1269 = vsub.f32 %v369, %v497
  %v1270 = vsub.f32 %v370, %v498
  %v1271 = vsub.f32 %v371, %v499
  %v1272 = vsub.f32 %v372, %v500
  %v1273 = vsub.f32 %v373, %v501
  %v1274 = vsub.f32 %v374, %v502
  %v1275 = vsub.f32 %v375, %v503
  %v1276 = vsub.f32 %v376, %v504
  %v1277 = vsub.f32 %v377, %v505
  %v1278 = vsub.f32 %v378, %v506
  %v1279 = vsub.f32 %v379, %v507
  %v1280 = vsub.f32 %v380, %v508
  %v1281 = vsub.f32 %v381, %v509
  %v1282 = vsub.f32 %v382, %v510
  %v1283 = vsub.f32 %v383, %v511
  %v1284 = vsub.f32 %v384, %v512
  %v1285 = vsub.f32 %v385, %v513
  %v1286 = vsub.f32 %v386, %v514
  %v1287 = vsub.f32 %v387, %v515
  %v1288 = vsub.f32 %v388, %v516
  %v1289 = vsub.f32 %v389, %v517
  %v1290 = vsub.f32 %v390, %v518
  %v1291 = vsub.f32 %v391, %v519
  %v1292 = vsub.f32 %v392, %v520
  %v1293 = vsub.f32 %v393, %v521
  %v1294 = vsub.f32 %v394, %v522
  %v1295 = vsub.f32 %v395, %v523
  %v1296 = vsub.f32 %v396, %v524
  %v1297 = vsub.f32 %v397, %v525
  %v1298 = vsub.f32 %v398, %v526
  %v1299 = vsub.f32 %v399, %v527
  %v1300 = vsub.f32 %v400, %v528
  %v1301 = vsub.f32 %v401, %v529
  %v1302 = vsub.f32 %v402, %v530
  %v1303 = vsub.f32 %v403, %v531
  %v1304 = vsub.f32 %v404, %v532
  %v1305 = vsub.f32 %v405, %v533
  %v1306 = vsub.f32 %v406, %v534
  %v1307 = vsub.f32 %v407, %v535
  %v1308 = vsub.f32 %v408, %v536
  %v1309 = vsub.f32 %v409, %v537
  %v1310 = vsub.f32 %v410, %v538
  %v1311 = vsub.f32 %v411, %v539
  %v1312 = vsub.f32 %v412, %v540
  %v1313 = vsub.f32 %v413, %v541
  %v1314 = vsub.f32 %v414, %v542
  %v1315 = vsub.f32 %v415, %v543
  %v1316 = vsub.f32 %v416, %v544
  %v1317 = vsub.f32 %v417, %v545
  %v1318 = vsub.f32 %v418, %v546
  %v1319 = vsub.f32 %v419, %v547
  %v1320 = vsub.f32 %v420, %v548
  %v1321 = vsub.f32 %v421, %v549
  %v1322 = vsub.f32 %v422, %v550
  %v1323 = vsub.f32 %v423, %v551
  %v1324 = vsub.f32 %v424, %v552
  %v1325 = vsub.f32 %v425, %v553
  %v1326 = vsub.f32 %v426, %v554
  %v1327 = vsub.f32 %v427, %v555
  %v1328 = vsub.f32 %v428, %v556
  %v1329 = vsub.f32 %v429, %v557
  %v1330 = vsub.f32 %v430, %v558
  %v1331 = vsub.f32 %v431, %v559
  %v1332 = vsub.f32 %v432, %v560
  %v1333 = vsub.f32 %v433, %v561
  %v1334 = vsub.f32 %v434, %v562
  %v1335 = vsub.f32 %v435, %v563
  %v1336 = vsub.f32 %v436, %v564
  %v1337 = vsub.f32 %v437, %v565
  %v1338 = vsub.f32 %v438, %v566
  %v1339 = vsub.f32 %v439, %v567
  %v1340 = vsub.f32 %v440, %v568
  %v1341 = vsub.f32 %v441, %v569
  %v1342 = vsub.f32 %v442, %v570
  %v1343 = vsub.f32 %v443, %v571
  %v1344 = vsub.f32 %v444, %v572
  %v1345 = vsub.f32 %v445, %v573
  %v1346 = vsub.f32 %v446, %v574
  %v1347 = vsub.f32 %v447, %v575
  %v1348 = vsub.f32 %v448, %v576
  %v1349 = vsub.f32 %v449, %v577
  %v1350 = vsub.f32 %v450, %v578
  %v1351 = vsub.f32 %v451, %v579
  %v1352 = vsub.f32 %v452, %v580
  %v1353 = vsub.f32 %v453, %v581
  %v1354 = vsub.f32 %v454, %v582
  %v1355 = vsub.f32 %v455, %v583
  %v1356 = vsub.f32 %v456, %v584
  %v1357 = vsub.f32 %v457, %v585
  %v1358 = vsub.f32 %v458, %v586
  %v1359 = vsub.f32 %v459, %v587
  %v1360 = vsub.f32 %v460, %v588
  %v1361 = vsub.f32 %v461, %v589
  %v1362 = vsub.f32 %v462, %v590
  %v1363 = vsub.f32 %v463, %v591
  %v1364 = vsub.f32 %v464, %v592
  %v1365 = vsub.f32 %v465, %v593
  %v1366 = vsub.f32 %v466, %v594
  %v1367 = vsub.f32 %v467, %v595
  %v1368 = vsub.f32 %v468, %v596
  %v1369 = vsub.f32 %v469, %v597
  %v1370 = vsub.f32 %v470, %v598
  %v1371 = vsub.f32 %v471, %v599
  %v1372 = vsub.f32 %v472, %v600
  %v1373 = vsub.f32 %v473, %v601
  %v1374 = vsub.f32 %v474, %v602
  %v1375 = vsub.f32 %v475, %v603
  %v1376 = vsub.f32 %v476, %v604
  %v1377 = vsub.f32 %v477, %v605
  %v1378 = vsub.f32 %v478, %v606
  %v1379 = vsub.f32 %v479, %v607
  %v1380 = vsub.f32 %v480, %v608
  %v1381 = vsub.f32 %v481, %v609
  %v1382 = vsub.f32 %v482, %v610
  %v1383 = vmul.f32 %v1255, 0.5
  %v1384 = vmul.f32 %v1256, 0.5
  %v1385 = vmul.f32 %v1257, 0.5
  %v1386 = vmul.f32 %v1258, 0.5
  %v1387 = vmul.f32 %v1259, 0.5
  %v1388 = vmul.f32 %v1260, 0.5
  %v1389 = vmul.f32 %v1261, 0.5
  %v1390 = vmul.f32 %v1262, 0.5
  %v1391 = vmul.f32 %v1263, 0.5
  %v1392 = vmul.f32 %v1264, 0.5
  %v1393 = vmul.f32 %v1265, 0.5
  %v1394 = vmul.f32 %v1266, 0.5
  %v1395 = vmul.f32 %v1267, 0.5
  %v1396 = vmul.f32 %v1268, 0.5
  %v1397 = vmul.f32 %v1269, 0.5
  %v1398 = vmul.f32 %v1270, 0.5
  %v1399 = vmul.f32 %v1271, 0.5
  %v1400 = vmul.f32 %v1272, 0.5
  %v1401 = vmul.f32 %v1273, 0.5
  %v1402 = vmul.f32 %v1274, 0.5
  %v1403 = vmul.f32 %v1275, 0.5
  %v1404 = vmul.f32 %v1276, 0.5
  %v1405 = vmul.f32 %v1277, 0.5
  %v1406 = vmul.f32 %v1278, 0.5
  %v1407 = vmul.f32 %v1279, 0.5
  %v1408 = vmul.f32 %v1280, 0.5
  %v1409 = vmul.f32 %v1281, 0.5
  %v1410 = vmul.f32 %v1282, 0.5
  %v1411 = vmul.f32 %v1283, 0.5
  %v1412 = vmul.f32 %v1284, 0.5
  %v1413 = vmul.f32 %v1285, 0.5
  %v1414 = vmul.f32 %v1286, 0.5
  %v1415 = vmul.f32 %v1287, 0.5
  %v1416 = vmul.f32 %v1288, 0.5
  %v1417 = vmul.f32 %v1289, 0.5
  %v1418 = vmul.f32 %v1290, 0.5
  %v1419 = vmul.f32 %v1291, 0.5
  %v1420 = vmul.f32 %v1292, 0.5
  %v1421 = vmul.f32 %v1293, 0.5
  %v1422 = vmul.f32 %v1294, 0.5
  %v1423 = vmul.f32 %v1295, 0.5
  %v1424 = vmul.f32 %v1296, 0.5
  %v1425 = vmul.f32 %v1297, 0.5
  %v1426 = vmul.f32 %v1298, 0.5
  %v1427 = vmul.f32 %v1299, 0.5
  %v1428 = vmul.f32 %v1300, 0.5
  %v1429 = vmul.f32 %v1301, 0.5
  %v1430 = vmul.f32 %v1302, 0.5
  %v1431 = vmul.f32 %v1303, 0.5
  %v1432 = vmul.f32 %v1304, 0.5
  %v1433 = vmul.f32 %v1305, 0.5
  %v1434 = vmul.f32 %v1306, 0.5
  %v1435 = vmul.f32 %v1307, 0.5
  %v1436 = vmul.f32 %v1308, 0.5
  %v1437 = vmul.f32 %v1309, 0.5
  %v1438 = vmul.f32 %v1310, 0.5
  %v1439 = vmul.f32 %v1311, 0.5
  %v1440 = vmul.f32 %v1312, 0.5
  %v1441 = vmul.f32 %v1313, 0.5
  %v1442 = vmul.f32 %v1314, 0.5
  %v1443 = vmul.f32 %v1315, 0.5
  %v1444 = vmul.f32 %v1316, 0.5
  %v1445 = vmul.f32 %v1317, 0.5
  %v1446 = vmul.f32 %v1318, 0.5
  %v1447 = vmul.f32 %v1319, 0.5
  %v1448 = vmul.f32 %v1320, 0.5
  %v1449 = vmul.f32 %v1321, 0.5
  %v1450 = vmul.f32 %v1322, 0.5
  %v1451 = vmul.f32 %v1323, 0.5
  %v1452 = vmul.f32 %v1324, 0.5
  %v1453 = vmul.f32 %v1325, 0.5
  %v1454 = vmul.f32 %v1326, 0.5
  %v1455 = vmul.f32 %v1327, 0.5
  %v1456 = vmul.f32 %v1328, 0.5
  %v1457 = vmul.f32 %v1329, 0.5
  %v1458 = vmul.f32 %v1330, 0.5
  %v1459 = vmul.f32 %v1331, 0.5
  %v1460 = vmul.f32 %v1332, 0.5
  %v1461 = vmul.f32 %v1333, 0.5
  %v1462 = vmul.f32 %v1334, 0.5
  %v1463 = vmul.f32 %v1335, 0.5
  %v1464 = vmul.f32 %v1336, 0.5
  %v1465 = vmul.f32 %v1337, 0.5
  %v1466 = vmul.f32 %v1338, 0.5
  %v1467 = vmul.f32 %v1339, 0.5
  %v1468 = vmul.f32 %v1340, 0.5
  %v1469 = vmul.f32 %v1341, 0.5
  %v1470 = vmul.f32 %v1342, 0.5
  %v1471 = vmul.f32 %v1343, 0.5
  %v1472 = vmul.f32 %v1344, 0.5
  %v1473 = vmul.f32 %v1345, 0.5
  %v1474 = vmul.f32 %v1346, 0.5
  %v1475 = vmul.f32 %v1347, 0.5
  %v1476 = vmul.f32 %v1348, 0.5
  %v1477 = vmul.f32 %v1349, 0.5
  %v1478 = vmul.f32 %v1350, 0.5
  %v1479 = vmul.f32 %v1351, 0.5
  %v1480 = vmul.f32 %v1352, 0.5
  %v1481 = vmul.f32 %v1353, 0.5
  %v1482 = vmul.f32 %v1354, 0.5
  %v1483 = vmul.f32 %v1355, 0.5
  %v1484 = vmul.f32 %v1356, 0.5
  %v1485 = vmul.f32 %v1357, 0.5
  %v1486 = vmul.f32 %v1358, 0.5
  %v1487 = vmul.f32 %v1359, 0.5
  %v1488 = vmul.f32 %v1360, 0.5
  %v1489 = vmul.f32 %v1361, 0.5
  %v1490 = vmul.f32 %v1362, 0.5
  %v1491 = vmul.f32 %v1363, 0.5
  %v1492 = vmul.f32 %v1364, 0.5
  %v1493 = vmul.f32 %v1365, 0.5
  %v1494 = vmul.f32 %v1366, 0.5
  %v1495 = vmul.f32 %v1367, 0.5
  %v1496 = vmul.f32 %v1368, 0.5
  %v1497 = vmul.f32 %v1369, 0.5
  %v1498 = vmul.f32 %v1370, 0.5
  %v1499 = vmul.f32 %v1371, 0.5
  %v1500 = vmul.f32 %v1372, 0.5
  %v1501 = vmul.f32 %v1373, 0.5
  %v1502 = vmul.f32 %v1374, 0.5
  %v1503 = vmul.f32 %v1375, 0.5
  %v1504 = vmul.f32 %v1376, 0.5
  %v1505 = vmul.f32 %v1377, 0.5
  %v1506 = vmul.f32 %v1378, 0.5
  %v1507 = vmul.f32 %v1379, 0.5
  %v1508 = vmul.f32 %v1380, 0.5
  %v1509 = vmul.f32 %v1381, 0.5
  %v1510 = vmul.f32 %v1382, 0.5
  %v1511 = vmul.f32 %v1383, %v1383
  %v1512 = vmul.f32 %v1384, %v1384
  %v1513 = vmul.f32 %v1385, %v1385
  %v1514 = vmul.f32 %v1386, %v1386
  %v1515 = vmul.f32 %v1387, %v1387
  %v1516 = vmul.f32 %v1388, %v1388
  %v1517 = vmul.f32 %v1389, %v1389
  %v1518 = vmul.f32 %v1390, %v1390
  %v1519 = vmul.f32 %v1391, %v1391
  %v1520 = vmul.f32 %v1392, %v1392
  %v1521 = vmul.f32 %v1393, %v1393
  %v1522 = vmul.f32 %v1394, %v1394
  %v1523 = vmul.f32 %v1395, %v1395
  %v1524 = vmul.f32 %v1396, %v1396
  %v1525 = vmul.f32 %v1397, %v1397
  %v1526 = vmul.f32 %v1398, %v1398
  %v1527 = vmul.f32 %v1399, %v1399
  %v1528 = vmul.f32 %v1400, %v1400
  %v1529 = vmul.f32 %v1401, %v1401
  %v1530 = vmul.f32 %v1402, %v1402
  %v1531 = vmul.f32 %v1403, %v1403
  %v1532 = vmul.f32 %v1404, %v1404
  %v1533 = vmul.f32 %v1405, %v1405
  %v1534 = vmul.f32 %v1406, %v1406
  %v1535 = vmul.f32 %v1407, %v1407
  %v1536 = vmul.f32 %v1408, %v1408
  %v1537 = vmul.f32 %v1409, %v1409
  %v1538 = vmul.f32 %v1410, %v1410
  %v1539 = vmul.f32 %v1411, %v1411
  %v1540 = vmul.f32 %v1412, %v1412
  %v1541 = vmul.f32 %v1413, %v1413
  %v1542 = vmul.f32 %v1414, %v1414
  %v1543 = vmul.f32 %v1415, %v1415
  %v1544 = vmul.f32 %v1416, %v1416
  %v1545 = vmul.f32 %v1417, %v1417
  %v1546 = vmul.f32 %v1418, %v1418
  %v1547 = vmul.f32 %v1419, %v1419
  %v1548 = vmul.f32 %v1420, %v1420
  %v1549 = vmul.f32 %v1421, %v1421
  %v1550 = vmul.f32 %v1422, %v1422
  %v1551 = vmul.f32 %v1423, %v1423
  %v1552 = vmul.f32 %v1424, %v1424
  %v1553 = vmul.f32 %v1425, %v1425
  %v1554 = vmul.f32 %v1426, %v1426
  %v1555 = vmul.f32 %v1427, %v1427
  %v1556 = vmul.f32 %v1428, %v1428
  %v1557 = vmul.f32 %v1429, %v1429
  %v1558 = vmul.f32 %v1430, %v1430
  %v1559 = vmul.f32 %v1431, %v1431
  %v1560 = vmul.f32 %v1432, %v1432
  %v1561 = vmul.f32 %v1433, %v1433
  %v1562 = vmul.f32 %v1434, %v1434
  %v1563 = vmul.f32 %v1435, %v1435
  %v1564 = vmul.f32 %v1436, %v1436
  %v1565 = vmul.f32 %v1437, %v1437
  %v1566 = vmul.f32 %v1438, %v1438
  %v1567 = vmul.f32 %v1439, %v1439
  %v1568 = vmul.f32 %v1440, %v1440
  %v1569 = vmul.f32 %v1441, %v1441
  %v1570 = vmul.f32 %v1442, %v1442
  %v1571 = vmul.f32 %v1443, %v1443
  %v1572 = vmul.f32 %v1444, %v1444
  %v1573 = vmul.f32 %v1445, %v1445
  %v1574 = vmul.f32 %v1446, %v1446
  %v1575 = vmul.f32 %v1447, %v1447
  %v1576 = vmul.f32 %v1448, %v1448
  %v1577 = vmul.f32 %v1449, %v1449
  %v1578 = vmul.f32 %v1450, %v1450
  %v1579 = vmul.f32 %v1451, %v1451
  %v1580 = vmul.f32 %v1452, %v1452
  %v1581 = vmul.f32 %v1453, %v1453
  %v1582 = vmul.f32 %v1454, %v1454
  %v1583 = vmul.f32 %v1455, %v1455
  %v1584 = vmul.f32 %v1456, %v1456
  %v1585 = vmul.f32 %v1457, %v1457
  %v1586 = vmul.f32 %v1458, %v1458
  %v1587 = vmul.f32 %v1459, %v1459
  %v1588 = vmul.f32 %v1460, %v1460
  %v1589 = vmul.f32 %v1461, %v1461
  %v1590 = vmul.f32 %v1462, %v1462
  %v1591 = vmul.f32 %v1463, %v1463
  %v1592 = vmul.f32 %v1464, %v1464
  %v1593 = vmul.f32 %v1465, %v1465
  %v1594 = vmul.f32 %v1466, %v1466
  %v1595 = vmul.f32 %v1467, %v1467
  %v1596 = vmul.f32 %v1468, %v1468
  %v1597 = vmul.f32 %v1469, %v1469
  %v1598 = vmul.f32 %v1470, %v1470
  %v1599 = vmul.f32 %v1471, %v1471
  %v1600 = vmul.f32 %v1472, %v1472
  %v1601 = vmul.f32 %v1473, %v1473
  %v1602 = vmul.f32 %v1474, %v1474
  %v1603 = vmul.f32 %v1475, %v1475
  %v1604 = vmul.f32 %v1476, %v1476
  %v1605 = vmul.f32 %v1477, %v1477
  %v1606 = vmul.f32 %v1478, %v1478
  %v1607 = vmul.f32 %v1479, %v1479
  %v1608 = vmul.f32 %v1480, %v1480
  %v1609 = vmul.f32 %v1481, %v1481
  %v1610 = vmul.f32 %v1482, %v1482
  %v1611 = vmul.f32 %v1483, %v1483
  %v1612 = vmul.f32 %v1484, %v1484
  %v1613 = vmul.f32 %v1485, %v1485
  %v1614 = vmul.f32 %v1486, %v1486
  %v1615 = vmul.f32 %v1487, %v1487
  %v1616 = vmul.f32 %v1488, %v1488
  %v1617 = vmul.f32 %v1489, %v1489
  %v1618 = vmul.f32 %v1490, %v1490
  %v1619 = vmul.f32 %v1491, %v1491
  %v1620 = vmul.f32 %v1492, %v1492
  %v1621 = vmul.f32 %v1493, %v1493
  %v1622 = vmul.f32 %v1494, %v1494
  %v1623 = vmul.f32 %v1495, %v1495
  %v1624 = vmul.f32 %v1496, %v1496
  %v1625 = vmul.f32 %v1497, %v1497
  %v1626 = vmul.f32 %v1498, %v1498
  %v1627 = vmul.f32 %v1499, %v1499
  %v1628 = vmul.f32 %v1500, %v1500
  %v1629 = vmul.f32 %v1501, %v1501
  %v1630 = vmul.f32 %v1502, %v1502
  %v1631 = vmul.f32 %v1503, %v1503
  %v1632 = vmul.f32 %v1504, %v1504
  %v1633 = vmul.f32 %v1505, %v1505
  %v1634 = vmul.f32 %v1506, %v1506
  %v1635 = vmul.f32 %v1507, %v1507
  %v1636 = vmul.f32 %v1508, %v1508
  %v1637 = vmul.f32 %v1509, %v1509
  %v1638 = vmul.f32 %v1510, %v1510
  %v1639 = vadd.f32 %v1511, 1.0
  %v1640 = vadd.f32 %v1512, 1.0
  %v1641 = vadd.f32 %v1513, 1.0
  %v1642 = vadd.f32 %v1514, 1.0
  %v1643 = vadd.f32 %v1515, 1.0
  %v1644 = vadd.f32 %v1516, 1.0
  %v1645 = vadd.f32 %v1517, 1.0
  %v1646 = vadd.f32 %v1518, 1.0
  %v1647 = vadd.f32 %v1519, 1.0
  %v1648 = vadd.f32 %v1520, 1.0
  %v1649 = vadd.f32 %v1521, 1.0
  %v1650 = vadd.f32 %v1522, 1.0
  %v1651 = vadd.f32 %v1523, 1.0
  %v1652 = vadd.f32 %v1524, 1.0
  %v1653 = vadd.f32 %v1525, 1.0
  %v1654 = vadd.f32 %v1526, 1.0
  %v1655 = vadd.f32 %v1527, 1.0
  %v1656 = vadd.f32 %v1528, 1.0
  %v1657 = vadd.f32 %v1529, 1.0
  %v1658 = vadd.f32 %v1530, 1.0
  %v1659 = vadd.f32 %v1531, 1.0
  %v1660 = vadd.f32 %v1532, 1.0
  %v1661 = vadd.f32 %v1533, 1.0
  %v1662 = vadd.f32 %v1534, 1.0
  %v1663 = vadd.f32 %v1535, 1.0
  %v1664 = vadd.f32 %v1536, 1.0
  %v1665 = vadd.f32 %v1537, 1.0
  %v1666 = vadd.f32 %v1538, 1.0
  %v1667 = vadd.f32 %v1539, 1.0
  %v1668 = vadd.f32 %v1540, 1.0
  %v1669 = vadd.f32 %v1541, 1.0
  %v1670 = vadd.f32 %v1542, 1.0
  %v1671 = vadd.f32 %v1543, 1.0
  %v1672 = vadd.f32 %v1544, 1.0
  %v1673 = vadd.f32 %v1545, 1.0
  %v1674 = vadd.f32 %v1546, 1.0
  %v1675 = vadd.f32 %v1547, 1.0
  %v1676 = vadd.f32 %v1548, 1.0
  %v1677 = vadd.f32 %v1549, 1.0
  %v1678 = vadd.f32 %v1550, 1.0
  %v1679 = vadd.f32 %v1551, 1.0
  %v1680 = vadd.f32 %v1552, 1.0
  %v1681 = vadd.f32 %v1553, 1.0
  %v1682 = vadd.f32 %v1554, 1.0
  %v1683 = vadd.f32 %v1555, 1.0
  %v1684 = vadd.f32 %v1556, 1.0
  %v1685 = vadd.f32 %v1557, 1.0
  %v1686 = vadd.f32 %v1558, 1.0
  %v1687 = vadd.f32 %v1559, 1.0
  %v1688 = vadd.f32 %v1560, 1.0
  %v1689 = vadd.f32 %v1561, 1.0
  %v1690 = vadd.f32 %v1562, 1.0
  %v1691 = vadd.f32 %v1563, 1.0
  %v1692 = vadd.f32 %v1564, 1.0
  %v1693 = vadd.f32 %v1565, 1.0
  %v1694 = vadd.f32 %v1566, 1.0
  %v1695 = vadd.f32 %v1567, 1.0
  %v1696 = vadd.f32 %v1568, 1.0
  %v1697 = vadd.f32 %v1569, 1.0
  %v1698 = vadd.f32 %v1570, 1.0
  %v1699 = vadd.f32 %v1571, 1.0
  %v1700 = vadd.f32 %v1572, 1.0
  %v1701 = vadd.f32 %v1573, 1.0
  %v1702 = vadd.f32 %v1574, 1.0
  %v1703 = vadd.f32 %v1575, 1.0
  %v1704 = vadd.f32 %v1576, 1.0
  %v1705 = vadd.f32 %v1577, 1.0
  %v1706 = vadd.f32 %v1578, 1.0
  %v1707 = vadd.f32 %v1579, 1.0
  %v1708 = vadd.f32 %v1580, 1.0
  %v1709 = vadd.f32 %v1581, 1.0
  %v1710 = vadd.f32 %v1582, 1.0
  %v1711 = vadd.f32 %v1583, 1.0
  %v1712 = vadd.f32 %v1584, 1.0
  %v1713 = vadd.f32 %v1585, 1.0
  %v1714 = vadd.f32 %v1586, 1.0
  %v1715 = vadd.f32 %v1587, 1.0
  %v1716 = vadd.f32 %v1588, 1.0
  %v1717 = vadd.f32 %v1589, 1.0
  %v1718 = vadd.f32 %v1590, 1.0
  %v1719 = vadd.f32 %v1591, 1.0
  %v1720 = vadd.f32 %v1592, 1.0
  %v1721 = vadd.f32 %v1593, 1.0
  %v1722 = vadd.f32 %v1594, 1.0
  %v1723 = vadd.f32 %v1595, 1.0
  %v1724 = vadd.f32 %v1596, 1.0
  %v1725 = vadd.f32 %v1597, 1.0
  %v1726 = vadd.f32 %v1598, 1.0
  %v1727 = vadd.f32 %v1599, 1.0
  %v1728 = vadd.f32 %v1600, 1.0
  %v1729 = vadd.f32 %v1601, 1.0
  %v1730 = vadd.f32 %v1602, 1.0
  %v1731 = vadd.f32 %v1603, 1.0
  %v1732 = vadd.f32 %v1604, 1.0
  %v1733 = vadd.f32 %v1605, 1.0
  %v1734 = vadd.f32 %v1606, 1.0
  %v1735 = vadd.f32 %v1607, 1.0
  %v1736 = vadd.f32 %v1608, 1.0
  %v1737 = vadd.f32 %v1609, 1.0
  %v1738 = vadd.f32 %v1610, 1.0
  %v1739 = vadd.f32 %v1611, 1.0
  %v1740 = vadd.f32 %v1612, 1.0
  %v1741 = vadd.f32 %v1613, 1.0
  %v1742 = vadd.f32 %v1614, 1.0
  %v1743 = vadd.f32 %v1615, 1.0
  %v1744 = vadd.f32 %v1616, 1.0
  %v1745 = vadd.f32 %v1617, 1.0
  %v1746 = vadd.f32 %v1618, 1.0
  %v1747 = vadd.f32 %v1619, 1.0
  %v1748 = vadd.f32 %v1620, 1.0
  %v1749 = vadd.f32 %v1621, 1.0
  %v1750 = vadd.f32 %v1622, 1.0
  %v1751 = vadd.f32 %v1623, 1.0
  %v1752 = vadd.f32 %v1624, 1.0
  %v1753 = vadd.f32 %v1625, 1.0
  %v1754 = vadd.f32 %v1626, 1.0
  %v1755 = vadd.f32 %v1627, 1.0
  %v1756 = vadd.f32 %v1628, 1.0
  %v1757 = vadd.f32 %v1629, 1.0
  %v1758 = vadd.f32 %v1630, 1.0
  %v1759 = vadd.f32 %v1631, 1.0
  %v1760 = vadd.f32 %v1632, 1.0
  %v1761 = vadd.f32 %v1633, 1.0
  %v1762 = vadd.f32 %v1634, 1.0
  %v1763 = vadd.f32 %v1635, 1.0
  %v1764 = vadd.f32 %v1636, 1.0
  %v1765 = vadd.f32 %v1637, 1.0
  %v1766 = vadd.f32 %v1638, 1.0
  %v1767 = vrsqrt.pop %v1639
  %v1768 = vmul.f32 %v1639, %v1767
  %vm1769 = vcmp.eq.f32.partialorder %v1639, inf
  %v1770 = vsel %vm1769, %v1639, %v1768
  %vm1771 = vcmp.eq.f32.partialorder %v1639, 0.0
  %v1772 = vand.u32 %v1639, 2147483648
  %v1773 = vsel %vm1771, %v1772, %v1770
  %v1774 = vrsqrt.pop %v1640
  %v1775 = vmul.f32 %v1640, %v1774
  %vm1776 = vcmp.eq.f32.partialorder %v1640, inf
  %v1777 = vsel %vm1776, %v1640, %v1775
  %vm1778 = vcmp.eq.f32.partialorder %v1640, 0.0
  %v1779 = vand.u32 %v1640, 2147483648
  %v1780 = vsel %vm1778, %v1779, %v1777
  %v1781 = vrsqrt.pop %v1641
  %v1782 = vmul.f32 %v1641, %v1781
  %vm1783 = vcmp.eq.f32.partialorder %v1641, inf
  %v1784 = vsel %vm1783, %v1641, %v1782
  %vm1785 = vcmp.eq.f32.partialorder %v1641, 0.0
  %v1786 = vand.u32 %v1641, 2147483648
  %v1787 = vsel %vm1785, %v1786, %v1784
  %v1788 = vrsqrt.pop %v1642
  %v1789 = vmul.f32 %v1642, %v1788
  %vm1790 = vcmp.eq.f32.partialorder %v1642, inf
  %v1791 = vsel %vm1790, %v1642, %v1789
  %vm1792 = vcmp.eq.f32.partialorder %v1642, 0.0
  %v1793 = vand.u32 %v1642, 2147483648
  %v1794 = vsel %vm1792, %v1793, %v1791
  %v1795 = vrsqrt.pop %v1643
  %v1796 = vmul.f32 %v1643, %v1795
  %vm1797 = vcmp.eq.f32.partialorder %v1643, inf
  %v1798 = vsel %vm1797, %v1643, %v1796
  %vm1799 = vcmp.eq.f32.partialorder %v1643, 0.0
  %v1800 = vand.u32 %v1643, 2147483648
  %v1801 = vsel %vm1799, %v1800, %v1798
  %v1802 = vrsqrt.pop %v1644
  %v1803 = vmul.f32 %v1644, %v1802
  %vm1804 = vcmp.eq.f32.partialorder %v1644, inf
  %v1805 = vsel %vm1804, %v1644, %v1803
  %vm1806 = vcmp.eq.f32.partialorder %v1644, 0.0
  %v1807 = vand.u32 %v1644, 2147483648
  %v1808 = vsel %vm1806, %v1807, %v1805
  %v1809 = vrsqrt.pop %v1645
  %v1810 = vmul.f32 %v1645, %v1809
  %vm1811 = vcmp.eq.f32.partialorder %v1645, inf
  %v1812 = vsel %vm1811, %v1645, %v1810
  %vm1813 = vcmp.eq.f32.partialorder %v1645, 0.0
  %v1814 = vand.u32 %v1645, 2147483648
  %v1815 = vsel %vm1813, %v1814, %v1812
  %v1816 = vrsqrt.pop %v1646
  %v1817 = vmul.f32 %v1646, %v1816
  %vm1818 = vcmp.eq.f32.partialorder %v1646, inf
  %v1819 = vsel %vm1818, %v1646, %v1817
  %vm1820 = vcmp.eq.f32.partialorder %v1646, 0.0
  %v1821 = vand.u32 %v1646, 2147483648
  %v1822 = vsel %vm1820, %v1821, %v1819
  %v1823 = vrsqrt.pop %v1647
  %v1824 = vmul.f32 %v1647, %v1823
  %vm1825 = vcmp.eq.f32.partialorder %v1647, inf
  %v1826 = vsel %vm1825, %v1647, %v1824
  %vm1827 = vcmp.eq.f32.partialorder %v1647, 0.0
  %v1828 = vand.u32 %v1647, 2147483648
  %v1829 = vsel %vm1827, %v1828, %v1826
  %v1830 = vrsqrt.pop %v1648
  %v1831 = vmul.f32 %v1648, %v1830
  %vm1832 = vcmp.eq.f32.partialorder %v1648, inf
  %v1833 = vsel %vm1832, %v1648, %v1831
  %vm1834 = vcmp.eq.f32.partialorder %v1648, 0.0
  %v1835 = vand.u32 %v1648, 2147483648
  %v1836 = vsel %vm1834, %v1835, %v1833
  %v1837 = vrsqrt.pop %v1649
  %v1838 = vmul.f32 %v1649, %v1837
  %vm1839 = vcmp.eq.f32.partialorder %v1649, inf
  %v1840 = vsel %vm1839, %v1649, %v1838
  %vm1841 = vcmp.eq.f32.partialorder %v1649, 0.0
  %v1842 = vand.u32 %v1649, 2147483648
  %v1843 = vsel %vm1841, %v1842, %v1840
  %v1844 = vrsqrt.pop %v1650
  %v1845 = vmul.f32 %v1650, %v1844
  %vm1846 = vcmp.eq.f32.partialorder %v1650, inf
  %v1847 = vsel %vm1846, %v1650, %v1845
  %vm1848 = vcmp.eq.f32.partialorder %v1650, 0.0
  %v1849 = vand.u32 %v1650, 2147483648
  %v1850 = vsel %vm1848, %v1849, %v1847
  %v1851 = vrsqrt.pop %v1651
  %v1852 = vmul.f32 %v1651, %v1851
  %vm1853 = vcmp.eq.f32.partialorder %v1651, inf
  %v1854 = vsel %vm1853, %v1651, %v1852
  %vm1855 = vcmp.eq.f32.partialorder %v1651, 0.0
  %v1856 = vand.u32 %v1651, 2147483648
  %v1857 = vsel %vm1855, %v1856, %v1854
  %v1858 = vrsqrt.pop %v1652
  %v1859 = vmul.f32 %v1652, %v1858
  %vm1860 = vcmp.eq.f32.partialorder %v1652, inf
  %v1861 = vsel %vm1860, %v1652, %v1859
  %vm1862 = vcmp.eq.f32.partialorder %v1652, 0.0
  %v1863 = vand.u32 %v1652, 2147483648
  %v1864 = vsel %vm1862, %v1863, %v1861
  %v1865 = vrsqrt.pop %v1653
  %v1866 = vmul.f32 %v1653, %v1865
  %vm1867 = vcmp.eq.f32.partialorder %v1653, inf
  %v1868 = vsel %vm1867, %v1653, %v1866
  %vm1869 = vcmp.eq.f32.partialorder %v1653, 0.0
  %v1870 = vand.u32 %v1653, 2147483648
  %v1871 = vsel %vm1869, %v1870, %v1868
  %v1872 = vrsqrt.pop %v1654
  %v1873 = vmul.f32 %v1654, %v1872
  %vm1874 = vcmp.eq.f32.partialorder %v1654, inf
  %v1875 = vsel %vm1874, %v1654, %v1873
  %vm1876 = vcmp.eq.f32.partialorder %v1654, 0.0
  %v1877 = vand.u32 %v1654, 2147483648
  %v1878 = vsel %vm1876, %v1877, %v1875
  %v1879 = vrsqrt.pop %v1655
  %v1880 = vmul.f32 %v1655, %v1879
  %vm1881 = vcmp.eq.f32.partialorder %v1655, inf
  %v1882 = vsel %vm1881, %v1655, %v1880
  %vm1883 = vcmp.eq.f32.partialorder %v1655, 0.0
  %v1884 = vand.u32 %v1655, 2147483648
  %v1885 = vsel %vm1883, %v1884, %v1882
  %v1886 = vrsqrt.pop %v1656
  %v1887 = vmul.f32 %v1656, %v1886
  %vm1888 = vcmp.eq.f32.partialorder %v1656, inf
  %v1889 = vsel %vm1888, %v1656, %v1887
  %vm1890 = vcmp.eq.f32.partialorder %v1656, 0.0
  %v1891 = vand.u32 %v1656, 2147483648
  %v1892 = vsel %vm1890, %v1891, %v1889
  %v1893 = vrsqrt.pop %v1657
  %v1894 = vmul.f32 %v1657, %v1893
  %vm1895 = vcmp.eq.f32.partialorder %v1657, inf
  %v1896 = vsel %vm1895, %v1657, %v1894
  %vm1897 = vcmp.eq.f32.partialorder %v1657, 0.0
  %v1898 = vand.u32 %v1657, 2147483648
  %v1899 = vsel %vm1897, %v1898, %v1896
  %v1900 = vrsqrt.pop %v1658
  %v1901 = vmul.f32 %v1658, %v1900
  %vm1902 = vcmp.eq.f32.partialorder %v1658, inf
  %v1903 = vsel %vm1902, %v1658, %v1901
  %vm1904 = vcmp.eq.f32.partialorder %v1658, 0.0
  %v1905 = vand.u32 %v1658, 2147483648
  %v1906 = vsel %vm1904, %v1905, %v1903
  %v1907 = vrsqrt.pop %v1659
  %v1908 = vmul.f32 %v1659, %v1907
  %vm1909 = vcmp.eq.f32.partialorder %v1659, inf
  %v1910 = vsel %vm1909, %v1659, %v1908
  %vm1911 = vcmp.eq.f32.partialorder %v1659, 0.0
  %v1912 = vand.u32 %v1659, 2147483648
  %v1913 = vsel %vm1911, %v1912, %v1910
  %v1914 = vrsqrt.pop %v1660
  %v1915 = vmul.f32 %v1660, %v1914
  %vm1916 = vcmp.eq.f32.partialorder %v1660, inf
  %v1917 = vsel %vm1916, %v1660, %v1915
  %vm1918 = vcmp.eq.f32.partialorder %v1660, 0.0
  %v1919 = vand.u32 %v1660, 2147483648
  %v1920 = vsel %vm1918, %v1919, %v1917
  %v1921 = vrsqrt.pop %v1661
  %v1922 = vmul.f32 %v1661, %v1921
  %vm1923 = vcmp.eq.f32.partialorder %v1661, inf
  %v1924 = vsel %vm1923, %v1661, %v1922
  %vm1925 = vcmp.eq.f32.partialorder %v1661, 0.0
  %v1926 = vand.u32 %v1661, 2147483648
  %v1927 = vsel %vm1925, %v1926, %v1924
  %v1928 = vrsqrt.pop %v1662
  %v1929 = vmul.f32 %v1662, %v1928
  %vm1930 = vcmp.eq.f32.partialorder %v1662, inf
  %v1931 = vsel %vm1930, %v1662, %v1929
  %vm1932 = vcmp.eq.f32.partialorder %v1662, 0.0
  %v1933 = vand.u32 %v1662, 2147483648
  %v1934 = vsel %vm1932, %v1933, %v1931
  %v1935 = vrsqrt.pop %v1663
  %v1936 = vmul.f32 %v1663, %v1935
  %vm1937 = vcmp.eq.f32.partialorder %v1663, inf
  %v1938 = vsel %vm1937, %v1663, %v1936
  %vm1939 = vcmp.eq.f32.partialorder %v1663, 0.0
  %v1940 = vand.u32 %v1663, 2147483648
  %v1941 = vsel %vm1939, %v1940, %v1938
  %v1942 = vrsqrt.pop %v1664
  %v1943 = vmul.f32 %v1664, %v1942
  %vm1944 = vcmp.eq.f32.partialorder %v1664, inf
  %v1945 = vsel %vm1944, %v1664, %v1943
  %vm1946 = vcmp.eq.f32.partialorder %v1664, 0.0
  %v1947 = vand.u32 %v1664, 2147483648
  %v1948 = vsel %vm1946, %v1947, %v1945
  %v1949 = vrsqrt.pop %v1665
  %v1950 = vmul.f32 %v1665, %v1949
  %vm1951 = vcmp.eq.f32.partialorder %v1665, inf
  %v1952 = vsel %vm1951, %v1665, %v1950
  %vm1953 = vcmp.eq.f32.partialorder %v1665, 0.0
  %v1954 = vand.u32 %v1665, 2147483648
  %v1955 = vsel %vm1953, %v1954, %v1952
  %v1956 = vrsqrt.pop %v1666
  %v1957 = vmul.f32 %v1666, %v1956
  %vm1958 = vcmp.eq.f32.partialorder %v1666, inf
  %v1959 = vsel %vm1958, %v1666, %v1957
  %vm1960 = vcmp.eq.f32.partialorder %v1666, 0.0
  %v1961 = vand.u32 %v1666, 2147483648
  %v1962 = vsel %vm1960, %v1961, %v1959
  %v1963 = vrsqrt.pop %v1667
  %v1964 = vmul.f32 %v1667, %v1963
  %vm1965 = vcmp.eq.f32.partialorder %v1667, inf
  %v1966 = vsel %vm1965, %v1667, %v1964
  %vm1967 = vcmp.eq.f32.partialorder %v1667, 0.0
  %v1968 = vand.u32 %v1667, 2147483648
  %v1969 = vsel %vm1967, %v1968, %v1966
  %v1970 = vrsqrt.pop %v1668
  %v1971 = vmul.f32 %v1668, %v1970
  %vm1972 = vcmp.eq.f32.partialorder %v1668, inf
  %v1973 = vsel %vm1972, %v1668, %v1971
  %vm1974 = vcmp.eq.f32.partialorder %v1668, 0.0
  %v1975 = vand.u32 %v1668, 2147483648
  %v1976 = vsel %vm1974, %v1975, %v1973
  %v1977 = vrsqrt.pop %v1669
  %v1978 = vmul.f32 %v1669, %v1977
  %vm1979 = vcmp.eq.f32.partialorder %v1669, inf
  %v1980 = vsel %vm1979, %v1669, %v1978
  %vm1981 = vcmp.eq.f32.partialorder %v1669, 0.0
  %v1982 = vand.u32 %v1669, 2147483648
  %v1983 = vsel %vm1981, %v1982, %v1980
  %v1984 = vrsqrt.pop %v1670
  %v1985 = vmul.f32 %v1670, %v1984
  %vm1986 = vcmp.eq.f32.partialorder %v1670, inf
  %v1987 = vsel %vm1986, %v1670, %v1985
  %vm1988 = vcmp.eq.f32.partialorder %v1670, 0.0
  %v1989 = vand.u32 %v1670, 2147483648
  %v1990 = vsel %vm1988, %v1989, %v1987
  %v1991 = vrsqrt.pop %v1671
  %v1992 = vmul.f32 %v1671, %v1991
  %vm1993 = vcmp.eq.f32.partialorder %v1671, inf
  %v1994 = vsel %vm1993, %v1671, %v1992
  %vm1995 = vcmp.eq.f32.partialorder %v1671, 0.0
  %v1996 = vand.u32 %v1671, 2147483648
  %v1997 = vsel %vm1995, %v1996, %v1994
  %v1998 = vrsqrt.pop %v1672
  %v1999 = vmul.f32 %v1672, %v1998
  %vm2000 = vcmp.eq.f32.partialorder %v1672, inf
  %v2001 = vsel %vm2000, %v1672, %v1999
  %vm2002 = vcmp.eq.f32.partialorder %v1672, 0.0
  %v2003 = vand.u32 %v1672, 2147483648
  %v2004 = vsel %vm2002, %v2003, %v2001
  %v2005 = vrsqrt.pop %v1673
  %v2006 = vmul.f32 %v1673, %v2005
  %vm2007 = vcmp.eq.f32.partialorder %v1673, inf
  %v2008 = vsel %vm2007, %v1673, %v2006
  %vm2009 = vcmp.eq.f32.partialorder %v1673, 0.0
  %v2010 = vand.u32 %v1673, 2147483648
  %v2011 = vsel %vm2009, %v2010, %v2008
  %v2012 = vrsqrt.pop %v1674
  %v2013 = vmul.f32 %v1674, %v2012
  %vm2014 = vcmp.eq.f32.partialorder %v1674, inf
  %v2015 = vsel %vm2014, %v1674, %v2013
  %vm2016 = vcmp.eq.f32.partialorder %v1674, 0.0
  %v2017 = vand.u32 %v1674, 2147483648
  %v2018 = vsel %vm2016, %v2017, %v2015
  %v2019 = vrsqrt.pop %v1675
  %v2020 = vmul.f32 %v1675, %v2019
  %vm2021 = vcmp.eq.f32.partialorder %v1675, inf
  %v2022 = vsel %vm2021, %v1675, %v2020
  %vm2023 = vcmp.eq.f32.partialorder %v1675, 0.0
  %v2024 = vand.u32 %v1675, 2147483648
  %v2025 = vsel %vm2023, %v2024, %v2022
  %v2026 = vrsqrt.pop %v1676
  %v2027 = vmul.f32 %v1676, %v2026
  %vm2028 = vcmp.eq.f32.partialorder %v1676, inf
  %v2029 = vsel %vm2028, %v1676, %v2027
  %vm2030 = vcmp.eq.f32.partialorder %v1676, 0.0
  %v2031 = vand.u32 %v1676, 2147483648
  %v2032 = vsel %vm2030, %v2031, %v2029
  %v2033 = vrsqrt.pop %v1677
  %v2034 = vmul.f32 %v1677, %v2033
  %vm2035 = vcmp.eq.f32.partialorder %v1677, inf
  %v2036 = vsel %vm2035, %v1677, %v2034
  %vm2037 = vcmp.eq.f32.partialorder %v1677, 0.0
  %v2038 = vand.u32 %v1677, 2147483648
  %v2039 = vsel %vm2037, %v2038, %v2036
  %v2040 = vrsqrt.pop %v1678
  %v2041 = vmul.f32 %v1678, %v2040
  %vm2042 = vcmp.eq.f32.partialorder %v1678, inf
  %v2043 = vsel %vm2042, %v1678, %v2041
  %vm2044 = vcmp.eq.f32.partialorder %v1678, 0.0
  %v2045 = vand.u32 %v1678, 2147483648
  %v2046 = vsel %vm2044, %v2045, %v2043
  %v2047 = vrsqrt.pop %v1679
  %v2048 = vmul.f32 %v1679, %v2047
  %vm2049 = vcmp.eq.f32.partialorder %v1679, inf
  %v2050 = vsel %vm2049, %v1679, %v2048
  %vm2051 = vcmp.eq.f32.partialorder %v1679, 0.0
  %v2052 = vand.u32 %v1679, 2147483648
  %v2053 = vsel %vm2051, %v2052, %v2050
  %v2054 = vrsqrt.pop %v1680
  %v2055 = vmul.f32 %v1680, %v2054
  %vm2056 = vcmp.eq.f32.partialorder %v1680, inf
  %v2057 = vsel %vm2056, %v1680, %v2055
  %vm2058 = vcmp.eq.f32.partialorder %v1680, 0.0
  %v2059 = vand.u32 %v1680, 2147483648
  %v2060 = vsel %vm2058, %v2059, %v2057
  %v2061 = vrsqrt.pop %v1681
  %v2062 = vmul.f32 %v1681, %v2061
  %vm2063 = vcmp.eq.f32.partialorder %v1681, inf
  %v2064 = vsel %vm2063, %v1681, %v2062
  %vm2065 = vcmp.eq.f32.partialorder %v1681, 0.0
  %v2066 = vand.u32 %v1681, 2147483648
  %v2067 = vsel %vm2065, %v2066, %v2064
  %v2068 = vrsqrt.pop %v1682
  %v2069 = vmul.f32 %v1682, %v2068
  %vm2070 = vcmp.eq.f32.partialorder %v1682, inf
  %v2071 = vsel %vm2070, %v1682, %v2069
  %vm2072 = vcmp.eq.f32.partialorder %v1682, 0.0
  %v2073 = vand.u32 %v1682, 2147483648
  %v2074 = vsel %vm2072, %v2073, %v2071
  %v2075 = vrsqrt.pop %v1683
  %v2076 = vmul.f32 %v1683, %v2075
  %vm2077 = vcmp.eq.f32.partialorder %v1683, inf
  %v2078 = vsel %vm2077, %v1683, %v2076
  %vm2079 = vcmp.eq.f32.partialorder %v1683, 0.0
  %v2080 = vand.u32 %v1683, 2147483648
  %v2081 = vsel %vm2079, %v2080, %v2078
  %v2082 = vrsqrt.pop %v1684
  %v2083 = vmul.f32 %v1684, %v2082
  %vm2084 = vcmp.eq.f32.partialorder %v1684, inf
  %v2085 = vsel %vm2084, %v1684, %v2083
  %vm2086 = vcmp.eq.f32.partialorder %v1684, 0.0
  %v2087 = vand.u32 %v1684, 2147483648
  %v2088 = vsel %vm2086, %v2087, %v2085
  %v2089 = vrsqrt.pop %v1685
  %v2090 = vmul.f32 %v1685, %v2089
  %vm2091 = vcmp.eq.f32.partialorder %v1685, inf
  %v2092 = vsel %vm2091, %v1685, %v2090
  %vm2093 = vcmp.eq.f32.partialorder %v1685, 0.0
  %v2094 = vand.u32 %v1685, 2147483648
  %v2095 = vsel %vm2093, %v2094, %v2092
  %v2096 = vrsqrt.pop %v1686
  %v2097 = vmul.f32 %v1686, %v2096
  %vm2098 = vcmp.eq.f32.partialorder %v1686, inf
  %v2099 = vsel %vm2098, %v1686, %v2097
  %vm2100 = vcmp.eq.f32.partialorder %v1686, 0.0
  %v2101 = vand.u32 %v1686, 2147483648
  %v2102 = vsel %vm2100, %v2101, %v2099
  %v2103 = vrsqrt.pop %v1687
  %v2104 = vmul.f32 %v1687, %v2103
  %vm2105 = vcmp.eq.f32.partialorder %v1687, inf
  %v2106 = vsel %vm2105, %v1687, %v2104
  %vm2107 = vcmp.eq.f32.partialorder %v1687, 0.0
  %v2108 = vand.u32 %v1687, 2147483648
  %v2109 = vsel %vm2107, %v2108, %v2106
  %v2110 = vrsqrt.pop %v1688
  %v2111 = vmul.f32 %v1688, %v2110
  %vm2112 = vcmp.eq.f32.partialorder %v1688, inf
  %v2113 = vsel %vm2112, %v1688, %v2111
  %vm2114 = vcmp.eq.f32.partialorder %v1688, 0.0
  %v2115 = vand.u32 %v1688, 2147483648
  %v2116 = vsel %vm2114, %v2115, %v2113
  %v2117 = vrsqrt.pop %v1689
  %v2118 = vmul.f32 %v1689, %v2117
  %vm2119 = vcmp.eq.f32.partialorder %v1689, inf
  %v2120 = vsel %vm2119, %v1689, %v2118
  %vm2121 = vcmp.eq.f32.partialorder %v1689, 0.0
  %v2122 = vand.u32 %v1689, 2147483648
  %v2123 = vsel %vm2121, %v2122, %v2120
  %v2124 = vrsqrt.pop %v1690
  %v2125 = vmul.f32 %v1690, %v2124
  %vm2126 = vcmp.eq.f32.partialorder %v1690, inf
  %v2127 = vsel %vm2126, %v1690, %v2125
  %vm2128 = vcmp.eq.f32.partialorder %v1690, 0.0
  %v2129 = vand.u32 %v1690, 2147483648
  %v2130 = vsel %vm2128, %v2129, %v2127
  %v2131 = vrsqrt.pop %v1691
  %v2132 = vmul.f32 %v1691, %v2131
  %vm2133 = vcmp.eq.f32.partialorder %v1691, inf
  %v2134 = vsel %vm2133, %v1691, %v2132
  %vm2135 = vcmp.eq.f32.partialorder %v1691, 0.0
  %v2136 = vand.u32 %v1691, 2147483648
  %v2137 = vsel %vm2135, %v2136, %v2134
  %v2138 = vrsqrt.pop %v1692
  %v2139 = vmul.f32 %v1692, %v2138
  %vm2140 = vcmp.eq.f32.partialorder %v1692, inf
  %v2141 = vsel %vm2140, %v1692, %v2139
  %vm2142 = vcmp.eq.f32.partialorder %v1692, 0.0
  %v2143 = vand.u32 %v1692, 2147483648
  %v2144 = vsel %vm2142, %v2143, %v2141
  %v2145 = vrsqrt.pop %v1693
  %v2146 = vmul.f32 %v1693, %v2145
  %vm2147 = vcmp.eq.f32.partialorder %v1693, inf
  %v2148 = vsel %vm2147, %v1693, %v2146
  %vm2149 = vcmp.eq.f32.partialorder %v1693, 0.0
  %v2150 = vand.u32 %v1693, 2147483648
  %v2151 = vsel %vm2149, %v2150, %v2148
  %v2152 = vrsqrt.pop %v1694
  %v2153 = vmul.f32 %v1694, %v2152
  %vm2154 = vcmp.eq.f32.partialorder %v1694, inf
  %v2155 = vsel %vm2154, %v1694, %v2153
  %vm2156 = vcmp.eq.f32.partialorder %v1694, 0.0
  %v2157 = vand.u32 %v1694, 2147483648
  %v2158 = vsel %vm2156, %v2157, %v2155
  %v2159 = vrsqrt.pop %v1695
  %v2160 = vmul.f32 %v1695, %v2159
  %vm2161 = vcmp.eq.f32.partialorder %v1695, inf
  %v2162 = vsel %vm2161, %v1695, %v2160
  %vm2163 = vcmp.eq.f32.partialorder %v1695, 0.0
  %v2164 = vand.u32 %v1695, 2147483648
  %v2165 = vsel %vm2163, %v2164, %v2162
  %v2166 = vrsqrt.pop %v1696
  %v2167 = vmul.f32 %v1696, %v2166
  %vm2168 = vcmp.eq.f32.partialorder %v1696, inf
  %v2169 = vsel %vm2168, %v1696, %v2167
  %vm2170 = vcmp.eq.f32.partialorder %v1696, 0.0
  %v2171 = vand.u32 %v1696, 2147483648
  %v2172 = vsel %vm2170, %v2171, %v2169
  %v2173 = vrsqrt.pop %v1697
  %v2174 = vmul.f32 %v1697, %v2173
  %vm2175 = vcmp.eq.f32.partialorder %v1697, inf
  %v2176 = vsel %vm2175, %v1697, %v2174
  %vm2177 = vcmp.eq.f32.partialorder %v1697, 0.0
  %v2178 = vand.u32 %v1697, 2147483648
  %v2179 = vsel %vm2177, %v2178, %v2176
  %v2180 = vrsqrt.pop %v1698
  %v2181 = vmul.f32 %v1698, %v2180
  %vm2182 = vcmp.eq.f32.partialorder %v1698, inf
  %v2183 = vsel %vm2182, %v1698, %v2181
  %vm2184 = vcmp.eq.f32.partialorder %v1698, 0.0
  %v2185 = vand.u32 %v1698, 2147483648
  %v2186 = vsel %vm2184, %v2185, %v2183
  %v2187 = vrsqrt.pop %v1699
  %v2188 = vmul.f32 %v1699, %v2187
  %vm2189 = vcmp.eq.f32.partialorder %v1699, inf
  %v2190 = vsel %vm2189, %v1699, %v2188
  %vm2191 = vcmp.eq.f32.partialorder %v1699, 0.0
  %v2192 = vand.u32 %v1699, 2147483648
  %v2193 = vsel %vm2191, %v2192, %v2190
  %v2194 = vrsqrt.pop %v1700
  %v2195 = vmul.f32 %v1700, %v2194
  %vm2196 = vcmp.eq.f32.partialorder %v1700, inf
  %v2197 = vsel %vm2196, %v1700, %v2195
  %vm2198 = vcmp.eq.f32.partialorder %v1700, 0.0
  %v2199 = vand.u32 %v1700, 2147483648
  %v2200 = vsel %vm2198, %v2199, %v2197
  %v2201 = vrsqrt.pop %v1701
  %v2202 = vmul.f32 %v1701, %v2201
  %vm2203 = vcmp.eq.f32.partialorder %v1701, inf
  %v2204 = vsel %vm2203, %v1701, %v2202
  %vm2205 = vcmp.eq.f32.partialorder %v1701, 0.0
  %v2206 = vand.u32 %v1701, 2147483648
  %v2207 = vsel %vm2205, %v2206, %v2204
  %v2208 = vrsqrt.pop %v1702
  %v2209 = vmul.f32 %v1702, %v2208
  %vm2210 = vcmp.eq.f32.partialorder %v1702, inf
  %v2211 = vsel %vm2210, %v1702, %v2209
  %vm2212 = vcmp.eq.f32.partialorder %v1702, 0.0
  %v2213 = vand.u32 %v1702, 2147483648
  %v2214 = vsel %vm2212, %v2213, %v2211
  %v2215 = vrsqrt.pop %v1703
  %v2216 = vmul.f32 %v1703, %v2215
  %vm2217 = vcmp.eq.f32.partialorder %v1703, inf
  %v2218 = vsel %vm2217, %v1703, %v2216
  %vm2219 = vcmp.eq.f32.partialorder %v1703, 0.0
  %v2220 = vand.u32 %v1703, 2147483648
  %v2221 = vsel %vm2219, %v2220, %v2218
  %v2222 = vrsqrt.pop %v1704
  %v2223 = vmul.f32 %v1704, %v2222
  %vm2224 = vcmp.eq.f32.partialorder %v1704, inf
  %v2225 = vsel %vm2224, %v1704, %v2223
  %vm2226 = vcmp.eq.f32.partialorder %v1704, 0.0
  %v2227 = vand.u32 %v1704, 2147483648
  %v2228 = vsel %vm2226, %v2227, %v2225
  %v2229 = vrsqrt.pop %v1705
  %v2230 = vmul.f32 %v1705, %v2229
  %vm2231 = vcmp.eq.f32.partialorder %v1705, inf
  %v2232 = vsel %vm2231, %v1705, %v2230
  %vm2233 = vcmp.eq.f32.partialorder %v1705, 0.0
  %v2234 = vand.u32 %v1705, 2147483648
  %v2235 = vsel %vm2233, %v2234, %v2232
  %v2236 = vrsqrt.pop %v1706
  %v2237 = vmul.f32 %v1706, %v2236
  %vm2238 = vcmp.eq.f32.partialorder %v1706, inf
  %v2239 = vsel %vm2238, %v1706, %v2237
  %vm2240 = vcmp.eq.f32.partialorder %v1706, 0.0
  %v2241 = vand.u32 %v1706, 2147483648
  %v2242 = vsel %vm2240, %v2241, %v2239
  %v2243 = vrsqrt.pop %v1707
  %v2244 = vmul.f32 %v1707, %v2243
  %vm2245 = vcmp.eq.f32.partialorder %v1707, inf
  %v2246 = vsel %vm2245, %v1707, %v2244
  %vm2247 = vcmp.eq.f32.partialorder %v1707, 0.0
  %v2248 = vand.u32 %v1707, 2147483648
  %v2249 = vsel %vm2247, %v2248, %v2246
  %v2250 = vrsqrt.pop %v1708
  %v2251 = vmul.f32 %v1708, %v2250
  %vm2252 = vcmp.eq.f32.partialorder %v1708, inf
  %v2253 = vsel %vm2252, %v1708, %v2251
  %vm2254 = vcmp.eq.f32.partialorder %v1708, 0.0
  %v2255 = vand.u32 %v1708, 2147483648
  %v2256 = vsel %vm2254, %v2255, %v2253
  %v2257 = vrsqrt.pop %v1709
  %v2258 = vmul.f32 %v1709, %v2257
  %vm2259 = vcmp.eq.f32.partialorder %v1709, inf
  %v2260 = vsel %vm2259, %v1709, %v2258
  %vm2261 = vcmp.eq.f32.partialorder %v1709, 0.0
  %v2262 = vand.u32 %v1709, 2147483648
  %v2263 = vsel %vm2261, %v2262, %v2260
  %v2264 = vrsqrt.pop %v1710
  %v2265 = vmul.f32 %v1710, %v2264
  %vm2266 = vcmp.eq.f32.partialorder %v1710, inf
  %v2267 = vsel %vm2266, %v1710, %v2265
  %vm2268 = vcmp.eq.f32.partialorder %v1710, 0.0
  %v2269 = vand.u32 %v1710, 2147483648
  %v2270 = vsel %vm2268, %v2269, %v2267
  %v2271 = vrsqrt.pop %v1711
  %v2272 = vmul.f32 %v1711, %v2271
  %vm2273 = vcmp.eq.f32.partialorder %v1711, inf
  %v2274 = vsel %vm2273, %v1711, %v2272
  %vm2275 = vcmp.eq.f32.partialorder %v1711, 0.0
  %v2276 = vand.u32 %v1711, 2147483648
  %v2277 = vsel %vm2275, %v2276, %v2274
  %v2278 = vrsqrt.pop %v1712
  %v2279 = vmul.f32 %v1712, %v2278
  %vm2280 = vcmp.eq.f32.partialorder %v1712, inf
  %v2281 = vsel %vm2280, %v1712, %v2279
  %vm2282 = vcmp.eq.f32.partialorder %v1712, 0.0
  %v2283 = vand.u32 %v1712, 2147483648
  %v2284 = vsel %vm2282, %v2283, %v2281
  %v2285 = vrsqrt.pop %v1713
  %v2286 = vmul.f32 %v1713, %v2285
  %vm2287 = vcmp.eq.f32.partialorder %v1713, inf
  %v2288 = vsel %vm2287, %v1713, %v2286
  %vm2289 = vcmp.eq.f32.partialorder %v1713, 0.0
  %v2290 = vand.u32 %v1713, 2147483648
  %v2291 = vsel %vm2289, %v2290, %v2288
  %v2292 = vrsqrt.pop %v1714
  %v2293 = vmul.f32 %v1714, %v2292
  %vm2294 = vcmp.eq.f32.partialorder %v1714, inf
  %v2295 = vsel %vm2294, %v1714, %v2293
  %vm2296 = vcmp.eq.f32.partialorder %v1714, 0.0
  %v2297 = vand.u32 %v1714, 2147483648
  %v2298 = vsel %vm2296, %v2297, %v2295
  %v2299 = vrsqrt.pop %v1715
  %v2300 = vmul.f32 %v1715, %v2299
  %vm2301 = vcmp.eq.f32.partialorder %v1715, inf
  %v2302 = vsel %vm2301, %v1715, %v2300
  %vm2303 = vcmp.eq.f32.partialorder %v1715, 0.0
  %v2304 = vand.u32 %v1715, 2147483648
  %v2305 = vsel %vm2303, %v2304, %v2302
  %v2306 = vrsqrt.pop %v1716
  %v2307 = vmul.f32 %v1716, %v2306
  %vm2308 = vcmp.eq.f32.partialorder %v1716, inf
  %v2309 = vsel %vm2308, %v1716, %v2307
  %vm2310 = vcmp.eq.f32.partialorder %v1716, 0.0
  %v2311 = vand.u32 %v1716, 2147483648
  %v2312 = vsel %vm2310, %v2311, %v2309
  %v2313 = vrsqrt.pop %v1717
  %v2314 = vmul.f32 %v1717, %v2313
  %vm2315 = vcmp.eq.f32.partialorder %v1717, inf
  %v2316 = vsel %vm2315, %v1717, %v2314
  %vm2317 = vcmp.eq.f32.partialorder %v1717, 0.0
  %v2318 = vand.u32 %v1717, 2147483648
  %v2319 = vsel %vm2317, %v2318, %v2316
  %v2320 = vrsqrt.pop %v1718
  %v2321 = vmul.f32 %v1718, %v2320
  %vm2322 = vcmp.eq.f32.partialorder %v1718, inf
  %v2323 = vsel %vm2322, %v1718, %v2321
  %vm2324 = vcmp.eq.f32.partialorder %v1718, 0.0
  %v2325 = vand.u32 %v1718, 2147483648
  %v2326 = vsel %vm2324, %v2325, %v2323
  %v2327 = vrsqrt.pop %v1719
  %v2328 = vmul.f32 %v1719, %v2327
  %vm2329 = vcmp.eq.f32.partialorder %v1719, inf
  %v2330 = vsel %vm2329, %v1719, %v2328
  %vm2331 = vcmp.eq.f32.partialorder %v1719, 0.0
  %v2332 = vand.u32 %v1719, 2147483648
  %v2333 = vsel %vm2331, %v2332, %v2330
  %v2334 = vrsqrt.pop %v1720
  %v2335 = vmul.f32 %v1720, %v2334
  %vm2336 = vcmp.eq.f32.partialorder %v1720, inf
  %v2337 = vsel %vm2336, %v1720, %v2335
  %vm2338 = vcmp.eq.f32.partialorder %v1720, 0.0
  %v2339 = vand.u32 %v1720, 2147483648
  %v2340 = vsel %vm2338, %v2339, %v2337
  %v2341 = vrsqrt.pop %v1721
  %v2342 = vmul.f32 %v1721, %v2341
  %vm2343 = vcmp.eq.f32.partialorder %v1721, inf
  %v2344 = vsel %vm2343, %v1721, %v2342
  %vm2345 = vcmp.eq.f32.partialorder %v1721, 0.0
  %v2346 = vand.u32 %v1721, 2147483648
  %v2347 = vsel %vm2345, %v2346, %v2344
  %v2348 = vrsqrt.pop %v1722
  %v2349 = vmul.f32 %v1722, %v2348
  %vm2350 = vcmp.eq.f32.partialorder %v1722, inf
  %v2351 = vsel %vm2350, %v1722, %v2349
  %vm2352 = vcmp.eq.f32.partialorder %v1722, 0.0
  %v2353 = vand.u32 %v1722, 2147483648
  %v2354 = vsel %vm2352, %v2353, %v2351
  %v2355 = vrsqrt.pop %v1723
  %v2356 = vmul.f32 %v1723, %v2355
  %vm2357 = vcmp.eq.f32.partialorder %v1723, inf
  %v2358 = vsel %vm2357, %v1723, %v2356
  %vm2359 = vcmp.eq.f32.partialorder %v1723, 0.0
  %v2360 = vand.u32 %v1723, 2147483648
  %v2361 = vsel %vm2359, %v2360, %v2358
  %v2362 = vrsqrt.pop %v1724
  %v2363 = vmul.f32 %v1724, %v2362
  %vm2364 = vcmp.eq.f32.partialorder %v1724, inf
  %v2365 = vsel %vm2364, %v1724, %v2363
  %vm2366 = vcmp.eq.f32.partialorder %v1724, 0.0
  %v2367 = vand.u32 %v1724, 2147483648
  %v2368 = vsel %vm2366, %v2367, %v2365
  %v2369 = vrsqrt.pop %v1725
  %v2370 = vmul.f32 %v1725, %v2369
  %vm2371 = vcmp.eq.f32.partialorder %v1725, inf
  %v2372 = vsel %vm2371, %v1725, %v2370
  %vm2373 = vcmp.eq.f32.partialorder %v1725, 0.0
  %v2374 = vand.u32 %v1725, 2147483648
  %v2375 = vsel %vm2373, %v2374, %v2372
  %v2376 = vrsqrt.pop %v1726
  %v2377 = vmul.f32 %v1726, %v2376
  %vm2378 = vcmp.eq.f32.partialorder %v1726, inf
  %v2379 = vsel %vm2378, %v1726, %v2377
  %vm2380 = vcmp.eq.f32.partialorder %v1726, 0.0
  %v2381 = vand.u32 %v1726, 2147483648
  %v2382 = vsel %vm2380, %v2381, %v2379
  %v2383 = vrsqrt.pop %v1727
  %v2384 = vmul.f32 %v1727, %v2383
  %vm2385 = vcmp.eq.f32.partialorder %v1727, inf
  %v2386 = vsel %vm2385, %v1727, %v2384
  %vm2387 = vcmp.eq.f32.partialorder %v1727, 0.0
  %v2388 = vand.u32 %v1727, 2147483648
  %v2389 = vsel %vm2387, %v2388, %v2386
  %v2390 = vrsqrt.pop %v1728
  %v2391 = vmul.f32 %v1728, %v2390
  %vm2392 = vcmp.eq.f32.partialorder %v1728, inf
  %v2393 = vsel %vm2392, %v1728, %v2391
  %vm2394 = vcmp.eq.f32.partialorder %v1728, 0.0
  %v2395 = vand.u32 %v1728, 2147483648
  %v2396 = vsel %vm2394, %v2395, %v2393
  %v2397 = vrsqrt.pop %v1729
  %v2398 = vmul.f32 %v1729, %v2397
  %vm2399 = vcmp.eq.f32.partialorder %v1729, inf
  %v2400 = vsel %vm2399, %v1729, %v2398
  %vm2401 = vcmp.eq.f32.partialorder %v1729, 0.0
  %v2402 = vand.u32 %v1729, 2147483648
  %v2403 = vsel %vm2401, %v2402, %v2400
  %v2404 = vrsqrt.pop %v1730
  %v2405 = vmul.f32 %v1730, %v2404
  %vm2406 = vcmp.eq.f32.partialorder %v1730, inf
  %v2407 = vsel %vm2406, %v1730, %v2405
  %vm2408 = vcmp.eq.f32.partialorder %v1730, 0.0
  %v2409 = vand.u32 %v1730, 2147483648
  %v2410 = vsel %vm2408, %v2409, %v2407
  %v2411 = vrsqrt.pop %v1731
  %v2412 = vmul.f32 %v1731, %v2411
  %vm2413 = vcmp.eq.f32.partialorder %v1731, inf
  %v2414 = vsel %vm2413, %v1731, %v2412
  %vm2415 = vcmp.eq.f32.partialorder %v1731, 0.0
  %v2416 = vand.u32 %v1731, 2147483648
  %v2417 = vsel %vm2415, %v2416, %v2414
  %v2418 = vrsqrt.pop %v1732
  %v2419 = vmul.f32 %v1732, %v2418
  %vm2420 = vcmp.eq.f32.partialorder %v1732, inf
  %v2421 = vsel %vm2420, %v1732, %v2419
  %vm2422 = vcmp.eq.f32.partialorder %v1732, 0.0
  %v2423 = vand.u32 %v1732, 2147483648
  %v2424 = vsel %vm2422, %v2423, %v2421
  %v2425 = vrsqrt.pop %v1733
  %v2426 = vmul.f32 %v1733, %v2425
  %vm2427 = vcmp.eq.f32.partialorder %v1733, inf
  %v2428 = vsel %vm2427, %v1733, %v2426
  %vm2429 = vcmp.eq.f32.partialorder %v1733, 0.0
  %v2430 = vand.u32 %v1733, 2147483648
  %v2431 = vsel %vm2429, %v2430, %v2428
  %v2432 = vrsqrt.pop %v1734
  %v2433 = vmul.f32 %v1734, %v2432
  %vm2434 = vcmp.eq.f32.partialorder %v1734, inf
  %v2435 = vsel %vm2434, %v1734, %v2433
  %vm2436 = vcmp.eq.f32.partialorder %v1734, 0.0
  %v2437 = vand.u32 %v1734, 2147483648
  %v2438 = vsel %vm2436, %v2437, %v2435
  %v2439 = vrsqrt.pop %v1735
  %v2440 = vmul.f32 %v1735, %v2439
  %vm2441 = vcmp.eq.f32.partialorder %v1735, inf
  %v2442 = vsel %vm2441, %v1735, %v2440
  %vm2443 = vcmp.eq.f32.partialorder %v1735, 0.0
  %v2444 = vand.u32 %v1735, 2147483648
  %v2445 = vsel %vm2443, %v2444, %v2442
  %v2446 = vrsqrt.pop %v1736
  %v2447 = vmul.f32 %v1736, %v2446
  %vm2448 = vcmp.eq.f32.partialorder %v1736, inf
  %v2449 = vsel %vm2448, %v1736, %v2447
  %vm2450 = vcmp.eq.f32.partialorder %v1736, 0.0
  %v2451 = vand.u32 %v1736, 2147483648
  %v2452 = vsel %vm2450, %v2451, %v2449
  %v2453 = vrsqrt.pop %v1737
  %v2454 = vmul.f32 %v1737, %v2453
  %vm2455 = vcmp.eq.f32.partialorder %v1737, inf
  %v2456 = vsel %vm2455, %v1737, %v2454
  %vm2457 = vcmp.eq.f32.partialorder %v1737, 0.0
  %v2458 = vand.u32 %v1737, 2147483648
  %v2459 = vsel %vm2457, %v2458, %v2456
  %v2460 = vrsqrt.pop %v1738
  %v2461 = vmul.f32 %v1738, %v2460
  %vm2462 = vcmp.eq.f32.partialorder %v1738, inf
  %v2463 = vsel %vm2462, %v1738, %v2461
  %vm2464 = vcmp.eq.f32.partialorder %v1738, 0.0
  %v2465 = vand.u32 %v1738, 2147483648
  %v2466 = vsel %vm2464, %v2465, %v2463
  %v2467 = vrsqrt.pop %v1739
  %v2468 = vmul.f32 %v1739, %v2467
  %vm2469 = vcmp.eq.f32.partialorder %v1739, inf
  %v2470 = vsel %vm2469, %v1739, %v2468
  %vm2471 = vcmp.eq.f32.partialorder %v1739, 0.0
  %v2472 = vand.u32 %v1739, 2147483648
  %v2473 = vsel %vm2471, %v2472, %v2470
  %v2474 = vrsqrt.pop %v1740
  %v2475 = vmul.f32 %v1740, %v2474
  %vm2476 = vcmp.eq.f32.partialorder %v1740, inf
  %v2477 = vsel %vm2476, %v1740, %v2475
  %vm2478 = vcmp.eq.f32.partialorder %v1740, 0.0
  %v2479 = vand.u32 %v1740, 2147483648
  %v2480 = vsel %vm2478, %v2479, %v2477
  %v2481 = vrsqrt.pop %v1741
  %v2482 = vmul.f32 %v1741, %v2481
  %vm2483 = vcmp.eq.f32.partialorder %v1741, inf
  %v2484 = vsel %vm2483, %v1741, %v2482
  %vm2485 = vcmp.eq.f32.partialorder %v1741, 0.0
  %v2486 = vand.u32 %v1741, 2147483648
  %v2487 = vsel %vm2485, %v2486, %v2484
  %v2488 = vrsqrt.pop %v1742
  %v2489 = vmul.f32 %v1742, %v2488
  %vm2490 = vcmp.eq.f32.partialorder %v1742, inf
  %v2491 = vsel %vm2490, %v1742, %v2489
  %vm2492 = vcmp.eq.f32.partialorder %v1742, 0.0
  %v2493 = vand.u32 %v1742, 2147483648
  %v2494 = vsel %vm2492, %v2493, %v2491
  %v2495 = vrsqrt.pop %v1743
  %v2496 = vmul.f32 %v1743, %v2495
  %vm2497 = vcmp.eq.f32.partialorder %v1743, inf
  %v2498 = vsel %vm2497, %v1743, %v2496
  %vm2499 = vcmp.eq.f32.partialorder %v1743, 0.0
  %v2500 = vand.u32 %v1743, 2147483648
  %v2501 = vsel %vm2499, %v2500, %v2498
  %v2502 = vrsqrt.pop %v1744
  %v2503 = vmul.f32 %v1744, %v2502
  %vm2504 = vcmp.eq.f32.partialorder %v1744, inf
  %v2505 = vsel %vm2504, %v1744, %v2503
  %vm2506 = vcmp.eq.f32.partialorder %v1744, 0.0
  %v2507 = vand.u32 %v1744, 2147483648
  %v2508 = vsel %vm2506, %v2507, %v2505
  %v2509 = vrsqrt.pop %v1745
  %v2510 = vmul.f32 %v1745, %v2509
  %vm2511 = vcmp.eq.f32.partialorder %v1745, inf
  %v2512 = vsel %vm2511, %v1745, %v2510
  %vm2513 = vcmp.eq.f32.partialorder %v1745, 0.0
  %v2514 = vand.u32 %v1745, 2147483648
  %v2515 = vsel %vm2513, %v2514, %v2512
  %v2516 = vrsqrt.pop %v1746
  %v2517 = vmul.f32 %v1746, %v2516
  %vm2518 = vcmp.eq.f32.partialorder %v1746, inf
  %v2519 = vsel %vm2518, %v1746, %v2517
  %vm2520 = vcmp.eq.f32.partialorder %v1746, 0.0
  %v2521 = vand.u32 %v1746, 2147483648
  %v2522 = vsel %vm2520, %v2521, %v2519
  %v2523 = vrsqrt.pop %v1747
  %v2524 = vmul.f32 %v1747, %v2523
  %vm2525 = vcmp.eq.f32.partialorder %v1747, inf
  %v2526 = vsel %vm2525, %v1747, %v2524
  %vm2527 = vcmp.eq.f32.partialorder %v1747, 0.0
  %v2528 = vand.u32 %v1747, 2147483648
  %v2529 = vsel %vm2527, %v2528, %v2526
  %v2530 = vrsqrt.pop %v1748
  %v2531 = vmul.f32 %v1748, %v2530
  %vm2532 = vcmp.eq.f32.partialorder %v1748, inf
  %v2533 = vsel %vm2532, %v1748, %v2531
  %vm2534 = vcmp.eq.f32.partialorder %v1748, 0.0
  %v2535 = vand.u32 %v1748, 2147483648
  %v2536 = vsel %vm2534, %v2535, %v2533
  %v2537 = vrsqrt.pop %v1749
  %v2538 = vmul.f32 %v1749, %v2537
  %vm2539 = vcmp.eq.f32.partialorder %v1749, inf
  %v2540 = vsel %vm2539, %v1749, %v2538
  %vm2541 = vcmp.eq.f32.partialorder %v1749, 0.0
  %v2542 = vand.u32 %v1749, 2147483648
  %v2543 = vsel %vm2541, %v2542, %v2540
  %v2544 = vrsqrt.pop %v1750
  %v2545 = vmul.f32 %v1750, %v2544
  %vm2546 = vcmp.eq.f32.partialorder %v1750, inf
  %v2547 = vsel %vm2546, %v1750, %v2545
  %vm2548 = vcmp.eq.f32.partialorder %v1750, 0.0
  %v2549 = vand.u32 %v1750, 2147483648
  %v2550 = vsel %vm2548, %v2549, %v2547
  %v2551 = vrsqrt.pop %v1751
  %v2552 = vmul.f32 %v1751, %v2551
  %vm2553 = vcmp.eq.f32.partialorder %v1751, inf
  %v2554 = vsel %vm2553, %v1751, %v2552
  %vm2555 = vcmp.eq.f32.partialorder %v1751, 0.0
  %v2556 = vand.u32 %v1751, 2147483648
  %v2557 = vsel %vm2555, %v2556, %v2554
  %v2558 = vrsqrt.pop %v1752
  %v2559 = vmul.f32 %v1752, %v2558
  %vm2560 = vcmp.eq.f32.partialorder %v1752, inf
  %v2561 = vsel %vm2560, %v1752, %v2559
  %vm2562 = vcmp.eq.f32.partialorder %v1752, 0.0
  %v2563 = vand.u32 %v1752, 2147483648
  %v2564 = vsel %vm2562, %v2563, %v2561
  %v2565 = vrsqrt.pop %v1753
  %v2566 = vmul.f32 %v1753, %v2565
  %vm2567 = vcmp.eq.f32.partialorder %v1753, inf
  %v2568 = vsel %vm2567, %v1753, %v2566
  %vm2569 = vcmp.eq.f32.partialorder %v1753, 0.0
  %v2570 = vand.u32 %v1753, 2147483648
  %v2571 = vsel %vm2569, %v2570, %v2568
  %v2572 = vrsqrt.pop %v1754
  %v2573 = vmul.f32 %v1754, %v2572
  %vm2574 = vcmp.eq.f32.partialorder %v1754, inf
  %v2575 = vsel %vm2574, %v1754, %v2573
  %vm2576 = vcmp.eq.f32.partialorder %v1754, 0.0
  %v2577 = vand.u32 %v1754, 2147483648
  %v2578 = vsel %vm2576, %v2577, %v2575
  %v2579 = vrsqrt.pop %v1755
  %v2580 = vmul.f32 %v1755, %v2579
  %vm2581 = vcmp.eq.f32.partialorder %v1755, inf
  %v2582 = vsel %vm2581, %v1755, %v2580
  %vm2583 = vcmp.eq.f32.partialorder %v1755, 0.0
  %v2584 = vand.u32 %v1755, 2147483648
  %v2585 = vsel %vm2583, %v2584, %v2582
  %v2586 = vrsqrt.pop %v1756
  %v2587 = vmul.f32 %v1756, %v2586
  %vm2588 = vcmp.eq.f32.partialorder %v1756, inf
  %v2589 = vsel %vm2588, %v1756, %v2587
  %vm2590 = vcmp.eq.f32.partialorder %v1756, 0.0
  %v2591 = vand.u32 %v1756, 2147483648
  %v2592 = vsel %vm2590, %v2591, %v2589
  %v2593 = vrsqrt.pop %v1757
  %v2594 = vmul.f32 %v1757, %v2593
  %vm2595 = vcmp.eq.f32.partialorder %v1757, inf
  %v2596 = vsel %vm2595, %v1757, %v2594
  %vm2597 = vcmp.eq.f32.partialorder %v1757, 0.0
  %v2598 = vand.u32 %v1757, 2147483648
  %v2599 = vsel %vm2597, %v2598, %v2596
  %v2600 = vrsqrt.pop %v1758
  %v2601 = vmul.f32 %v1758, %v2600
  %vm2602 = vcmp.eq.f32.partialorder %v1758, inf
  %v2603 = vsel %vm2602, %v1758, %v2601
  %vm2604 = vcmp.eq.f32.partialorder %v1758, 0.0
  %v2605 = vand.u32 %v1758, 2147483648
  %v2606 = vsel %vm2604, %v2605, %v2603
  %v2607 = vrsqrt.pop %v1759
  %v2608 = vmul.f32 %v1759, %v2607
  %vm2609 = vcmp.eq.f32.partialorder %v1759, inf
  %v2610 = vsel %vm2609, %v1759, %v2608
  %vm2611 = vcmp.eq.f32.partialorder %v1759, 0.0
  %v2612 = vand.u32 %v1759, 2147483648
  %v2613 = vsel %vm2611, %v2612, %v2610
  %v2614 = vrsqrt.pop %v1760
  %v2615 = vmul.f32 %v1760, %v2614
  %vm2616 = vcmp.eq.f32.partialorder %v1760, inf
  %v2617 = vsel %vm2616, %v1760, %v2615
  %vm2618 = vcmp.eq.f32.partialorder %v1760, 0.0
  %v2619 = vand.u32 %v1760, 2147483648
  %v2620 = vsel %vm2618, %v2619, %v2617
  %v2621 = vrsqrt.pop %v1761
  %v2622 = vmul.f32 %v1761, %v2621
  %vm2623 = vcmp.eq.f32.partialorder %v1761, inf
  %v2624 = vsel %vm2623, %v1761, %v2622
  %vm2625 = vcmp.eq.f32.partialorder %v1761, 0.0
  %v2626 = vand.u32 %v1761, 2147483648
  %v2627 = vsel %vm2625, %v2626, %v2624
  %v2628 = vrsqrt.pop %v1762
  %v2629 = vmul.f32 %v1762, %v2628
  %vm2630 = vcmp.eq.f32.partialorder %v1762, inf
  %v2631 = vsel %vm2630, %v1762, %v2629
  %vm2632 = vcmp.eq.f32.partialorder %v1762, 0.0
  %v2633 = vand.u32 %v1762, 2147483648
  %v2634 = vsel %vm2632, %v2633, %v2631
  %v2635 = vrsqrt.pop %v1763
  %v2636 = vmul.f32 %v1763, %v2635
  %vm2637 = vcmp.eq.f32.partialorder %v1763, inf
  %v2638 = vsel %vm2637, %v1763, %v2636
  %vm2639 = vcmp.eq.f32.partialorder %v1763, 0.0
  %v2640 = vand.u32 %v1763, 2147483648
  %v2641 = vsel %vm2639, %v2640, %v2638
  %v2642 = vrsqrt.pop %v1764
  %v2643 = vmul.f32 %v1764, %v2642
  %vm2644 = vcmp.eq.f32.partialorder %v1764, inf
  %v2645 = vsel %vm2644, %v1764, %v2643
  %vm2646 = vcmp.eq.f32.partialorder %v1764, 0.0
  %v2647 = vand.u32 %v1764, 2147483648
  %v2648 = vsel %vm2646, %v2647, %v2645
  %v2649 = vrsqrt.pop %v1765
  %v2650 = vmul.f32 %v1765, %v2649
  %vm2651 = vcmp.eq.f32.partialorder %v1765, inf
  %v2652 = vsel %vm2651, %v1765, %v2650
  %vm2653 = vcmp.eq.f32.partialorder %v1765, 0.0
  %v2654 = vand.u32 %v1765, 2147483648
  %v2655 = vsel %vm2653, %v2654, %v2652
  %v2656 = vrsqrt.pop %v1766
  %v2657 = vmul.f32 %v1766, %v2656
  %vm2658 = vcmp.eq.f32.partialorder %v1766, inf
  %v2659 = vsel %vm2658, %v1766, %v2657
  %vm2660 = vcmp.eq.f32.partialorder %v1766, 0.0
  %v2661 = vand.u32 %v1766, 2147483648
  %v2662 = vsel %vm2660, %v2661, %v2659
  %v2663 = vsub.f32 %v1773, 1.0
  %v2664 = vsub.f32 %v1780, 1.0
  %v2665 = vsub.f32 %v1787, 1.0
  %v2666 = vsub.f32 %v1794, 1.0
  %v2667 = vsub.f32 %v1801, 1.0
  %v2668 = vsub.f32 %v1808, 1.0
  %v2669 = vsub.f32 %v1815, 1.0
  %v2670 = vsub.f32 %v1822, 1.0
  %v2671 = vsub.f32 %v1829, 1.0
  %v2672 = vsub.f32 %v1836, 1.0
  %v2673 = vsub.f32 %v1843, 1.0
  %v2674 = vsub.f32 %v1850, 1.0
  %v2675 = vsub.f32 %v1857, 1.0
  %v2676 = vsub.f32 %v1864, 1.0
  %v2677 = vsub.f32 %v1871, 1.0
  %v2678 = vsub.f32 %v1878, 1.0
  %v2679 = vsub.f32 %v1885, 1.0
  %v2680 = vsub.f32 %v1892, 1.0
  %v2681 = vsub.f32 %v1899, 1.0
  %v2682 = vsub.f32 %v1906, 1.0
  %v2683 = vsub.f32 %v1913, 1.0
  %v2684 = vsub.f32 %v1920, 1.0
  %v2685 = vsub.f32 %v1927, 1.0
  %v2686 = vsub.f32 %v1934, 1.0
  %v2687 = vsub.f32 %v1941, 1.0
  %v2688 = vsub.f32 %v1948, 1.0
  %v2689 = vsub.f32 %v1955, 1.0
  %v2690 = vsub.f32 %v1962, 1.0
  %v2691 = vsub.f32 %v1969, 1.0
  %v2692 = vsub.f32 %v1976, 1.0
  %v2693 = vsub.f32 %v1983, 1.0
  %v2694 = vsub.f32 %v1990, 1.0
  %v2695 = vsub.f32 %v1997, 1.0
  %v2696 = vsub.f32 %v2004, 1.0
  %v2697 = vsub.f32 %v2011, 1.0
  %v2698 = vsub.f32 %v2018, 1.0
  %v2699 = vsub.f32 %v2025, 1.0
  %v2700 = vsub.f32 %v2032, 1.0
  %v2701 = vsub.f32 %v2039, 1.0
  %v2702 = vsub.f32 %v2046, 1.0
  %v2703 = vsub.f32 %v2053, 1.0
  %v2704 = vsub.f32 %v2060, 1.0
  %v2705 = vsub.f32 %v2067, 1.0
  %v2706 = vsub.f32 %v2074, 1.0
  %v2707 = vsub.f32 %v2081, 1.0
  %v2708 = vsub.f32 %v2088, 1.0
  %v2709 = vsub.f32 %v2095, 1.0
  %v2710 = vsub.f32 %v2102, 1.0
  %v2711 = vsub.f32 %v2109, 1.0
  %v2712 = vsub.f32 %v2116, 1.0
  %v2713 = vsub.f32 %v2123, 1.0
  %v2714 = vsub.f32 %v2130, 1.0
  %v2715 = vsub.f32 %v2137, 1.0
  %v2716 = vsub.f32 %v2144, 1.0
  %v2717 = vsub.f32 %v2151, 1.0
  %v2718 = vsub.f32 %v2158, 1.0
  %v2719 = vsub.f32 %v2165, 1.0
  %v2720 = vsub.f32 %v2172, 1.0
  %v2721 = vsub.f32 %v2179, 1.0
  %v2722 = vsub.f32 %v2186, 1.0
  %v2723 = vsub.f32 %v2193, 1.0
  %v2724 = vsub.f32 %v2200, 1.0
  %v2725 = vsub.f32 %v2207, 1.0
  %v2726 = vsub.f32 %v2214, 1.0
  %v2727 = vsub.f32 %v2221, 1.0
  %v2728 = vsub.f32 %v2228, 1.0
  %v2729 = vsub.f32 %v2235, 1.0
  %v2730 = vsub.f32 %v2242, 1.0
  %v2731 = vsub.f32 %v2249, 1.0
  %v2732 = vsub.f32 %v2256, 1.0
  %v2733 = vsub.f32 %v2263, 1.0
  %v2734 = vsub.f32 %v2270, 1.0
  %v2735 = vsub.f32 %v2277, 1.0
  %v2736 = vsub.f32 %v2284, 1.0
  %v2737 = vsub.f32 %v2291, 1.0
  %v2738 = vsub.f32 %v2298, 1.0
  %v2739 = vsub.f32 %v2305, 1.0
  %v2740 = vsub.f32 %v2312, 1.0
  %v2741 = vsub.f32 %v2319, 1.0
  %v2742 = vsub.f32 %v2326, 1.0
  %v2743 = vsub.f32 %v2333, 1.0
  %v2744 = vsub.f32 %v2340, 1.0
  %v2745 = vsub.f32 %v2347, 1.0
  %v2746 = vsub.f32 %v2354, 1.0
  %v2747 = vsub.f32 %v2361, 1.0
  %v2748 = vsub.f32 %v2368, 1.0
  %v2749 = vsub.f32 %v2375, 1.0
  %v2750 = vsub.f32 %v2382, 1.0
  %v2751 = vsub.f32 %v2389, 1.0
  %v2752 = vsub.f32 %v2396, 1.0
  %v2753 = vsub.f32 %v2403, 1.0
  %v2754 = vsub.f32 %v2410, 1.0
  %v2755 = vsub.f32 %v2417, 1.0
  %v2756 = vsub.f32 %v2424, 1.0
  %v2757 = vsub.f32 %v2431, 1.0
  %v2758 = vsub.f32 %v2438, 1.0
  %v2759 = vsub.f32 %v2445, 1.0
  %v2760 = vsub.f32 %v2452, 1.0
  %v2761 = vsub.f32 %v2459, 1.0
  %v2762 = vsub.f32 %v2466, 1.0
  %v2763 = vsub.f32 %v2473, 1.0
  %v2764 = vsub.f32 %v2480, 1.0
  %v2765 = vsub.f32 %v2487, 1.0
  %v2766 = vsub.f32 %v2494, 1.0
  %v2767 = vsub.f32 %v2501, 1.0
  %v2768 = vsub.f32 %v2508, 1.0
  %v2769 = vsub.f32 %v2515, 1.0
  %v2770 = vsub.f32 %v2522, 1.0
  %v2771 = vsub.f32 %v2529, 1.0
  %v2772 = vsub.f32 %v2536, 1.0
  %v2773 = vsub.f32 %v2543, 1.0
  %v2774 = vsub.f32 %v2550, 1.0
  %v2775 = vsub.f32 %v2557, 1.0
  %v2776 = vsub.f32 %v2564, 1.0
  %v2777 = vsub.f32 %v2571, 1.0
  %v2778 = vsub.f32 %v2578, 1.0
  %v2779 = vsub.f32 %v2585, 1.0
  %v2780 = vsub.f32 %v2592, 1.0
  %v2781 = vsub.f32 %v2599, 1.0
  %v2782 = vsub.f32 %v2606, 1.0
  %v2783 = vsub.f32 %v2613, 1.0
  %v2784 = vsub.f32 %v2620, 1.0
  %v2785 = vsub.f32 %v2627, 1.0
  %v2786 = vsub.f32 %v2634, 1.0
  %v2787 = vsub.f32 %v2641, 1.0
  %v2788 = vsub.f32 %v2648, 1.0
  %v2789 = vsub.f32 %v2655, 1.0
  %v2790 = vsub.f32 %v2662, 1.0
  %v2791 = vld [vmem:[#allocation2] sm:$0xff]
  %v2792 = vld [vmem:[#allocation2 + $0x8] sm:$0xff]
  %v2793 = vld [vmem:[#allocation2 + $0x10] sm:$0xff]
  %v2794 = vld [vmem:[#allocation2 + $0x18] sm:$0xff]
  %v2795 = vld [vmem:[#allocation2 + $0x20] sm:$0xff]
  %v2796 = vld [vmem:[#allocation2 + $0x28] sm:$0xff]
  %v2797 = vld [vmem:[#allocation2 + $0x30] sm:$0xff]
  %v2798 = vld [vmem:[#allocation2 + $0x38] sm:$0xff]
  %v2799 = vld [vmem:[#allocation2 + $0x40] sm:$0xff]
  %v2800 = vld [vmem:[#allocation2 + $0x48] sm:$0xff]
  %v2801 = vld [vmem:[#allocation2 + $0x50] sm:$0xff]
  %v2802 = vld [vmem:[#allocation2 + $0x58] sm:$0xff]
  %v2803 = vld [vmem:[#allocation2 + $0x60] sm:$0xff]
  %v2804 = vld [vmem:[#allocation2 + $0x68] sm:$0xff]
  %v2805 = vld [vmem:[#allocation2 + $0x70] sm:$0xff]
  %v2806 = vld [vmem:[#allocation2 + $0x78] sm:$0xff]
  %v2807 = vld [vmem:[#allocation2 + $0x80] sm:$0xff]
  %v2808 = vld [vmem:[#allocation2 + $0x88] sm:$0xff]
  %v2809 = vld [vmem:[#allocation2 + $0x90] sm:$0xff]
  %v2810 = vld [vmem:[#allocation2 + $0x98] sm:$0xff]
  %v2811 = vld [vmem:[#allocation2 + $0xa0] sm:$0xff]
  %v2812 = vld [vmem:[#allocation2 + $0xa8] sm:$0xff]
  %v2813 = vld [vmem:[#allocation2 + $0xb0] sm:$0xff]
  %v2814 = vld [vmem:[#allocation2 + $0xb8] sm:$0xff]
  %v2815 = vld [vmem:[#allocation2 + $0xc0] sm:$0xff]
  %v2816 = vld [vmem:[#allocation2 + $0xc8] sm:$0xff]
  %v2817 = vld [vmem:[#allocation2 + $0xd0] sm:$0xff]
  %v2818 = vld [vmem:[#allocation2 + $0xd8] sm:$0xff]
  %v2819 = vld [vmem:[#allocation2 + $0xe0] sm:$0xff]
  %v2820 = vld [vmem:[#allocation2 + $0xe8] sm:$0xff]
  %v2821 = vld [vmem:[#allocation2 + $0xf0] sm:$0xff]
  %v2822 = vld [vmem:[#allocation2 + $0xf8] sm:$0xff]
  %v2823 = vld [vmem:[#allocation2 + $0x100] sm:$0xff]
  %v2824 = vld [vmem:[#allocation2 + $0x108] sm:$0xff]
  %v2825 = vld [vmem:[#allocation2 + $0x110] sm:$0xff]
  %v2826 = vld [vmem:[#allocation2 + $0x118] sm:$0xff]
  %v2827 = vld [vmem:[#allocation2 + $0x120] sm:$0xff]
  %v2828 = vld [vmem:[#allocation2 + $0x128] sm:$0xff]
  %v2829 = vld [vmem:[#allocation2 + $0x130] sm:$0xff]
  %v2830 = vld [vmem:[#allocation2 + $0x138] sm:$0xff]
  %v2831 = vld [vmem:[#allocation2 + $0x140] sm:$0xff]
  %v2832 = vld [vmem:[#allocation2 + $0x148] sm:$0xff]
  %v2833 = vld [vmem:[#allocation2 + $0x150] sm:$0xff]
  %v2834 = vld [vmem:[#allocation2 + $0x158] sm:$0xff]
  %v2835 = vld [vmem:[#allocation2 + $0x160] sm:$0xff]
  %v2836 = vld [vmem:[#allocation2 + $0x168] sm:$0xff]
  %v2837 = vld [vmem:[#allocation2 + $0x170] sm:$0xff]
  %v2838 = vld [vmem:[#allocation2 + $0x178] sm:$0xff]
  %v2839 = vld [vmem:[#allocation2 + $0x180] sm:$0xff]
  %v2840 = vld [vmem:[#allocation2 + $0x188] sm:$0xff]
  %v2841 = vld [vmem:[#allocation2 + $0x190] sm:$0xff]
  %v2842 = vld [vmem:[#allocation2 + $0x198] sm:$0xff]
  %v2843 = vld [vmem:[#allocation2 + $0x1a0] sm:$0xff]
  %v2844 = vld [vmem:[#allocation2 + $0x1a8] sm:$0xff]
  %v2845 = vld [vmem:[#allocation2 + $0x1b0] sm:$0xff]
  %v2846 = vld [vmem:[#allocation2 + $0x1b8] sm:$0xff]
  %v2847 = vld [vmem:[#allocation2 + $0x1c0] sm:$0xff]
  %v2848 = vld [vmem:[#allocation2 + $0x1c8] sm:$0xff]
  %v2849 = vld [vmem:[#allocation2 + $0x1d0] sm:$0xff]
  %v2850 = vld [vmem:[#allocation2 + $0x1d8] sm:$0xff]
  %v2851 = vld [vmem:[#allocation2 + $0x1e0] sm:$0xff]
  %v2852 = vld [vmem:[#allocation2 + $0x1e8] sm:$0xff]
  %v2853 = vld [vmem:[#allocation2 + $0x1f0] sm:$0xff]
  %v2854 = vld [vmem:[#allocation2 + $0x1f8] sm:$0xff]
  %v2855 = vld [vmem:[#allocation2 + $0x200] sm:$0xff]
  %v2856 = vld [vmem:[#allocation2 + $0x208] sm:$0xff]
  %v2857 = vld [vmem:[#allocation2 + $0x210] sm:$0xff]
  %v2858 = vld [vmem:[#allocation2 + $0x218] sm:$0xff]
  %v2859 = vld [vmem:[#allocation2 + $0x220] sm:$0xff]
  %v2860 = vld [vmem:[#allocation2 + $0x228] sm:$0xff]
  %v2861 = vld [vmem:[#allocation2 + $0x230] sm:$0xff]
  %v2862 = vld [vmem:[#allocation2 + $0x238] sm:$0xff]
  %v2863 = vld [vmem:[#allocation2 + $0x240] sm:$0xff]
  %v2864 = vld [vmem:[#allocation2 + $0x248] sm:$0xff]
  %v2865 = vld [vmem:[#allocation2 + $0x250] sm:$0xff]
  %v2866 = vld [vmem:[#allocation2 + $0x258] sm:$0xff]
  %v2867 = vld [vmem:[#allocation2 + $0x260] sm:$0xff]
  %v2868 = vld [vmem:[#allocation2 + $0x268] sm:$0xff]
  %v2869 = vld [vmem:[#allocation2 + $0x270] sm:$0xff]
  %v2870 = vld [vmem:[#allocation2 + $0x278] sm:$0xff]
  %v2871 = vld [vmem:[#allocation2 + $0x280] sm:$0xff]
  %v2872 = vld [vmem:[#allocation2 + $0x288] sm:$0xff]
  %v2873 = vld [vmem:[#allocation2 + $0x290] sm:$0xff]
  %v2874 = vld [vmem:[#allocation2 + $0x298] sm:$0xff]
  %v2875 = vld [vmem:[#allocation2 + $0x2a0] sm:$0xff]
  %v2876 = vld [vmem:[#allocation2 + $0x2a8] sm:$0xff]
  %v2877 = vld [vmem:[#allocation2 + $0x2b0] sm:$0xff]
  %v2878 = vld [vmem:[#allocation2 + $0x2b8] sm:$0xff]
  %v2879 = vld [vmem:[#allocation2 + $0x2c0] sm:$0xff]
  %v2880 = vld [vmem:[#allocation2 + $0x2c8] sm:$0xff]
  %v2881 = vld [vmem:[#allocation2 + $0x2d0] sm:$0xff]
  %v2882 = vld [vmem:[#allocation2 + $0x2d8] sm:$0xff]
  %v2883 = vld [vmem:[#allocation2 + $0x2e0] sm:$0xff]
  %v2884 = vld [vmem:[#allocation2 + $0x2e8] sm:$0xff]
  %v2885 = vld [vmem:[#allocation2 + $0x2f0] sm:$0xff]
  %v2886 = vld [vmem:[#allocation2 + $0x2f8] sm:$0xff]
  %v2887 = vld [vmem:[#allocation2 + $0x300] sm:$0xff]
  %v2888 = vld [vmem:[#allocation2 + $0x308] sm:$0xff]
  %v2889 = vld [vmem:[#allocation2 + $0x310] sm:$0xff]
  %v2890 = vld [vmem:[#allocation2 + $0x318] sm:$0xff]
  %v2891 = vld [vmem:[#allocation2 + $0x320] sm:$0xff]
  %v2892 = vld [vmem:[#allocation2 + $0x328] sm:$0xff]
  %v2893 = vld [vmem:[#allocation2 + $0x330] sm:$0xff]
  %v2894 = vld [vmem:[#allocation2 + $0x338] sm:$0xff]
  %v2895 = vld [vmem:[#allocation2 + $0x340] sm:$0xff]
  %v2896 = vld [vmem:[#allocation2 + $0x348] sm:$0xff]
  %v2897 = vld [vmem:[#allocation2 + $0x350] sm:$0xff]
  %v2898 = vld [vmem:[#allocation2 + $0x358] sm:$0xff]
  %v2899 = vld [vmem:[#allocation2 + $0x360] sm:$0xff]
  %v2900 = vld [vmem:[#allocation2 + $0x368] sm:$0xff]
  %v2901 = vld [vmem:[#allocation2 + $0x370] sm:$0xff]
  %v2902 = vld [vmem:[#allocation2 + $0x378] sm:$0xff]
  %v2903 = vld [vmem:[#allocation2 + $0x380] sm:$0xff]
  %v2904 = vld [vmem:[#allocation2 + $0x388] sm:$0xff]
  %v2905 = vld [vmem:[#allocation2 + $0x390] sm:$0xff]
  %v2906 = vld [vmem:[#allocation2 + $0x398] sm:$0xff]
  %v2907 = vld [vmem:[#allocation2 + $0x3a0] sm:$0xff]
  %v2908 = vld [vmem:[#allocation2 + $0x3a8] sm:$0xff]
  %v2909 = vld [vmem:[#allocation2 + $0x3b0] sm:$0xff]
  %v2910 = vld [vmem:[#allocation2 + $0x3b8] sm:$0xff]
  %v2911 = vld [vmem:[#allocation2 + $0x3c0] sm:$0xff]
  %v2912 = vld [vmem:[#allocation2 + $0x3c8] sm:$0xff]
  %v2913 = vld [vmem:[#allocation2 + $0x3d0] sm:$0xff]
  %v2914 = vld [vmem:[#allocation2 + $0x3d8] sm:$0xff]
  %v2915 = vld [vmem:[#allocation2 + $0x3e0] sm:$0xff]
  %v2916 = vld [vmem:[#allocation2 + $0x3e8] sm:$0xff]
  %v2917 = vld [vmem:[#allocation2 + $0x3f0] sm:$0xff]
  %v2918 = vld [vmem:[#allocation2 + $0x3f8] sm:$0xff]
  %v2919 = vsel %vm1127, %v2663, 0.0
  %v2920 = vsel %vm1128, %v2664, 0.0
  %v2921 = vsel %vm1129, %v2665, 0.0
  %v2922 = vsel %vm1130, %v2666, 0.0
  %v2923 = vsel %vm1131, %v2667, 0.0
  %v2924 = vsel %vm1132, %v2668, 0.0
  %v2925 = vsel %vm1133, %v2669, 0.0
  %v2926 = vsel %vm1134, %v2670, 0.0
  %v2927 = vsel %vm1135, %v2671, 0.0
  %v2928 = vsel %vm1136, %v2672, 0.0
  %v2929 = vsel %vm1137, %v2673, 0.0
  %v2930 = vsel %vm1138, %v2674, 0.0
  %v2931 = vsel %vm1139, %v2675, 0.0
  %v2932 = vsel %vm1140, %v2676, 0.0
  %v2933 = vsel %vm1141, %v2677, 0.0
  %v2934 = vsel %vm1142, %v2678, 0.0
  %v2935 = vsel %vm1143, %v2679, 0.0
  %v2936 = vsel %vm1144, %v2680, 0.0
  %v2937 = vsel %vm1145, %v2681, 0.0
  %v2938 = vsel %vm1146, %v2682, 0.0
  %v2939 = vsel %vm1147, %v2683, 0.0
  %v2940 = vsel %vm1148, %v2684, 0.0
  %v2941 = vsel %vm1149, %v2685, 0.0
  %v2942 = vsel %vm1150, %v2686, 0.0
  %v2943 = vsel %vm1151, %v2687, 0.0
  %v2944 = vsel %vm1152, %v2688, 0.0
  %v2945 = vsel %vm1153, %v2689, 0.0
  %v2946 = vsel %vm1154, %v2690, 0.0
  %v2947 = vsel %vm1155, %v2691, 0.0
  %v2948 = vsel %vm1156, %v2692, 0.0
  %v2949 = vsel %vm1157, %v2693, 0.0
  %v2950 = vsel %vm1158, %v2694, 0.0
  %v2951 = vsel %vm1159, %v2695, 0.0
  %v2952 = vsel %vm1160, %v2696, 0.0
  %v2953 = vsel %vm1161, %v2697, 0.0
  %v2954 = vsel %vm1162, %v2698, 0.0
  %v2955 = vsel %vm1163, %v2699, 0.0
  %v2956 = vsel %vm1164, %v2700, 0.0
  %v2957 = vsel %vm1165, %v2701, 0.0
  %v2958 = vsel %vm1166, %v2702, 0.0
  %v2959 = vsel %vm1167, %v2703, 0.0
  %v2960 = vsel %vm1168, %v2704, 0.0
  %v2961 = vsel %vm1169, %v2705, 0.0
  %v2962 = vsel %vm1170, %v2706, 0.0
  %v2963 = vsel %vm1171, %v2707, 0.0
  %v2964 = vsel %vm1172, %v2708, 0.0
  %v2965 = vsel %vm1173, %v2709, 0.0
  %v2966 = vsel %vm1174, %v2710, 0.0
  %v2967 = vsel %vm1175, %v2711, 0.0
  %v2968 = vsel %vm1176, %v2712, 0.0
  %v2969 = vsel %vm1177, %v2713, 0.0
  %v2970 = vsel %vm1178, %v2714, 0.0
  %v2971 = vsel %vm1179, %v2715, 0.0
  %v2972 = vsel %vm1180, %v2716, 0.0
  %v2973 = vsel %vm1181, %v2717, 0.0
  %v2974 = vsel %vm1182, %v2718, 0.0
  %v2975 = vsel %vm1183, %v2719, 0.0
  %v2976 = vsel %vm1184, %v2720, 0.0
  %v2977 = vsel %vm1185, %v2721, 0.0
  %v2978 = vsel %vm1186, %v2722, 0.0
  %v2979 = vsel %vm1187, %v2723, 0.0
  %v2980 = vsel %vm1188, %v2724, 0.0
  %v2981 = vsel %vm1189, %v2725, 0.0
  %v2982 = vsel %vm1190, %v2726, 0.0
  %v2983 = vsel %vm1191, %v2727, 0.0
  %v2984 = vsel %vm1192, %v2728, 0.0
  %v2985 = vsel %vm1193, %v2729, 0.0
  %v2986 = vsel %vm1194, %v2730, 0.0
  %v2987 = vsel %vm1195, %v2731, 0.0
  %v2988 = vsel %vm1196, %v2732, 0.0
  %v2989 = vsel %vm1197, %v2733, 0.0
  %v2990 = vsel %vm1198, %v2734, 0.0
  %v2991 = vsel %vm1199, %v2735, 0.0
  %v2992 = vsel %vm1200, %v2736, 0.0
  %v2993 = vsel %vm1201, %v2737, 0.0
  %v2994 = vsel %vm1202, %v2738, 0.0
  %v2995 = vsel %vm1203, %v2739, 0.0
  %v2996 = vsel %vm1204, %v2740, 0.0
  %v2997 = vsel %vm1205, %v2741, 0.0
  %v2998 = vsel %vm1206, %v2742, 0.0
  %v2999 = vsel %vm1207, %v2743, 0.0
  %v3000 = vsel %vm1208, %v2744, 0.0
  %v3001 = vsel %vm1209, %v2745, 0.0
  %v3002 = vsel %vm1210, %v2746, 0.0
  %v3003 = vsel %vm1211, %v2747, 0.0
  %v3004 = vsel %vm1212, %v2748, 0.0
  %v3005 = vsel %vm1213, %v2749, 0.0
  %v3006 = vsel %vm1214, %v2750, 0.0
  %v3007 = vsel %vm1215, %v2751, 0.0
  %v3008 = vsel %vm1216, %v2752, 0.0
  %v3009 = vsel %vm1217, %v2753, 0.0
  %v3010 = vsel %vm1218, %v2754, 0.0
  %v3011 = vsel %vm1219, %v2755, 0.0
  %v3012 = vsel %vm1220, %v2756, 0.0
  %v3013 = vsel %vm1221, %v2757, 0.0
  %v3014 = vsel %vm1222, %v2758, 0.0
  %v3015 = vsel %vm1223, %v2759, 0.0
  %v3016 = vsel %vm1224, %v2760, 0.0
  %v3017 = vsel %vm1225, %v2761, 0.0
  %v3018 = vsel %vm1226, %v2762, 0.0
  %v3019 = vsel %vm1227, %v2763, 0.0
  %v3020 = vsel %vm1228, %v2764, 0.0
  %v3021 = vsel %vm1229, %v2765, 0.0
  %v3022 = vsel %vm1230, %v2766, 0.0
  %v3023 = vsel %vm1231, %v2767, 0.0
  %v3024 = vsel %vm1232, %v2768, 0.0
  %v3025 = vsel %vm1233, %v2769, 0.0
  %v3026 = vsel %vm1234, %v2770, 0.0
  %v3027 = vsel %vm1235, %v2771, 0.0
  %v3028 = vsel %vm1236, %v2772, 0.0
  %v3029 = vsel %vm1237, %v2773, 0.0
  %v3030 = vsel %vm1238, %v2774, 0.0
  %v3031 = vsel %vm1239, %v2775, 0.0
  %v3032 = vsel %vm1240, %v2776, 0.0
  %v3033 = vsel %vm1241, %v2777, 0.0
  %v3034 = vsel %vm1242, %v2778, 0.0
  %v3035 = vsel %vm1243, %v2779, 0.0
  %v3036 = vsel %vm1244, %v2780, 0.0
  %v3037 = vsel %vm1245, %v2781, 0.0
  %v3038 = vsel %vm1246, %v2782, 0.0
  %v3039 = vsel %vm1247, %v2783, 0.0
  %v3040 = vsel %vm1248, %v2784, 0.0
  %v3041 = vsel %vm1249, %v2785, 0.0
  %v3042 = vsel %vm1250, %v2786, 0.0
  %v3043 = vsel %vm1251, %v2787, 0.0
  %v3044 = vsel %vm1252, %v2788, 0.0
  %v3045 = vsel %vm1253, %v2789, 0.0
  %v3046 = vsel %vm1254, %v2790, 0.0
  %v3047 = vadd.f32 %v2791, %v2919
  %v3048 = vadd.f32 %v2792, %v2920
  %v3049 = vadd.f32 %v2793, %v2921
  %v3050 = vadd.f32 %v2794, %v2922
  %v3051 = vadd.f32 %v2795, %v2923
  %v3052 = vadd.f32 %v2796, %v2924
  %v3053 = vadd.f32 %v2797, %v2925
  %v3054 = vadd.f32 %v2798, %v2926
  %v3055 = vadd.f32 %v2799, %v2927
  %v3056 = vadd.f32 %v2800, %v2928
  %v3057 = vadd.f32 %v2801, %v2929
  %v3058 = vadd.f32 %v2802, %v2930
  %v3059 = vadd.f32 %v2803, %v2931
  %v3060 = vadd.f32 %v2804, %v2932
  %v3061 = vadd.f32 %v2805, %v2933
  %v3062 = vadd.f32 %v2806, %v2934
  %v3063 = vadd.f32 %v2807, %v2935
  %v3064 = vadd.f32 %v2808, %v2936
  %v3065 = vadd.f32 %v2809, %v2937
  %v3066 = vadd.f32 %v2810, %v2938
  %v3067 = vadd.f32 %v2811, %v2939
  %v3068 = vadd.f32 %v2812, %v2940
  %v3069 = vadd.f32 %v2813, %v2941
  %v3070 = vadd.f32 %v2814, %v2942
  %v3071 = vadd.f32 %v2815, %v2943
  %v3072 = vadd.f32 %v2816, %v2944
  %v3073 = vadd.f32 %v2817, %v2945
  %v3074 = vadd.f32 %v2818, %v2946
  %v3075 = vadd.f32 %v2819, %v2947
  %v3076 = vadd.f32 %v2820, %v2948
  %v3077 = vadd.f32 %v2821, %v2949
  %v3078 = vadd.f32 %v2822, %v2950
  %v3079 = vadd.f32 %v2823, %v2951
  %v3080 = vadd.f32 %v2824, %v2952
  %v3081 = vadd.f32 %v2825, %v2953
  %v3082 = vadd.f32 %v2826, %v2954
  %v3083 = vadd.f32 %v2827, %v2955
  %v3084 = vadd.f32 %v2828, %v2956
  %v3085 = vadd.f32 %v2829, %v2957
  %v3086 = vadd.f32 %v2830, %v2958
  %v3087 = vadd.f32 %v2831, %v2959
  %v3088 = vadd.f32 %v2832, %v2960
  %v3089 = vadd.f32 %v2833, %v2961
  %v3090 = vadd.f32 %v2834, %v2962
  %v3091 = vadd.f32 %v2835, %v2963
  %v3092 = vadd.f32 %v2836, %v2964
  %v3093 = vadd.f32 %v2837, %v2965
  %v3094 = vadd.f32 %v2838, %v2966
  %v3095 = vadd.f32 %v2839, %v2967
  %v3096 = vadd.f32 %v2840, %v2968
  %v3097 = vadd.f32 %v2841, %v2969
  %v3098 = vadd.f32 %v2842, %v2970
  %v3099 = vadd.f32 %v2843, %v2971
  %v3100 = vadd.f32 %v2844, %v2972
  %v3101 = vadd.f32 %v2845, %v2973
  %v3102 = vadd.f32 %v2846, %v2974
  %v3103 = vadd.f32 %v2847, %v2975
  %v3104 = vadd.f32 %v2848, %v2976
  %v3105 = vadd.f32 %v2849, %v2977
  %v3106 = vadd.f32 %v2850, %v2978
  %v3107 = vadd.f32 %v2851, %v2979
  %v3108 = vadd.f32 %v2852, %v2980
  %v3109 = vadd.f32 %v2853, %v2981
  %v3110 = vadd.f32 %v2854, %v2982
  %v3111 = vadd.f32 %v2855, %v2983
  %v3112 = vadd.f32 %v2856, %v2984
  %v3113 = vadd.f32 %v2857, %v2985
  %v3114 = vadd.f32 %v2858, %v2986
  %v3115 = vadd.f32 %v2859, %v2987
  %v3116 = vadd.f32 %v2860, %v2988
  %v3117 = vadd.f32 %v2861, %v2989
  %v3118 = vadd.f32 %v2862, %v2990
  %v3119 = vadd.f32 %v2863, %v2991
  %v3120 = vadd.f32 %v2864, %v2992
  %v3121 = vadd.f32 %v2865, %v2993
  %v3122 = vadd.f32 %v2866, %v2994
  %v3123 = vadd.f32 %v2867, %v2995
  %v3124 = vadd.f32 %v2868, %v2996
  %v3125 = vadd.f32 %v2869, %v2997
  %v3126 = vadd.f32 %v2870, %v2998
  %v3127 = vadd.f32 %v2871, %v2999
  %v3128 = vadd.f32 %v2872, %v3000
  %v3129 = vadd.f32 %v2873, %v3001
  %v3130 = vadd.f32 %v2874, %v3002
  %v3131 = vadd.f32 %v2875, %v3003
  %v3132 = vadd.f32 %v2876, %v3004
  %v3133 = vadd.f32 %v2877, %v3005
  %v3134 = vadd.f32 %v2878, %v3006
  %v3135 = vadd.f32 %v2879, %v3007
  %v3136 = vadd.f32 %v2880, %v3008
  %v3137 = vadd.f32 %v2881, %v3009
  %v3138 = vadd.f32 %v2882, %v3010
  %v3139 = vadd.f32 %v2883, %v3011
  %v3140 = vadd.f32 %v2884, %v3012
  %v3141 = vadd.f32 %v2885, %v3013
  %v3142 = vadd.f32 %v2886, %v3014
  %v3143 = vadd.f32 %v2887, %v3015
  %v3144 = vadd.f32 %v2888, %v3016
  %v3145 = vadd.f32 %v2889, %v3017
  %v3146 = vadd.f32 %v2890, %v3018
  %v3147 = vadd.f32 %v2891, %v3019
  %v3148 = vadd.f32 %v2892, %v3020
  %v3149 = vadd.f32 %v2893, %v3021
  %v3150 = vadd.f32 %v2894, %v3022
  %v3151 = vadd.f32 %v2895, %v3023
  %v3152 = vadd.f32 %v2896, %v3024
  %v3153 = vadd.f32 %v2897, %v3025
  %v3154 = vadd.f32 %v2898, %v3026
  %v3155 = vadd.f32 %v2899, %v3027
  %v3156 = vadd.f32 %v2900, %v3028
  %v3157 = vadd.f32 %v2901, %v3029
  %v3158 = vadd.f32 %v2902, %v3030
  %v3159 = vadd.f32 %v2903, %v3031
  %v3160 = vadd.f32 %v2904, %v3032
  %v3161 = vadd.f32 %v2905, %v3033
  %v3162 = vadd.f32 %v2906, %v3034
  %v3163 = vadd.f32 %v2907, %v3035
  %v3164 = vadd.f32 %v2908, %v3036
  %v3165 = vadd.f32 %v2909, %v3037
  %v3166 = vadd.f32 %v2910, %v3038
  %v3167 = vadd.f32 %v2911, %v3039
  %v3168 = vadd.f32 %v2912, %v3040
  %v3169 = vadd.f32 %v2913, %v3041
  %v3170 = vadd.f32 %v2914, %v3042
  %v3171 = vadd.f32 %v2915, %v3043
  %v3172 = vadd.f32 %v2916, %v3044
  %v3173 = vadd.f32 %v2917, %v3045
  %v3174 = vadd.f32 %v2918, %v3046
  %3175 = vst [vmem:[#allocation2] sm:$0xff] %v3047
  %3176 = vst [vmem:[#allocation2 + $0x8] sm:$0xff] %v3048
  %3177 = vst [vmem:[#allocation2 + $0x10] sm:$0xff] %v3049
  %3178 = vst [vmem:[#allocation2 + $0x18] sm:$0xff] %v3050
  %3179 = vst [vmem:[#allocation2 + $0x20] sm:$0xff] %v3051
  %3180 = vst [vmem:[#allocation2 + $0x28] sm:$0xff] %v3052
  %3181 = vst [vmem:[#allocation2 + $0x30] sm:$0xff] %v3053
  %3182 = vst [vmem:[#allocation2 + $0x38] sm:$0xff] %v3054
  %3183 = vst [vmem:[#allocation2 + $0x40] sm:$0xff] %v3055
  %3184 = vst [vmem:[#allocation2 + $0x48] sm:$0xff] %v3056
  %3185 = vst [vmem:[#allocation2 + $0x50] sm:$0xff] %v3057
  %3186 = vst [vmem:[#allocation2 + $0x58] sm:$0xff] %v3058
  %3187 = vst [vmem:[#allocation2 + $0x60] sm:$0xff] %v3059
  %3188 = vst [vmem:[#allocation2 + $0x68] sm:$0xff] %v3060
  %3189 = vst [vmem:[#allocation2 + $0x70] sm:$0xff] %v3061
  %3190 = vst [vmem:[#allocation2 + $0x78] sm:$0xff] %v3062
  %3191 = vst [vmem:[#allocation2 + $0x80] sm:$0xff] %v3063
  %3192 = vst [vmem:[#allocation2 + $0x88] sm:$0xff] %v3064
  %3193 = vst [vmem:[#allocation2 + $0x90] sm:$0xff] %v3065
  %3194 = vst [vmem:[#allocation2 + $0x98] sm:$0xff] %v3066
  %3195 = vst [vmem:[#allocation2 + $0xa0] sm:$0xff] %v3067
  %3196 = vst [vmem:[#allocation2 + $0xa8] sm:$0xff] %v3068
  %3197 = vst [vmem:[#allocation2 + $0xb0] sm:$0xff] %v3069
  %3198 = vst [vmem:[#allocation2 + $0xb8] sm:$0xff] %v3070
  %3199 = vst [vmem:[#allocation2 + $0xc0] sm:$0xff] %v3071
  %3200 = vst [vmem:[#allocation2 + $0xc8] sm:$0xff] %v3072
  %3201 = vst [vmem:[#allocation2 + $0xd0] sm:$0xff] %v3073
  %3202 = vst [vmem:[#allocation2 + $0xd8] sm:$0xff] %v3074
  %3203 = vst [vmem:[#allocation2 + $0xe0] sm:$0xff] %v3075
  %3204 = vst [vmem:[#allocation2 + $0xe8] sm:$0xff] %v3076
  %3205 = vst [vmem:[#allocation2 + $0xf0] sm:$0xff] %v3077
  %3206 = vst [vmem:[#allocation2 + $0xf8] sm:$0xff] %v3078
  %3207 = vst [vmem:[#allocation2 + $0x100] sm:$0xff] %v3079
  %3208 = vst [vmem:[#allocation2 + $0x108] sm:$0xff] %v3080
  %3209 = vst [vmem:[#allocation2 + $0x110] sm:$0xff] %v3081
  %3210 = vst [vmem:[#allocation2 + $0x118] sm:$0xff] %v3082
  %3211 = vst [vmem:[#allocation2 + $0x120] sm:$0xff] %v3083
  %3212 = vst [vmem:[#allocation2 + $0x128] sm:$0xff] %v3084
  %3213 = vst [vmem:[#allocation2 + $0x130] sm:$0xff] %v3085
  %3214 = vst [vmem:[#allocation2 + $0x138] sm:$0xff] %v3086
  %3215 = vst [vmem:[#allocation2 + $0x140] sm:$0xff] %v3087
  %3216 = vst [vmem:[#allocation2 + $0x148] sm:$0xff] %v3088
  %3217 = vst [vmem:[#allocation2 + $0x150] sm:$0xff] %v3089
  %3218 = vst [vmem:[#allocation2 + $0x158] sm:$0xff] %v3090
  %3219 = vst [vmem:[#allocation2 + $0x160] sm:$0xff] %v3091
  %3220 = vst [vmem:[#allocation2 + $0x168] sm:$0xff] %v3092
  %3221 = vst [vmem:[#allocation2 + $0x170] sm:$0xff] %v3093
  %3222 = vst [vmem:[#allocation2 + $0x178] sm:$0xff] %v3094
  %3223 = vst [vmem:[#allocation2 + $0x180] sm:$0xff] %v3095
  %3224 = vst [vmem:[#allocation2 + $0x188] sm:$0xff] %v3096
  %3225 = vst [vmem:[#allocation2 + $0x190] sm:$0xff] %v3097
  %3226 = vst [vmem:[#allocation2 + $0x198] sm:$0xff] %v3098
  %3227 = vst [vmem:[#allocation2 + $0x1a0] sm:$0xff] %v3099
  %3228 = vst [vmem:[#allocation2 + $0x1a8] sm:$0xff] %v3100
  %3229 = vst [vmem:[#allocation2 + $0x1b0] sm:$0xff] %v3101
  %3230 = vst [vmem:[#allocation2 + $0x1b8] sm:$0xff] %v3102
  %3231 = vst [vmem:[#allocation2 + $0x1c0] sm:$0xff] %v3103
  %3232 = vst [vmem:[#allocation2 + $0x1c8] sm:$0xff] %v3104
  %3233 = vst [vmem:[#allocation2 + $0x1d0] sm:$0xff] %v3105
  %3234 = vst [vmem:[#allocation2 + $0x1d8] sm:$0xff] %v3106
  %3235 = vst [vmem:[#allocation2 + $0x1e0] sm:$0xff] %v3107
  %3236 = vst [vmem:[#allocation2 + $0x1e8] sm:$0xff] %v3108
  %3237 = vst [vmem:[#allocation2 + $0x1f0] sm:$0xff] %v3109
  %3238 = vst [vmem:[#allocation2 + $0x1f8] sm:$0xff] %v3110
  %3239 = vst [vmem:[#allocation2 + $0x200] sm:$0xff] %v3111
  %3240 = vst [vmem:[#allocation2 + $0x208] sm:$0xff] %v3112
  %3241 = vst [vmem:[#allocation2 + $0x210] sm:$0xff] %v3113
  %3242 = vst [vmem:[#allocation2 + $0x218] sm:$0xff] %v3114
  %3243 = vst [vmem:[#allocation2 + $0x220] sm:$0xff] %v3115
  %3244 = vst [vmem:[#allocation2 + $0x228] sm:$0xff] %v3116
  %3245 = vst [vmem:[#allocation2 + $0x230] sm:$0xff] %v3117
  %3246 = vst [vmem:[#allocation2 + $0x238] sm:$0xff] %v3118
  %3247 = vst [vmem:[#allocation2 + $0x240] sm:$0xff] %v3119
  %3248 = vst [vmem:[#allocation2 + $0x248] sm:$0xff] %v3120
  %3249 = vst [vmem:[#allocation2 + $0x250] sm:$0xff] %v3121
  %3250 = vst [vmem:[#allocation2 + $0x258] sm:$0xff] %v3122
  %3251 = vst [vmem:[#allocation2 + $0x260] sm:$0xff] %v3123
  %3252 = vst [vmem:[#allocation2 + $0x268] sm:$0xff] %v3124
  %3253 = vst [vmem:[#allocation2 + $0x270] sm:$0xff] %v3125
  %3254 = vst [vmem:[#allocation2 + $0x278] sm:$0xff] %v3126
  %3255 = vst [vmem:[#allocation2 + $0x280] sm:$0xff] %v3127
  %3256 = vst [vmem:[#allocation2 + $0x288] sm:$0xff] %v3128
  %3257 = vst [vmem:[#allocation2 + $0x290] sm:$0xff] %v3129
  %3258 = vst [vmem:[#allocation2 + $0x298] sm:$0xff] %v3130
  %3259 = vst [vmem:[#allocation2 + $0x2a0] sm:$0xff] %v3131
  %3260 = vst [vmem:[#allocation2 + $0x2a8] sm:$0xff] %v3132
  %3261 = vst [vmem:[#allocation2 + $0x2b0] sm:$0xff] %v3133
  %3262 = vst [vmem:[#allocation2 + $0x2b8] sm:$0xff] %v3134
  %3263 = vst [vmem:[#allocation2 + $0x2c0] sm:$0xff] %v3135
  %3264 = vst [vmem:[#allocation2 + $0x2c8] sm:$0xff] %v3136
  %3265 = vst [vmem:[#allocation2 + $0x2d0] sm:$0xff] %v3137
  %3266 = vst [vmem:[#allocation2 + $0x2d8] sm:$0xff] %v3138
  %3267 = vst [vmem:[#allocation2 + $0x2e0] sm:$0xff] %v3139
  %3268 = vst [vmem:[#allocation2 + $0x2e8] sm:$0xff] %v3140
  %3269 = vst [vmem:[#allocation2 + $0x2f0] sm:$0xff] %v3141
  %3270 = vst [vmem:[#allocation2 + $0x2f8] sm:$0xff] %v3142
  %3271 = vst [vmem:[#allocation2 + $0x300] sm:$0xff] %v3143
  %3272 = vst [vmem:[#allocation2 + $0x308] sm:$0xff] %v3144
  %3273 = vst [vmem:[#allocation2 + $0x310] sm:$0xff] %v3145
  %3274 = vst [vmem:[#allocation2 + $0x318] sm:$0xff] %v3146
  %3275 = vst [vmem:[#allocation2 + $0x320] sm:$0xff] %v3147
  %3276 = vst [vmem:[#allocation2 + $0x328] sm:$0xff] %v3148
  %3277 = vst [vmem:[#allocation2 + $0x330] sm:$0xff] %v3149
  %3278 = vst [vmem:[#allocation2 + $0x338] sm:$0xff] %v3150
  %3279 = vst [vmem:[#allocation2 + $0x340] sm:$0xff] %v3151
  %3280 = vst [vmem:[#allocation2 + $0x348] sm:$0xff] %v3152
  %3281 = vst [vmem:[#allocation2 + $0x350] sm:$0xff] %v3153
  %3282 = vst [vmem:[#allocation2 + $0x358] sm:$0xff] %v3154
  %3283 = vst [vmem:[#allocation2 + $0x360] sm:$0xff] %v3155
  %3284 = vst [vmem:[#allocation2 + $0x368] sm:$0xff] %v3156
  %3285 = vst [vmem:[#allocation2 + $0x370] sm:$0xff] %v3157
  %3286 = vst [vmem:[#allocation2 + $0x378] sm:$0xff] %v3158
  %3287 = vst [vmem:[#allocation2 + $0x380] sm:$0xff] %v3159
  %3288 = vst [vmem:[#allocation2 + $0x388] sm:$0xff] %v3160
  %3289 = vst [vmem:[#allocation2 + $0x390] sm:$0xff] %v3161
  %3290 = vst [vmem:[#allocation2 + $0x398] sm:$0xff] %v3162
  %3291 = vst [vmem:[#allocation2 + $0x3a0] sm:$0xff] %v3163
  %3292 = vst [vmem:[#allocation2 + $0x3a8] sm:$0xff] %v3164
  %3293 = vst [vmem:[#allocation2 + $0x3b0] sm:$0xff] %v3165
  %3294 = vst [vmem:[#allocation2 + $0x3b8] sm:$0xff] %v3166
  %3295 = vst [vmem:[#allocation2 + $0x3c0] sm:$0xff] %v3167
  %3296 = vst [vmem:[#allocation2 + $0x3c8] sm:$0xff] %v3168
  %3297 = vst [vmem:[#allocation2 + $0x3d0] sm:$0xff] %v3169
  %3298 = vst [vmem:[#allocation2 + $0x3d8] sm:$0xff] %v3170
  %3299 = vst [vmem:[#allocation2 + $0x3e0] sm:$0xff] %v3171
  %3300 = vst [vmem:[#allocation2 + $0x3e8] sm:$0xff] %v3172
  %3301 = vst [vmem:[#allocation2 + $0x3f0] sm:$0xff] %v3173
  %3302 = vst [vmem:[#allocation2 + $0x3f8] sm:$0xff] %v3174
  %v3303 = vld [vmem:[#allocation3] sm:$0xff]
  %v3304 = vld [vmem:[#allocation3 + $0x8] sm:$0xff]
  %v3305 = vld [vmem:[#allocation3 + $0x10] sm:$0xff]
  %v3306 = vld [vmem:[#allocation3 + $0x18] sm:$0xff]
  %v3307 = vld [vmem:[#allocation3 + $0x20] sm:$0xff]
  %v3308 = vld [vmem:[#allocation3 + $0x28] sm:$0xff]
  %v3309 = vld [vmem:[#allocation3 + $0x30] sm:$0xff]
  %v3310 = vld [vmem:[#allocation3 + $0x38] sm:$0xff]
  %v3311 = vld [vmem:[#allocation3 + $0x40] sm:$0xff]
  %v3312 = vld [vmem:[#allocation3 + $0x48] sm:$0xff]
  %v3313 = vld [vmem:[#allocation3 + $0x50] sm:$0xff]
  %v3314 = vld [vmem:[#allocation3 + $0x58] sm:$0xff]
  %v3315 = vld [vmem:[#allocation3 + $0x60] sm:$0xff]
  %v3316 = vld [vmem:[#allocation3 + $0x68] sm:$0xff]
  %v3317 = vld [vmem:[#allocation3 + $0x70] sm:$0xff]
  %v3318 = vld [vmem:[#allocation3 + $0x78] sm:$0xff]
  %v3319 = vld [vmem:[#allocation3 + $0x80] sm:$0xff]
  %v3320 = vld [vmem:[#allocation3 + $0x88] sm:$0xff]
  %v3321 = vld [vmem:[#allocation3 + $0x90] sm:$0xff]
  %v3322 = vld [vmem:[#allocation3 + $0x98] sm:$0xff]
  %v3323 = vld [vmem:[#allocation3 + $0xa0] sm:$0xff]
  %v3324 = vld [vmem:[#allocation3 + $0xa8] sm:$0xff]
  %v3325 = vld [vmem:[#allocation3 + $0xb0] sm:$0xff]
  %v3326 = vld [vmem:[#allocation3 + $0xb8] sm:$0xff]
  %v3327 = vld [vmem:[#allocation3 + $0xc0] sm:$0xff]
  %v3328 = vld [vmem:[#allocation3 + $0xc8] sm:$0xff]
  %v3329 = vld [vmem:[#allocation3 + $0xd0] sm:$0xff]
  %v3330 = vld [vmem:[#allocation3 + $0xd8] sm:$0xff]
  %v3331 = vld [vmem:[#allocation3 + $0xe0] sm:$0xff]
  %v3332 = vld [vmem:[#allocation3 + $0xe8] sm:$0xff]
  %v3333 = vld [vmem:[#allocation3 + $0xf0] sm:$0xff]
  %v3334 = vld [vmem:[#allocation3 + $0xf8] sm:$0xff]
  %v3335 = vld [vmem:[#allocation3 + $0x100] sm:$0xff]
  %v3336 = vld [vmem:[#allocation3 + $0x108] sm:$0xff]
  %v3337 = vld [vmem:[#allocation3 + $0x110] sm:$0xff]
  %v3338 = vld [vmem:[#allocation3 + $0x118] sm:$0xff]
  %v3339 = vld [vmem:[#allocation3 + $0x120] sm:$0xff]
  %v3340 = vld [vmem:[#allocation3 + $0x128] sm:$0xff]
  %v3341 = vld [vmem:[#allocation3 + $0x130] sm:$0xff]
  %v3342 = vld [vmem:[#allocation3 + $0x138] sm:$0xff]
  %v3343 = vld [vmem:[#allocation3 + $0x140] sm:$0xff]
  %v3344 = vld [vmem:[#allocation3 + $0x148] sm:$0xff]
  %v3345 = vld [vmem:[#allocation3 + $0x150] sm:$0xff]
  %v3346 = vld [vmem:[#allocation3 + $0x158] sm:$0xff]
  %v3347 = vld [vmem:[#allocation3 + $0x160] sm:$0xff]
  %v3348 = vld [vmem:[#allocation3 + $0x168] sm:$0xff]
  %v3349 = vld [vmem:[#allocation3 + $0x170] sm:$0xff]
  %v3350 = vld [vmem:[#allocation3 + $0x178] sm:$0xff]
  %v3351 = vld [vmem:[#allocation3 + $0x180] sm:$0xff]
  %v3352 = vld [vmem:[#allocation3 + $0x188] sm:$0xff]
  %v3353 = vld [vmem:[#allocation3 + $0x190] sm:$0xff]
  %v3354 = vld [vmem:[#allocation3 + $0x198] sm:$0xff]
  %v3355 = vld [vmem:[#allocation3 + $0x1a0] sm:$0xff]
  %v3356 = vld [vmem:[#allocation3 + $0x1a8] sm:$0xff]
  %v3357 = vld [vmem:[#allocation3 + $0x1b0] sm:$0xff]
  %v3358 = vld [vmem:[#allocation3 + $0x1b8] sm:$0xff]
  %v3359 = vld [vmem:[#allocation3 + $0x1c0] sm:$0xff]
  %v3360 = vld [vmem:[#allocation3 + $0x1c8] sm:$0xff]
  %v3361 = vld [vmem:[#allocation3 + $0x1d0] sm:$0xff]
  %v3362 = vld [vmem:[#allocation3 + $0x1d8] sm:$0xff]
  %v3363 = vld [vmem:[#allocation3 + $0x1e0] sm:$0xff]
  %v3364 = vld [vmem:[#allocation3 + $0x1e8] sm:$0xff]
  %v3365 = vld [vmem:[#allocation3 + $0x1f0] sm:$0xff]
  %v3366 = vld [vmem:[#allocation3 + $0x1f8] sm:$0xff]
  %v3367 = vld [vmem:[#allocation3 + $0x200] sm:$0xff]
  %v3368 = vld [vmem:[#allocation3 + $0x208] sm:$0xff]
  %v3369 = vld [vmem:[#allocation3 + $0x210] sm:$0xff]
  %v3370 = vld [vmem:[#allocation3 + $0x218] sm:$0xff]
  %v3371 = vld [vmem:[#allocation3 + $0x220] sm:$0xff]
  %v3372 = vld [vmem:[#allocation3 + $0x228] sm:$0xff]
  %v3373 = vld [vmem:[#allocation3 + $0x230] sm:$0xff]
  %v3374 = vld [vmem:[#allocation3 + $0x238] sm:$0xff]
  %v3375 = vld [vmem:[#allocation3 + $0x240] sm:$0xff]
  %v3376 = vld [vmem:[#allocation3 + $0x248] sm:$0xff]
  %v3377 = vld [vmem:[#allocation3 + $0x250] sm:$0xff]
  %v3378 = vld [vmem:[#allocation3 + $0x258] sm:$0xff]
  %v3379 = vld [vmem:[#allocation3 + $0x260] sm:$0xff]
  %v3380 = vld [vmem:[#allocation3 + $0x268] sm:$0xff]
  %v3381 = vld [vmem:[#allocation3 + $0x270] sm:$0xff]
  %v3382 = vld [vmem:[#allocation3 + $0x278] sm:$0xff]
  %v3383 = vld [vmem:[#allocation3 + $0x280] sm:$0xff]
  %v3384 = vld [vmem:[#allocation3 + $0x288] sm:$0xff]
  %v3385 = vld [vmem:[#allocation3 + $0x290] sm:$0xff]
  %v3386 = vld [vmem:[#allocation3 + $0x298] sm:$0xff]
  %v3387 = vld [vmem:[#allocation3 + $0x2a0] sm:$0xff]
  %v3388 = vld [vmem:[#allocation3 + $0x2a8] sm:$0xff]
  %v3389 = vld [vmem:[#allocation3 + $0x2b0] sm:$0xff]
  %v3390 = vld [vmem:[#allocation3 + $0x2b8] sm:$0xff]
  %v3391 = vld [vmem:[#allocation3 + $0x2c0] sm:$0xff]
  %v3392 = vld [vmem:[#allocation3 + $0x2c8] sm:$0xff]
  %v3393 = vld [vmem:[#allocation3 + $0x2d0] sm:$0xff]
  %v3394 = vld [vmem:[#allocation3 + $0x2d8] sm:$0xff]
  %v3395 = vld [vmem:[#allocation3 + $0x2e0] sm:$0xff]
  %v3396 = vld [vmem:[#allocation3 + $0x2e8] sm:$0xff]
  %v3397 = vld [vmem:[#allocation3 + $0x2f0] sm:$0xff]
  %v3398 = vld [vmem:[#allocation3 + $0x2f8] sm:$0xff]
  %v3399 = vld [vmem:[#allocation3 + $0x300] sm:$0xff]
  %v3400 = vld [vmem:[#allocation3 + $0x308] sm:$0xff]
  %v3401 = vld [vmem:[#allocation3 + $0x310] sm:$0xff]
  %v3402 = vld [vmem:[#allocation3 + $0x318] sm:$0xff]
  %v3403 = vld [vmem:[#allocation3 + $0x320] sm:$0xff]
  %v3404 = vld [vmem:[#allocation3 + $0x328] sm:$0xff]
  %v3405 = vld [vmem:[#allocation3 + $0x330] sm:$0xff]
  %v3406 = vld [vmem:[#allocation3 + $0x338] sm:$0xff]
  %v3407 = vld [vmem:[#allocation3 + $0x340] sm:$0xff]
  %v3408 = vld [vmem:[#allocation3 + $0x348] sm:$0xff]
  %v3409 = vld [vmem:[#allocation3 + $0x350] sm:$0xff]
  %v3410 = vld [vmem:[#allocation3 + $0x358] sm:$0xff]
  %v3411 = vld [vmem:[#allocation3 + $0x360] sm:$0xff]
  %v3412 = vld [vmem:[#allocation3 + $0x368] sm:$0xff]
  %v3413 = vld [vmem:[#allocation3 + $0x370] sm:$0xff]
  %v3414 = vld [vmem:[#allocation3 + $0x378] sm:$0xff]
  %v3415 = vld [vmem:[#allocation3 + $0x380] sm:$0xff]
  %v3416 = vld [vmem:[#allocation3 + $0x388] sm:$0xff]
  %v3417 = vld [vmem:[#allocation3 + $0x390] sm:$0xff]
  %v3418 = vld [vmem:[#allocation3 + $0x398] sm:$0xff]
  %v3419 = vld [vmem:[#allocation3 + $0x3a0] sm:$0xff]
  %v3420 = vld [vmem:[#allocation3 + $0x3a8] sm:$0xff]
  %v3421 = vld [vmem:[#allocation3 + $0x3b0] sm:$0xff]
  %v3422 = vld [vmem:[#allocation3 + $0x3b8] sm:$0xff]
  %v3423 = vld [vmem:[#allocation3 + $0x3c0] sm:$0xff]
  %v3424 = vld [vmem:[#allocation3 + $0x3c8] sm:$0xff]
  %v3425 = vld [vmem:[#allocation3 + $0x3d0] sm:$0xff]
  %v3426 = vld [vmem:[#allocation3 + $0x3d8] sm:$0xff]
  %v3427 = vld [vmem:[#allocation3 + $0x3e0] sm:$0xff]
  %v3428 = vld [vmem:[#allocation3 + $0x3e8] sm:$0xff]
  %v3429 = vld [vmem:[#allocation3 + $0x3f0] sm:$0xff]
  %v3430 = vld [vmem:[#allocation3 + $0x3f8] sm:$0xff]
  %v3431 = vsel %vm1127, 1.0, 0.0
  %v3432 = vsel %vm1128, 1.0, 0.0
  %v3433 = vsel %vm1129, 1.0, 0.0
  %v3434 = vsel %vm1130, 1.0, 0.0
  %v3435 = vsel %vm1131, 1.0, 0.0
  %v3436 = vsel %vm1132, 1.0, 0.0
  %v3437 = vsel %vm1133, 1.0, 0.0
  %v3438 = vsel %vm1134, 1.0, 0.0
  %v3439 = vsel %vm1135, 1.0, 0.0
  %v3440 = vsel %vm1136, 1.0, 0.0
  %v3441 = vsel %vm1137, 1.0, 0.0
  %v3442 = vsel %vm1138, 1.0, 0.0
  %v3443 = vsel %vm1139, 1.0, 0.0
  %v3444 = vsel %vm1140, 1.0, 0.0
  %v3445 = vsel %vm1141, 1.0, 0.0
  %v3446 = vsel %vm1142, 1.0, 0.0
  %v3447 = vsel %vm1143, 1.0, 0.0
  %v3448 = vsel %vm1144, 1.0, 0.0
  %v3449 = vsel %vm1145, 1.0, 0.0
  %v3450 = vsel %vm1146, 1.0, 0.0
  %v3451 = vsel %vm1147, 1.0, 0.0
  %v3452 = vsel %vm1148, 1.0, 0.0
  %v3453 = vsel %vm1149, 1.0, 0.0
  %v3454 = vsel %vm1150, 1.0, 0.0
  %v3455 = vsel %vm1151, 1.0, 0.0
  %v3456 = vsel %vm1152, 1.0, 0.0
  %v3457 = vsel %vm1153, 1.0, 0.0
  %v3458 = vsel %vm1154, 1.0, 0.0
  %v3459 = vsel %vm1155, 1.0, 0.0
  %v3460 = vsel %vm1156, 1.0, 0.0
  %v3461 = vsel %vm1157, 1.0, 0.0
  %v3462 = vsel %vm1158, 1.0, 0.0
  %v3463 = vsel %vm1159, 1.0, 0.0
  %v3464 = vsel %vm1160, 1.0, 0.0
  %v3465 = vsel %vm1161, 1.0, 0.0
  %v3466 = vsel %vm1162, 1.0, 0.0
  %v3467 = vsel %vm1163, 1.0, 0.0
  %v3468 = vsel %vm1164, 1.0, 0.0
  %v3469 = vsel %vm1165, 1.0, 0.0
  %v3470 = vsel %vm1166, 1.0, 0.0
  %v3471 = vsel %vm1167, 1.0, 0.0
  %v3472 = vsel %vm1168, 1.0, 0.0
  %v3473 = vsel %vm1169, 1.0, 0.0
  %v3474 = vsel %vm1170, 1.0, 0.0
  %v3475 = vsel %vm1171, 1.0, 0.0
  %v3476 = vsel %vm1172, 1.0, 0.0
  %v3477 = vsel %vm1173, 1.0, 0.0
  %v3478 = vsel %vm1174, 1.0, 0.0
  %v3479 = vsel %vm1175, 1.0, 0.0
  %v3480 = vsel %vm1176, 1.0, 0.0
  %v3481 = vsel %vm1177, 1.0, 0.0
  %v3482 = vsel %vm1178, 1.0, 0.0
  %v3483 = vsel %vm1179, 1.0, 0.0
  %v3484 = vsel %vm1180, 1.0, 0.0
  %v3485 = vsel %vm1181, 1.0, 0.0
  %v3486 = vsel %vm1182, 1.0, 0.0
  %v3487 = vsel %vm1183, 1.0, 0.0
  %v3488 = vsel %vm1184, 1.0, 0.0
  %v3489 = vsel %vm1185, 1.0, 0.0
  %v3490 = vsel %vm1186, 1.0, 0.0
  %v3491 = vsel %vm1187, 1.0, 0.0
  %v3492 = vsel %vm1188, 1.0, 0.0
  %v3493 = vsel %vm1189, 1.0, 0.0
  %v3494 = vsel %vm1190, 1.0, 0.0
  %v3495 = vsel %vm1191, 1.0, 0.0
  %v3496 = vsel %vm1192, 1.0, 0.0
  %v3497 = vsel %vm1193, 1.0, 0.0
  %v3498 = vsel %vm1194, 1.0, 0.0
  %v3499 = vsel %vm1195, 1.0, 0.0
  %v3500 = vsel %vm1196, 1.0, 0.0
  %v3501 = vsel %vm1197, 1.0, 0.0
  %v3502 = vsel %vm1198, 1.0, 0.0
  %v3503 = vsel %vm1199, 1.0, 0.0
  %v3504 = vsel %vm1200, 1.0, 0.0
  %v3505 = vsel %vm1201, 1.0, 0.0
  %v3506 = vsel %vm1202, 1.0, 0.0
  %v3507 = vsel %vm1203, 1.0, 0.0
  %v3508 = vsel %vm1204, 1.0, 0.0
  %v3509 = vsel %vm1205, 1.0, 0.0
  %v3510 = vsel %vm1206, 1.0, 0.0
  %v3511 = vsel %vm1207, 1.0, 0.0
  %v3512 = vsel %vm1208, 1.0, 0.0
  %v3513 = vsel %vm1209, 1.0, 0.0
  %v3514 = vsel %vm1210, 1.0, 0.0
  %v3515 = vsel %vm1211, 1.0, 0.0
  %v3516 = vsel %vm1212, 1.0, 0.0
  %v3517 = vsel %vm1213, 1.0, 0.0
  %v3518 = vsel %vm1214, 1.0, 0.0
  %v3519 = vsel %vm1215, 1.0, 0.0
  %v3520 = vsel %vm1216, 1.0, 0.0
  %v3521 = vsel %vm1217, 1.0, 0.0
  %v3522 = vsel %vm1218, 1.0, 0.0
  %v3523 = vsel %vm1219, 1.0, 0.0
  %v3524 = vsel %vm1220, 1.0, 0.0
  %v3525 = vsel %vm1221, 1.0, 0.0
  %v3526 = vsel %vm1222, 1.0, 0.0
  %v3527 = vsel %vm1223, 1.0, 0.0
  %v3528 = vsel %vm1224, 1.0, 0.0
  %v3529 = vsel %vm1225, 1.0, 0.0
  %v3530 = vsel %vm1226, 1.0, 0.0
  %v3531 = vsel %vm1227, 1.0, 0.0
  %v3532 = vsel %vm1228, 1.0, 0.0
  %v3533 = vsel %vm1229, 1.0, 0.0
  %v3534 = vsel %vm1230, 1.0, 0.0
  %v3535 = vsel %vm1231, 1.0, 0.0
  %v3536 = vsel %vm1232, 1.0, 0.0
  %v3537 = vsel %vm1233, 1.0, 0.0
  %v3538 = vsel %vm1234, 1.0, 0.0
  %v3539 = vsel %vm1235, 1.0, 0.0
  %v3540 = vsel %vm1236, 1.0, 0.0
  %v3541 = vsel %vm1237, 1.0, 0.0
  %v3542 = vsel %vm1238, 1.0, 0.0
  %v3543 = vsel %vm1239, 1.0, 0.0
  %v3544 = vsel %vm1240, 1.0, 0.0
  %v3545 = vsel %vm1241, 1.0, 0.0
  %v3546 = vsel %vm1242, 1.0, 0.0
  %v3547 = vsel %vm1243, 1.0, 0.0
  %v3548 = vsel %vm1244, 1.0, 0.0
  %v3549 = vsel %vm1245, 1.0, 0.0
  %v3550 = vsel %vm1246, 1.0, 0.0
  %v3551 = vsel %vm1247, 1.0, 0.0
  %v3552 = vsel %vm1248, 1.0, 0.0
  %v3553 = vsel %vm1249, 1.0, 0.0
  %v3554 = vsel %vm1250, 1.0, 0.0
  %v3555 = vsel %vm1251, 1.0, 0.0
  %v3556 = vsel %vm1252, 1.0, 0.0
  %v3557 = vsel %vm1253, 1.0, 0.0
  %v3558 = vsel %vm1254, 1.0, 0.0
  %v3559 = vadd.f32 %v3303, %v3431
  %v3560 = vadd.f32 %v3304, %v3432
  %v3561 = vadd.f32 %v3305, %v3433
  %v3562 = vadd.f32 %v3306, %v3434
  %v3563 = vadd.f32 %v3307, %v3435
  %v3564 = vadd.f32 %v3308, %v3436
  %v3565 = vadd.f32 %v3309, %v3437
  %v3566 = vadd.f32 %v3310, %v3438
  %v3567 = vadd.f32 %v3311, %v3439
  %v3568 = vadd.f32 %v3312, %v3440
  %v3569 = vadd.f32 %v3313, %v3441
  %v3570 = vadd.f32 %v3314, %v3442
  %v3571 = vadd.f32 %v3315, %v3443
  %v3572 = vadd.f32 %v3316, %v3444
  %v3573 = vadd.f32 %v3317, %v3445
  %v3574 = vadd.f32 %v3318, %v3446
  %v3575 = vadd.f32 %v3319, %v3447
  %v3576 = vadd.f32 %v3320, %v3448
  %v3577 = vadd.f32 %v3321, %v3449
  %v3578 = vadd.f32 %v3322, %v3450
  %v3579 = vadd.f32 %v3323, %v3451
  %v3580 = vadd.f32 %v3324, %v3452
  %v3581 = vadd.f32 %v3325, %v3453
  %v3582 = vadd.f32 %v3326, %v3454
  %v3583 = vadd.f32 %v3327, %v3455
  %v3584 = vadd.f32 %v3328, %v3456
  %v3585 = vadd.f32 %v3329, %v3457
  %v3586 = vadd.f32 %v3330, %v3458
  %v3587 = vadd.f32 %v3331, %v3459
  %v3588 = vadd.f32 %v3332, %v3460
  %v3589 = vadd.f32 %v3333, %v3461
  %v3590 = vadd.f32 %v3334, %v3462
  %v3591 = vadd.f32 %v3335, %v3463
  %v3592 = vadd.f32 %v3336, %v3464
  %v3593 = vadd.f32 %v3337, %v3465
  %v3594 = vadd.f32 %v3338, %v3466
  %v3595 = vadd.f32 %v3339, %v3467
  %v3596 = vadd.f32 %v3340, %v3468
  %v3597 = vadd.f32 %v3341, %v3469
  %v3598 = vadd.f32 %v3342, %v3470
  %v3599 = vadd.f32 %v3343, %v3471
  %v3600 = vadd.f32 %v3344, %v3472
  %v3601 = vadd.f32 %v3345, %v3473
  %v3602 = vadd.f32 %v3346, %v3474
  %v3603 = vadd.f32 %v3347, %v3475
  %v3604 = vadd.f32 %v3348, %v3476
  %v3605 = vadd.f32 %v3349, %v3477
  %v3606 = vadd.f32 %v3350, %v3478
  %v3607 = vadd.f32 %v3351, %v3479
  %v3608 = vadd.f32 %v3352, %v3480
  %v3609 = vadd.f32 %v3353, %v3481
  %v3610 = vadd.f32 %v3354, %v3482
  %v3611 = vadd.f32 %v3355, %v3483
  %v3612 = vadd.f32 %v3356, %v3484
  %v3613 = vadd.f32 %v3357, %v3485
  %v3614 = vadd.f32 %v3358, %v3486
  %v3615 = vadd.f32 %v3359, %v3487
  %v3616 = vadd.f32 %v3360, %v3488
  %v3617 = vadd.f32 %v3361, %v3489
  %v3618 = vadd.f32 %v3362, %v3490
  %v3619 = vadd.f32 %v3363, %v3491
  %v3620 = vadd.f32 %v3364, %v3492
  %v3621 = vadd.f32 %v3365, %v3493
  %v3622 = vadd.f32 %v3366, %v3494
  %v3623 = vadd.f32 %v3367, %v3495
  %v3624 = vadd.f32 %v3368, %v3496
  %v3625 = vadd.f32 %v3369, %v3497
  %v3626 = vadd.f32 %v3370, %v3498
  %v3627 = vadd.f32 %v3371, %v3499
  %v3628 = vadd.f32 %v3372, %v3500
  %v3629 = vadd.f32 %v3373, %v3501
  %v3630 = vadd.f32 %v3374, %v3502
  %v3631 = vadd.f32 %v3375, %v3503
  %v3632 = vadd.f32 %v3376, %v3504
  %v3633 = vadd.f32 %v3377, %v3505
  %v3634 = vadd.f32 %v3378, %v3506
  %v3635 = vadd.f32 %v3379, %v3507
  %v3636 = vadd.f32 %v3380, %v3508
  %v3637 = vadd.f32 %v3381, %v3509
  %v3638 = vadd.f32 %v3382, %v3510
  %v3639 = vadd.f32 %v3383, %v3511
  %v3640 = vadd.f32 %v3384, %v3512
  %v3641 = vadd.f32 %v3385, %v3513
  %v3642 = vadd.f32 %v3386, %v3514
  %v3643 = vadd.f32 %v3387, %v3515
  %v3644 = vadd.f32 %v3388, %v3516
  %v3645 = vadd.f32 %v3389, %v3517
  %v3646 = vadd.f32 %v3390, %v3518
  %v3647 = vadd.f32 %v3391, %v3519
  %v3648 = vadd.f32 %v3392, %v3520
  %v3649 = vadd.f32 %v3393, %v3521
  %v3650 = vadd.f32 %v3394, %v3522
  %v3651 = vadd.f32 %v3395, %v3523
  %v3652 = vadd.f32 %v3396, %v3524
  %v3653 = vadd.f32 %v3397, %v3525
  %v3654 = vadd.f32 %v3398, %v3526
  %v3655 = vadd.f32 %v3399, %v3527
  %v3656 = vadd.f32 %v3400, %v3528
  %v3657 = vadd.f32 %v3401, %v3529
  %v3658 = vadd.f32 %v3402, %v3530
  %v3659 = vadd.f32 %v3403, %v3531
  %v3660 = vadd.f32 %v3404, %v3532
  %v3661 = vadd.f32 %v3405, %v3533
  %v3662 = vadd.f32 %v3406, %v3534
  %v3663 = vadd.f32 %v3407, %v3535
  %v3664 = vadd.f32 %v3408, %v3536
  %v3665 = vadd.f32 %v3409, %v3537
  %v3666 = vadd.f32 %v3410, %v3538
  %v3667 = vadd.f32 %v3411, %v3539
  %v3668 = vadd.f32 %v3412, %v3540
  %v3669 = vadd.f32 %v3413, %v3541
  %v3670 = vadd.f32 %v3414, %v3542
  %v3671 = vadd.f32 %v3415, %v3543
  %v3672 = vadd.f32 %v3416, %v3544
  %v3673 = vadd.f32 %v3417, %v3545
  %v3674 = vadd.f32 %v3418, %v3546
  %v3675 = vadd.f32 %v3419, %v3547
  %v3676 = vadd.f32 %v3420, %v3548
  %v3677 = vadd.f32 %v3421, %v3549
  %v3678 = vadd.f32 %v3422, %v3550
  %v3679 = vadd.f32 %v3423, %v3551
  %v3680 = vadd.f32 %v3424, %v3552
  %v3681 = vadd.f32 %v3425, %v3553
  %v3682 = vadd.f32 %v3426, %v3554
  %v3683 = vadd.f32 %v3427, %v3555
  %v3684 = vadd.f32 %v3428, %v3556
  %v3685 = vadd.f32 %v3429, %v3557
  %v3686 = vadd.f32 %v3430, %v3558
  %3687 = vst [vmem:[#allocation3] sm:$0xff] %v3559
  %3688 = vst [vmem:[#allocation3 + $0x8] sm:$0xff] %v3560
  %3689 = vst [vmem:[#allocation3 + $0x10] sm:$0xff] %v3561
  %3690 = vst [vmem:[#allocation3 + $0x18] sm:$0xff] %v3562
  %3691 = vst [vmem:[#allocation3 + $0x20] sm:$0xff] %v3563
  %3692 = vst [vmem:[#allocation3 + $0x28] sm:$0xff] %v3564
  %3693 = vst [vmem:[#allocation3 + $0x30] sm:$0xff] %v3565
  %3694 = vst [vmem:[#allocation3 + $0x38] sm:$0xff] %v3566
  %3695 = vst [vmem:[#allocation3 + $0x40] sm:$0xff] %v3567
  %3696 = vst [vmem:[#allocation3 + $0x48] sm:$0xff] %v3568
  %3697 = vst [vmem:[#allocation3 + $0x50] sm:$0xff] %v3569
  %3698 = vst [vmem:[#allocation3 + $0x58] sm:$0xff] %v3570
  %3699 = vst [vmem:[#allocation3 + $0x60] sm:$0xff] %v3571
  %3700 = vst [vmem:[#allocation3 + $0x68] sm:$0xff] %v3572
  %3701 = vst [vmem:[#allocation3 + $0x70] sm:$0xff] %v3573
  %3702 = vst [vmem:[#allocation3 + $0x78] sm:$0xff] %v3574
  %3703 = vst [vmem:[#allocation3 + $0x80] sm:$0xff] %v3575
  %3704 = vst [vmem:[#allocation3 + $0x88] sm:$0xff] %v3576
  %3705 = vst [vmem:[#allocation3 + $0x90] sm:$0xff] %v3577
  %3706 = vst [vmem:[#allocation3 + $0x98] sm:$0xff] %v3578
  %3707 = vst [vmem:[#allocation3 + $0xa0] sm:$0xff] %v3579
  %3708 = vst [vmem:[#allocation3 + $0xa8] sm:$0xff] %v3580
  %3709 = vst [vmem:[#allocation3 + $0xb0] sm:$0xff] %v3581
  %3710 = vst [vmem:[#allocation3 + $0xb8] sm:$0xff] %v3582
  %3711 = vst [vmem:[#allocation3 + $0xc0] sm:$0xff] %v3583
  %3712 = vst [vmem:[#allocation3 + $0xc8] sm:$0xff] %v3584
  %3713 = vst [vmem:[#allocation3 + $0xd0] sm:$0xff] %v3585
  %3714 = vst [vmem:[#allocation3 + $0xd8] sm:$0xff] %v3586
  %3715 = vst [vmem:[#allocation3 + $0xe0] sm:$0xff] %v3587
  %3716 = vst [vmem:[#allocation3 + $0xe8] sm:$0xff] %v3588
  %3717 = vst [vmem:[#allocation3 + $0xf0] sm:$0xff] %v3589
  %3718 = vst [vmem:[#allocation3 + $0xf8] sm:$0xff] %v3590
  %3719 = vst [vmem:[#allocation3 + $0x100] sm:$0xff] %v3591
  %3720 = vst [vmem:[#allocation3 + $0x108] sm:$0xff] %v3592
  %3721 = vst [vmem:[#allocation3 + $0x110] sm:$0xff] %v3593
  %3722 = vst [vmem:[#allocation3 + $0x118] sm:$0xff] %v3594
  %3723 = vst [vmem:[#allocation3 + $0x120] sm:$0xff] %v3595
  %3724 = vst [vmem:[#allocation3 + $0x128] sm:$0xff] %v3596
  %3725 = vst [vmem:[#allocation3 + $0x130] sm:$0xff] %v3597
  %3726 = vst [vmem:[#allocation3 + $0x138] sm:$0xff] %v3598
  %3727 = vst [vmem:[#allocation3 + $0x140] sm:$0xff] %v3599
  %3728 = vst [vmem:[#allocation3 + $0x148] sm:$0xff] %v3600
  %3729 = vst [vmem:[#allocation3 + $0x150] sm:$0xff] %v3601
  %3730 = vst [vmem:[#allocation3 + $0x158] sm:$0xff] %v3602
  %3731 = vst [vmem:[#allocation3 + $0x160] sm:$0xff] %v3603
  %3732 = vst [vmem:[#allocation3 + $0x168] sm:$0xff] %v3604
  %3733 = vst [vmem:[#allocation3 + $0x170] sm:$0xff] %v3605
  %3734 = vst [vmem:[#allocation3 + $0x178] sm:$0xff] %v3606
  %3735 = vst [vmem:[#allocation3 + $0x180] sm:$0xff] %v3607
  %3736 = vst [vmem:[#allocation3 + $0x188] sm:$0xff] %v3608
  %3737 = vst [vmem:[#allocation3 + $0x190] sm:$0xff] %v3609
  %3738 = vst [vmem:[#allocation3 + $0x198] sm:$0xff] %v3610
  %3739 = vst [vmem:[#allocation3 + $0x1a0] sm:$0xff] %v3611
  %3740 = vst [vmem:[#allocation3 + $0x1a8] sm:$0xff] %v3612
  %3741 = vst [vmem:[#allocation3 + $0x1b0] sm:$0xff] %v3613
  %3742 = vst [vmem:[#allocation3 + $0x1b8] sm:$0xff] %v3614
  %3743 = vst [vmem:[#allocation3 + $0x1c0] sm:$0xff] %v3615
  %3744 = vst [vmem:[#allocation3 + $0x1c8] sm:$0xff] %v3616
  %3745 = vst [vmem:[#allocation3 + $0x1d0] sm:$0xff] %v3617
  %3746 = vst [vmem:[#allocation3 + $0x1d8] sm:$0xff] %v3618
  %3747 = vst [vmem:[#allocation3 + $0x1e0] sm:$0xff] %v3619
  %3748 = vst [vmem:[#allocation3 + $0x1e8] sm:$0xff] %v3620
  %3749 = vst [vmem:[#allocation3 + $0x1f0] sm:$0xff] %v3621
  %3750 = vst [vmem:[#allocation3 + $0x1f8] sm:$0xff] %v3622
  %3751 = vst [vmem:[#allocation3 + $0x200] sm:$0xff] %v3623
  %3752 = vst [vmem:[#allocation3 + $0x208] sm:$0xff] %v3624
  %3753 = vst [vmem:[#allocation3 + $0x210] sm:$0xff] %v3625
  %3754 = vst [vmem:[#allocation3 + $0x218] sm:$0xff] %v3626
  %3755 = vst [vmem:[#allocation3 + $0x220] sm:$0xff] %v3627
  %3756 = vst [vmem:[#allocation3 + $0x228] sm:$0xff] %v3628
  %3757 = vst [vmem:[#allocation3 + $0x230] sm:$0xff] %v3629
  %3758 = vst [vmem:[#allocation3 + $0x238] sm:$0xff] %v3630
  %3759 = vst [vmem:[#allocation3 + $0x240] sm:$0xff] %v3631
  %3760 = vst [vmem:[#allocation3 + $0x248] sm:$0xff] %v3632
  %3761 = vst [vmem:[#allocation3 + $0x250] sm:$0xff] %v3633
  %3762 = vst [vmem:[#allocation3 + $0x258] sm:$0xff] %v3634
  %3763 = vst [vmem:[#allocation3 + $0x260] sm:$0xff] %v3635
  %3764 = vst [vmem:[#allocation3 + $0x268] sm:$0xff] %v3636
  %3765 = vst [vmem:[#allocation3 + $0x270] sm:$0xff] %v3637
  %3766 = vst [vmem:[#allocation3 + $0x278] sm:$0xff] %v3638
  %3767 = vst [vmem:[#allocation3 + $0x280] sm:$0xff] %v3639
  %3768 = vst [vmem:[#allocation3 + $0x288] sm:$0xff] %v3640
  %3769 = vst [vmem:[#allocation3 + $0x290] sm:$0xff] %v3641
  %3770 = vst [vmem:[#allocation3 + $0x298] sm:$0xff] %v3642
  %3771 = vst [vmem:[#allocation3 + $0x2a0] sm:$0xff] %v3643
  %3772 = vst [vmem:[#allocation3 + $0x2a8] sm:$0xff] %v3644
  %3773 = vst [vmem:[#allocation3 + $0x2b0] sm:$0xff] %v3645
  %3774 = vst [vmem:[#allocation3 + $0x2b8] sm:$0xff] %v3646
  %3775 = vst [vmem:[#allocation3 + $0x2c0] sm:$0xff] %v3647
  %3776 = vst [vmem:[#allocation3 + $0x2c8] sm:$0xff] %v3648
  %3777 = vst [vmem:[#allocation3 + $0x2d0] sm:$0xff] %v3649
  %3778 = vst [vmem:[#allocation3 + $0x2d8] sm:$0xff] %v3650
  %3779 = vst [vmem:[#allocation3 + $0x2e0] sm:$0xff] %v3651
  %3780 = vst [vmem:[#allocation3 + $0x2e8] sm:$0xff] %v3652
  %3781 = vst [vmem:[#allocation3 + $0x2f0] sm:$0xff] %v3653
  %3782 = vst [vmem:[#allocation3 + $0x2f8] sm:$0xff] %v3654
  %3783 = vst [vmem:[#allocation3 + $0x300] sm:$0xff] %v3655
  %3784 = vst [vmem:[#allocation3 + $0x308] sm:$0xff] %v3656
  %3785 = vst [vmem:[#allocation3 + $0x310] sm:$0xff] %v3657
  %3786 = vst [vmem:[#allocation3 + $0x318] sm:$0xff] %v3658
  %3787 = vst [vmem:[#allocation3 + $0x320] sm:$0xff] %v3659
  %3788 = vst [vmem:[#allocation3 + $0x328] sm:$0xff] %v3660
  %3789 = vst [vmem:[#allocation3 + $0x330] sm:$0xff] %v3661
  %3790 = vst [vmem:[#allocation3 + $0x338] sm:$0xff] %v3662
  %3791 = vst [vmem:[#allocation3 + $0x340] sm:$0xff] %v3663
  %3792 = vst [vmem:[#allocation3 + $0x348] sm:$0xff] %v3664
  %3793 = vst [vmem:[#allocation3 + $0x350] sm:$0xff] %v3665
  %3794 = vst [vmem:[#allocation3 + $0x358] sm:$0xff] %v3666
  %3795 = vst [vmem:[#allocation3 + $0x360] sm:$0xff] %v3667
  %3796 = vst [vmem:[#allocation3 + $0x368] sm:$0xff] %v3668
  %3797 = vst [vmem:[#allocation3 + $0x370] sm:$0xff] %v3669
  %3798 = vst [vmem:[#allocation3 + $0x378] sm:$0xff] %v3670
  %3799 = vst [vmem:[#allocation3 + $0x380] sm:$0xff] %v3671
  %3800 = vst [vmem:[#allocation3 + $0x388] sm:$0xff] %v3672
  %3801 = vst [vmem:[#allocation3 + $0x390] sm:$0xff] %v3673
  %3802 = vst [vmem:[#allocation3 + $0x398] sm:$0xff] %v3674
  %3803 = vst [vmem:[#allocation3 + $0x3a0] sm:$0xff] %v3675
  %3804 = vst [vmem:[#allocation3 + $0x3a8] sm:$0xff] %v3676
  %3805 = vst [vmem:[#allocation3 + $0x3b0] sm:$0xff] %v3677
  %3806 = vst [vmem:[#allocation3 + $0x3b8] sm:$0xff] %v3678
  %3807 = vst [vmem:[#allocation3 + $0x3c0] sm:$0xff] %v3679
  %3808 = vst [vmem:[#allocation3 + $0x3c8] sm:$0xff] %v3680
  %3809 = vst [vmem:[#allocation3 + $0x3d0] sm:$0xff] %v3681
  %3810 = vst [vmem:[#allocation3 + $0x3d8] sm:$0xff] %v3682
  %3811 = vst [vmem:[#allocation3 + $0x3e0] sm:$0xff] %v3683
  %3812 = vst [vmem:[#allocation3 + $0x3e8] sm:$0xff] %v3684
  %3813 = vst [vmem:[#allocation3 + $0x3f0] sm:$0xff] %v3685
  %3814 = vst [vmem:[#allocation3 + $0x3f8] sm:$0xff] %v3686
  // Predicated region
  $region14: #{depth_loss.1} parent=0 // pred_check
    %p3815 = pneg %p95
  $region15: #{depth_loss.1} parent=0 // pred_check_branch
    %3817 = sbr.rel (%p3815) target = $region17
  $region16: #{depth_loss.1} parent=0 // pred_region
    %v3818 = vld [vmem:[#allocation2] sm:$0xff]
    %v3819 = vld [vmem:[#allocation2 + $0x8] sm:$0xff]
    %v3820 = vld [vmem:[#allocation2 + $0x10] sm:$0xff]
    %v3821 = vld [vmem:[#allocation2 + $0x18] sm:$0xff]
    %v3822 = vld [vmem:[#allocation2 + $0x20] sm:$0xff]
    %v3823 = vld [vmem:[#allocation2 + $0x28] sm:$0xff]
    %v3824 = vld [vmem:[#allocation2 + $0x30] sm:$0xff]
    %v3825 = vld [vmem:[#allocation2 + $0x38] sm:$0xff]
    %v3826 = vld [vmem:[#allocation2 + $0x40] sm:$0xff]
    %v3827 = vld [vmem:[#allocation2 + $0x48] sm:$0xff]
    %v3828 = vld [vmem:[#allocation2 + $0x50] sm:$0xff]
    %v3829 = vld [vmem:[#allocation2 + $0x58] sm:$0xff]
    %v3830 = vld [vmem:[#allocation2 + $0x60] sm:$0xff]
    %v3831 = vld [vmem:[#allocation2 + $0x68] sm:$0xff]
    %v3832 = vld [vmem:[#allocation2 + $0x70] sm:$0xff]
    %v3833 = vld [vmem:[#allocation2 + $0x78] sm:$0xff]
    %v3834 = vld [vmem:[#allocation2 + $0x80] sm:$0xff]
    %v3835 = vld [vmem:[#allocation2 + $0x88] sm:$0xff]
    %v3836 = vld [vmem:[#allocation2 + $0x90] sm:$0xff]
    %v3837 = vld [vmem:[#allocation2 + $0x98] sm:$0xff]
    %v3838 = vld [vmem:[#allocation2 + $0xa0] sm:$0xff]
    %v3839 = vld [vmem:[#allocation2 + $0xa8] sm:$0xff]
    %v3840 = vld [vmem:[#allocation2 + $0xb0] sm:$0xff]
    %v3841 = vld [vmem:[#allocation2 + $0xb8] sm:$0xff]
    %v3842 = vld [vmem:[#allocation2 + $0xc0] sm:$0xff]
    %v3843 = vld [vmem:[#allocation2 + $0xc8] sm:$0xff]
    %v3844 = vld [vmem:[#allocation2 + $0xd0] sm:$0xff]
    %v3845 = vld [vmem:[#allocation2 + $0xd8] sm:$0xff]
    %v3846 = vld [vmem:[#allocation2 + $0xe0] sm:$0xff]
    %v3847 = vld [vmem:[#allocation2 + $0xe8] sm:$0xff]
    %v3848 = vld [vmem:[#allocation2 + $0xf0] sm:$0xff]
    %v3849 = vld [vmem:[#allocation2 + $0xf8] sm:$0xff]
    %v3850 = vld [vmem:[#allocation2 + $0x100] sm:$0xff]
    %v3851 = vld [vmem:[#allocation2 + $0x108] sm:$0xff]
    %v3852 = vld [vmem:[#allocation2 + $0x110] sm:$0xff]
    %v3853 = vld [vmem:[#allocation2 + $0x118] sm:$0xff]
    %v3854 = vld [vmem:[#allocation2 + $0x120] sm:$0xff]
    %v3855 = vld [vmem:[#allocation2 + $0x128] sm:$0xff]
    %v3856 = vld [vmem:[#allocation2 + $0x130] sm:$0xff]
    %v3857 = vld [vmem:[#allocation2 + $0x138] sm:$0xff]
    %v3858 = vld [vmem:[#allocation2 + $0x140] sm:$0xff]
    %v3859 = vld [vmem:[#allocation2 + $0x148] sm:$0xff]
    %v3860 = vld [vmem:[#allocation2 + $0x150] sm:$0xff]
    %v3861 = vld [vmem:[#allocation2 + $0x158] sm:$0xff]
    %v3862 = vld [vmem:[#allocation2 + $0x160] sm:$0xff]
    %v3863 = vld [vmem:[#allocation2 + $0x168] sm:$0xff]
    %v3864 = vld [vmem:[#allocation2 + $0x170] sm:$0xff]
    %v3865 = vld [vmem:[#allocation2 + $0x178] sm:$0xff]
    %v3866 = vld [vmem:[#allocation2 + $0x180] sm:$0xff]
    %v3867 = vld [vmem:[#allocation2 + $0x188] sm:$0xff]
    %v3868 = vld [vmem:[#allocation2 + $0x190] sm:$0xff]
    %v3869 = vld [vmem:[#allocation2 + $0x198] sm:$0xff]
    %v3870 = vld [vmem:[#allocation2 + $0x1a0] sm:$0xff]
    %v3871 = vld [vmem:[#allocation2 + $0x1a8] sm:$0xff]
    %v3872 = vld [vmem:[#allocation2 + $0x1b0] sm:$0xff]
    %v3873 = vld [vmem:[#allocation2 + $0x1b8] sm:$0xff]
    %v3874 = vld [vmem:[#allocation2 + $0x1c0] sm:$0xff]
    %v3875 = vld [vmem:[#allocation2 + $0x1c8] sm:$0xff]
    %v3876 = vld [vmem:[#allocation2 + $0x1d0] sm:$0xff]
    %v3877 = vld [vmem:[#allocation2 + $0x1d8] sm:$0xff]
    %v3878 = vld [vmem:[#allocation2 + $0x1e0] sm:$0xff]
    %v3879 = vld [vmem:[#allocation2 + $0x1e8] sm:$0xff]
    %v3880 = vld [vmem:[#allocation2 + $0x1f0] sm:$0xff]
    %v3881 = vld [vmem:[#allocation2 + $0x1f8] sm:$0xff]
    %v3882 = vld [vmem:[#allocation2 + $0x200] sm:$0xff]
    %v3883 = vld [vmem:[#allocation2 + $0x208] sm:$0xff]
    %v3884 = vld [vmem:[#allocation2 + $0x210] sm:$0xff]
    %v3885 = vld [vmem:[#allocation2 + $0x218] sm:$0xff]
    %v3886 = vld [vmem:[#allocation2 + $0x220] sm:$0xff]
    %v3887 = vld [vmem:[#allocation2 + $0x228] sm:$0xff]
    %v3888 = vld [vmem:[#allocation2 + $0x230] sm:$0xff]
    %v3889 = vld [vmem:[#allocation2 + $0x238] sm:$0xff]
    %v3890 = vld [vmem:[#allocation2 + $0x240] sm:$0xff]
    %v3891 = vld [vmem:[#allocation2 + $0x248] sm:$0xff]
    %v3892 = vld [vmem:[#allocation2 + $0x250] sm:$0xff]
    %v3893 = vld [vmem:[#allocation2 + $0x258] sm:$0xff]
    %v3894 = vld [vmem:[#allocation2 + $0x260] sm:$0xff]
    %v3895 = vld [vmem:[#allocation2 + $0x268] sm:$0xff]
    %v3896 = vld [vmem:[#allocation2 + $0x270] sm:$0xff]
    %v3897 = vld [vmem:[#allocation2 + $0x278] sm:$0xff]
    %v3898 = vld [vmem:[#allocation2 + $0x280] sm:$0xff]
    %v3899 = vld [vmem:[#allocation2 + $0x288] sm:$0xff]
    %v3900 = vld [vmem:[#allocation2 + $0x290] sm:$0xff]
    %v3901 = vld [vmem:[#allocation2 + $0x298] sm:$0xff]
    %v3902 = vld [vmem:[#allocation2 + $0x2a0] sm:$0xff]
    %v3903 = vld [vmem:[#allocation2 + $0x2a8] sm:$0xff]
    %v3904 = vld [vmem:[#allocation2 + $0x2b0] sm:$0xff]
    %v3905 = vld [vmem:[#allocation2 + $0x2b8] sm:$0xff]
    %v3906 = vld [vmem:[#allocation2 + $0x2c0] sm:$0xff]
    %v3907 = vld [vmem:[#allocation2 + $0x2c8] sm:$0xff]
    %v3908 = vld [vmem:[#allocation2 + $0x2d0] sm:$0xff]
    %v3909 = vld [vmem:[#allocation2 + $0x2d8] sm:$0xff]
    %v3910 = vld [vmem:[#allocation2 + $0x2e0] sm:$0xff]
    %v3911 = vld [vmem:[#allocation2 + $0x2e8] sm:$0xff]
    %v3912 = vld [vmem:[#allocation2 + $0x2f0] sm:$0xff]
    %v3913 = vld [vmem:[#allocation2 + $0x2f8] sm:$0xff]
    %v3914 = vld [vmem:[#allocation2 + $0x300] sm:$0xff]
    %v3915 = vld [vmem:[#allocation2 + $0x308] sm:$0xff]
    %v3916 = vld [vmem:[#allocation2 + $0x310] sm:$0xff]
    %v3917 = vld [vmem:[#allocation2 + $0x318] sm:$0xff]
    %v3918 = vld [vmem:[#allocation2 + $0x320] sm:$0xff]
    %v3919 = vld [vmem:[#allocation2 + $0x328] sm:$0xff]
    %v3920 = vld [vmem:[#allocation2 + $0x330] sm:$0xff]
    %v3921 = vld [vmem:[#allocation2 + $0x338] sm:$0xff]
    %v3922 = vld [vmem:[#allocation2 + $0x340] sm:$0xff]
    %v3923 = vld [vmem:[#allocation2 + $0x348] sm:$0xff]
    %v3924 = vld [vmem:[#allocation2 + $0x350] sm:$0xff]
    %v3925 = vld [vmem:[#allocation2 + $0x358] sm:$0xff]
    %v3926 = vld [vmem:[#allocation2 + $0x360] sm:$0xff]
    %v3927 = vld [vmem:[#allocation2 + $0x368] sm:$0xff]
    %v3928 = vld [vmem:[#allocation2 + $0x370] sm:$0xff]
    %v3929 = vld [vmem:[#allocation2 + $0x378] sm:$0xff]
    %v3930 = vld [vmem:[#allocation2 + $0x380] sm:$0xff]
    %v3931 = vld [vmem:[#allocation2 + $0x388] sm:$0xff]
    %v3932 = vld [vmem:[#allocation2 + $0x390] sm:$0xff]
    %v3933 = vld [vmem:[#allocation2 + $0x398] sm:$0xff]
    %v3934 = vld [vmem:[#allocation2 + $0x3a0] sm:$0xff]
    %v3935 = vld [vmem:[#allocation2 + $0x3a8] sm:$0xff]
    %v3936 = vld [vmem:[#allocation2 + $0x3b0] sm:$0xff]
    %v3937 = vld [vmem:[#allocation2 + $0x3b8] sm:$0xff]
    %v3938 = vld [vmem:[#allocation2 + $0x3c0] sm:$0xff]
    %v3939 = vld [vmem:[#allocation2 + $0x3c8] sm:$0xff]
    %v3940 = vld [vmem:[#allocation2 + $0x3d0] sm:$0xff]
    %v3941 = vld [vmem:[#allocation2 + $0x3d8] sm:$0xff]
    %v3942 = vld [vmem:[#allocation2 + $0x3e0] sm:$0xff]
    %v3943 = vld [vmem:[#allocation2 + $0x3e8] sm:$0xff]
    %v3944 = vld [vmem:[#allocation2 + $0x3f0] sm:$0xff]
    %v3945 = vld [vmem:[#allocation2 + $0x3f8] sm:$0xff]
    %v3946 = vadd.f32 %v3818, %v3819
    %v3947 = vadd.f32 %v3946, %v3820
    %v3948 = vadd.f32 %v3947, %v3821
    %v3949 = vadd.f32 %v3948, %v3822
    %v3950 = vadd.f32 %v3949, %v3823
    %v3951 = vadd.f32 %v3950, %v3824
    %v3952 = vadd.f32 %v3951, %v3825
    %v3953 = vadd.f32 %v3952, %v3826
    %v3954 = vadd.f32 %v3953, %v3827
    %v3955 = vadd.f32 %v3954, %v3828
    %v3956 = vadd.f32 %v3955, %v3829
    %v3957 = vadd.f32 %v3956, %v3830
    %v3958 = vadd.f32 %v3957, %v3831
    %v3959 = vadd.f32 %v3958, %v3832
    %v3960 = vadd.f32 %v3959, %v3833
    %v3961 = vadd.f32 %v3960, %v3834
    %v3962 = vadd.f32 %v3961, %v3835
    %v3963 = vadd.f32 %v3962, %v3836
    %v3964 = vadd.f32 %v3963, %v3837
    %v3965 = vadd.f32 %v3964, %v3838
    %v3966 = vadd.f32 %v3965, %v3839
    %v3967 = vadd.f32 %v3966, %v3840
    %v3968 = vadd.f32 %v3967, %v3841
    %v3969 = vadd.f32 %v3968, %v3842
    %v3970 = vadd.f32 %v3969, %v3843
    %v3971 = vadd.f32 %v3970, %v3844
    %v3972 = vadd.f32 %v3971, %v3845
    %v3973 = vadd.f32 %v3972, %v3846
    %v3974 = vadd.f32 %v3973, %v3847
    %v3975 = vadd.f32 %v3974, %v3848
    %v3976 = vadd.f32 %v3975, %v3849
    %v3977 = vadd.f32 %v3976, %v3850
    %v3978 = vadd.f32 %v3977, %v3851
    %v3979 = vadd.f32 %v3978, %v3852
    %v3980 = vadd.f32 %v3979, %v3853
    %v3981 = vadd.f32 %v3980, %v3854
    %v3982 = vadd.f32 %v3981, %v3855
    %v3983 = vadd.f32 %v3982, %v3856
    %v3984 = vadd.f32 %v3983, %v3857
    %v3985 = vadd.f32 %v3984, %v3858
    %v3986 = vadd.f32 %v3985, %v3859
    %v3987 = vadd.f32 %v3986, %v3860
    %v3988 = vadd.f32 %v3987, %v3861
    %v3989 = vadd.f32 %v3988, %v3862
    %v3990 = vadd.f32 %v3989, %v3863
    %v3991 = vadd.f32 %v3990, %v3864
    %v3992 = vadd.f32 %v3991, %v3865
    %v3993 = vadd.f32 %v3992, %v3866
    %v3994 = vadd.f32 %v3993, %v3867
    %v3995 = vadd.f32 %v3994, %v3868
    %v3996 = vadd.f32 %v3995, %v3869
    %v3997 = vadd.f32 %v3996, %v3870
    %v3998 = vadd.f32 %v3997, %v3871
    %v3999 = vadd.f32 %v3998, %v3872
    %v4000 = vadd.f32 %v3999, %v3873
    %v4001 = vadd.f32 %v4000, %v3874
    %v4002 = vadd.f32 %v4001, %v3875
    %v4003 = vadd.f32 %v4002, %v3876
    %v4004 = vadd.f32 %v4003, %v3877
    %v4005 = vadd.f32 %v4004, %v3878
    %v4006 = vadd.f32 %v4005, %v3879
    %v4007 = vadd.f32 %v4006, %v3880
    %v4008 = vadd.f32 %v4007, %v3881
    %v4009 = vadd.f32 %v4008, %v3882
    %v4010 = vadd.f32 %v4009, %v3883
    %v4011 = vadd.f32 %v4010, %v3884
    %v4012 = vadd.f32 %v4011, %v3885
    %v4013 = vadd.f32 %v4012, %v3886
    %v4014 = vadd.f32 %v4013, %v3887
    %v4015 = vadd.f32 %v4014, %v3888
    %v4016 = vadd.f32 %v4015, %v3889
    %v4017 = vadd.f32 %v4016, %v3890
    %v4018 = vadd.f32 %v4017, %v3891
    %v4019 = vadd.f32 %v4018, %v3892
    %v4020 = vadd.f32 %v4019, %v3893
    %v4021 = vadd.f32 %v4020, %v3894
    %v4022 = vadd.f32 %v4021, %v3895
    %v4023 = vadd.f32 %v4022, %v3896
    %v4024 = vadd.f32 %v4023, %v3897
    %v4025 = vadd.f32 %v4024, %v3898
    %v4026 = vadd.f32 %v4025, %v3899
    %v4027 = vadd.f32 %v4026, %v3900
    %v4028 = vadd.f32 %v4027, %v3901
    %v4029 = vadd.f32 %v4028, %v3902
    %v4030 = vadd.f32 %v4029, %v3903
    %v4031 = vadd.f32 %v4030, %v3904
    %v4032 = vadd.f32 %v4031, %v3905
    %v4033 = vadd.f32 %v4032, %v3906
    %v4034 = vadd.f32 %v4033, %v3907
    %v4035 = vadd.f32 %v4034, %v3908
    %v4036 = vadd.f32 %v4035, %v3909
    %v4037 = vadd.f32 %v4036, %v3910
    %v4038 = vadd.f32 %v4037, %v3911
    %v4039 = vadd.f32 %v4038, %v3912
    %v4040 = vadd.f32 %v4039, %v3913
    %v4041 = vadd.f32 %v4040, %v3914
    %v4042 = vadd.f32 %v4041, %v3915
    %v4043 = vadd.f32 %v4042, %v3916
    %v4044 = vadd.f32 %v4043, %v3917
    %v4045 = vadd.f32 %v4044, %v3918
    %v4046 = vadd.f32 %v4045, %v3919
    %v4047 = vadd.f32 %v4046, %v3920
    %v4048 = vadd.f32 %v4047, %v3921
    %v4049 = vadd.f32 %v4048, %v3922
    %v4050 = vadd.f32 %v4049, %v3923
    %v4051 = vadd.f32 %v4050, %v3924
    %v4052 = vadd.f32 %v4051, %v3925
    %v4053 = vadd.f32 %v4052, %v3926
    %v4054 = vadd.f32 %v4053, %v3927
    %v4055 = vadd.f32 %v4054, %v3928
    %v4056 = vadd.f32 %v4055, %v3929
    %v4057 = vadd.f32 %v4056, %v3930
    %v4058 = vadd.f32 %v4057, %v3931
    %v4059 = vadd.f32 %v4058, %v3932
    %v4060 = vadd.f32 %v4059, %v3933
    %v4061 = vadd.f32 %v4060, %v3934
    %v4062 = vadd.f32 %v4061, %v3935
    %v4063 = vadd.f32 %v4062, %v3936
    %v4064 = vadd.f32 %v4063, %v3937
    %v4065 = vadd.f32 %v4064, %v3938
    %v4066 = vadd.f32 %v4065, %v3939
    %v4067 = vadd.f32 %v4066, %v3940
    %v4068 = vadd.f32 %v4067, %v3941
    %v4069 = vadd.f32 %v4068, %v3942
    %v4070 = vadd.f32 %v4069, %v3943
    %v4071 = vadd.f32 %v4070, %v3944
    %v4072 = vadd.f32 %v4071, %v3945
    %v4073 = vrot.slane %v4072, 4
    %v4074 = vadd.f32 %v4072, %v4073
    %v4075 = vrot.slane %v4074, 2
    %v4076 = vadd.f32 %v4074, %v4075
    %v4077 = vrot.slane %v4076, 1
    %v4078 = vadd.f32 %v4076, %v4077
    %4079 = vst [vmem:[%s2] sm:$0x1] %v4078
    %v4080 = vld [vmem:[#allocation3] sm:$0xff]
    %v4081 = vld [vmem:[#allocation3 + $0x8] sm:$0xff]
    %v4082 = vld [vmem:[#allocation3 + $0x10] sm:$0xff]
    %v4083 = vld [vmem:[#allocation3 + $0x18] sm:$0xff]
    %v4084 = vld [vmem:[#allocation3 + $0x20] sm:$0xff]
    %v4085 = vld [vmem:[#allocation3 + $0x28] sm:$0xff]
    %v4086 = vld [vmem:[#allocation3 + $0x30] sm:$0xff]
    %v4087 = vld [vmem:[#allocation3 + $0x38] sm:$0xff]
    %v4088 = vld [vmem:[#allocation3 + $0x40] sm:$0xff]
    %v4089 = vld [vmem:[#allocation3 + $0x48] sm:$0xff]
    %v4090 = vld [vmem:[#allocation3 + $0x50] sm:$0xff]
    %v4091 = vld [vmem:[#allocation3 + $0x58] sm:$0xff]
    %v4092 = vld [vmem:[#allocation3 + $0x60] sm:$0xff]
    %v4093 = vld [vmem:[#allocation3 + $0x68] sm:$0xff]
    %v4094 = vld [vmem:[#allocation3 + $0x70] sm:$0xff]
    %v4095 = vld [vmem:[#allocation3 + $0x78] sm:$0xff]
    %v4096 = vld [vmem:[#allocation3 + $0x80] sm:$0xff]
    %v4097 = vld [vmem:[#allocation3 + $0x88] sm:$0xff]
    %v4098 = vld [vmem:[#allocation3 + $0x90] sm:$0xff]
    %v4099 = vld [vmem:[#allocation3 + $0x98] sm:$0xff]
    %v4100 = vld [vmem:[#allocation3 + $0xa0] sm:$0xff]
    %v4101 = vld [vmem:[#allocation3 + $0xa8] sm:$0xff]
    %v4102 = vld [vmem:[#allocation3 + $0xb0] sm:$0xff]
    %v4103 = vld [vmem:[#allocation3 + $0xb8] sm:$0xff]
    %v4104 = vld [vmem:[#allocation3 + $0xc0] sm:$0xff]
    %v4105 = vld [vmem:[#allocation3 + $0xc8] sm:$0xff]
    %v4106 = vld [vmem:[#allocation3 + $0xd0] sm:$0xff]
    %v4107 = vld [vmem:[#allocation3 + $0xd8] sm:$0xff]
    %v4108 = vld [vmem:[#allocation3 + $0xe0] sm:$0xff]
    %v4109 = vld [vmem:[#allocation3 + $0xe8] sm:$0xff]
    %v4110 = vld [vmem:[#allocation3 + $0xf0] sm:$0xff]
    %v4111 = vld [vmem:[#allocation3 + $0xf8] sm:$0xff]
    %v4112 = vld [vmem:[#allocation3 + $0x100] sm:$0xff]
    %v4113 = vld [vmem:[#allocation3 + $0x108] sm:$0xff]
    %v4114 = vld [vmem:[#allocation3 + $0x110] sm:$0xff]
    %v4115 = vld [vmem:[#allocation3 + $0x118] sm:$0xff]
    %v4116 = vld [vmem:[#allocation3 + $0x120] sm:$0xff]
    %v4117 = vld [vmem:[#allocation3 + $0x128] sm:$0xff]
    %v4118 = vld [vmem:[#allocation3 + $0x130] sm:$0xff]
    %v4119 = vld [vmem:[#allocation3 + $0x138] sm:$0xff]
    %v4120 = vld [vmem:[#allocation3 + $0x140] sm:$0xff]
    %v4121 = vld [vmem:[#allocation3 + $0x148] sm:$0xff]
    %v4122 = vld [vmem:[#allocation3 + $0x150] sm:$0xff]
    %v4123 = vld [vmem:[#allocation3 + $0x158] sm:$0xff]
    %v4124 = vld [vmem:[#allocation3 + $0x160] sm:$0xff]
    %v4125 = vld [vmem:[#allocation3 + $0x168] sm:$0xff]
    %v4126 = vld [vmem:[#allocation3 + $0x170] sm:$0xff]
    %v4127 = vld [vmem:[#allocation3 + $0x178] sm:$0xff]
    %v4128 = vld [vmem:[#allocation3 + $0x180] sm:$0xff]
    %v4129 = vld [vmem:[#allocation3 + $0x188] sm:$0xff]
    %v4130 = vld [vmem:[#allocation3 + $0x190] sm:$0xff]
    %v4131 = vld [vmem:[#allocation3 + $0x198] sm:$0xff]
    %v4132 = vld [vmem:[#allocation3 + $0x1a0] sm:$0xff]
    %v4133 = vld [vmem:[#allocation3 + $0x1a8] sm:$0xff]
    %v4134 = vld [vmem:[#allocation3 + $0x1b0] sm:$0xff]
    %v4135 = vld [vmem:[#allocation3 + $0x1b8] sm:$0xff]
    %v4136 = vld [vmem:[#allocation3 + $0x1c0] sm:$0xff]
    %v4137 = vld [vmem:[#allocation3 + $0x1c8] sm:$0xff]
    %v4138 = vld [vmem:[#allocation3 + $0x1d0] sm:$0xff]
    %v4139 = vld [vmem:[#allocation3 + $0x1d8] sm:$0xff]
    %v4140 = vld [vmem:[#allocation3 + $0x1e0] sm:$0xff]
    %v4141 = vld [vmem:[#allocation3 + $0x1e8] sm:$0xff]
    %v4142 = vld [vmem:[#allocation3 + $0x1f0] sm:$0xff]
    %v4143 = vld [vmem:[#allocation3 + $0x1f8] sm:$0xff]
    %v4144 = vld [vmem:[#allocation3 + $0x200] sm:$0xff]
    %v4145 = vld [vmem:[#allocation3 + $0x208] sm:$0xff]
    %v4146 = vld [vmem:[#allocation3 + $0x210] sm:$0xff]
    %v4147 = vld [vmem:[#allocation3 + $0x218] sm:$0xff]
    %v4148 = vld [vmem:[#allocation3 + $0x220] sm:$0xff]
    %v4149 = vld [vmem:[#allocation3 + $0x228] sm:$0xff]
    %v4150 = vld [vmem:[#allocation3 + $0x230] sm:$0xff]
    %v4151 = vld [vmem:[#allocation3 + $0x238] sm:$0xff]
    %v4152 = vld [vmem:[#allocation3 + $0x240] sm:$0xff]
    %v4153 = vld [vmem:[#allocation3 + $0x248] sm:$0xff]
    %v4154 = vld [vmem:[#allocation3 + $0x250] sm:$0xff]
    %v4155 = vld [vmem:[#allocation3 + $0x258] sm:$0xff]
    %v4156 = vld [vmem:[#allocation3 + $0x260] sm:$0xff]
    %v4157 = vld [vmem:[#allocation3 + $0x268] sm:$0xff]
    %v4158 = vld [vmem:[#allocation3 + $0x270] sm:$0xff]
    %v4159 = vld [vmem:[#allocation3 + $0x278] sm:$0xff]
    %v4160 = vld [vmem:[#allocation3 + $0x280] sm:$0xff]
    %v4161 = vld [vmem:[#allocation3 + $0x288] sm:$0xff]
    %v4162 = vld [vmem:[#allocation3 + $0x290] sm:$0xff]
    %v4163 = vld [vmem:[#allocation3 + $0x298] sm:$0xff]
    %v4164 = vld [vmem:[#allocation3 + $0x2a0] sm:$0xff]
    %v4165 = vld [vmem:[#allocation3 + $0x2a8] sm:$0xff]
    %v4166 = vld [vmem:[#allocation3 + $0x2b0] sm:$0xff]
    %v4167 = vld [vmem:[#allocation3 + $0x2b8] sm:$0xff]
    %v4168 = vld [vmem:[#allocation3 + $0x2c0] sm:$0xff]
    %v4169 = vld [vmem:[#allocation3 + $0x2c8] sm:$0xff]
    %v4170 = vld [vmem:[#allocation3 + $0x2d0] sm:$0xff]
    %v4171 = vld [vmem:[#allocation3 + $0x2d8] sm:$0xff]
    %v4172 = vld [vmem:[#allocation3 + $0x2e0] sm:$0xff]
    %v4173 = vld [vmem:[#allocation3 + $0x2e8] sm:$0xff]
    %v4174 = vld [vmem:[#allocation3 + $0x2f0] sm:$0xff]
    %v4175 = vld [vmem:[#allocation3 + $0x2f8] sm:$0xff]
    %v4176 = vld [vmem:[#allocation3 + $0x300] sm:$0xff]
    %v4177 = vld [vmem:[#allocation3 + $0x308] sm:$0xff]
    %v4178 = vld [vmem:[#allocation3 + $0x310] sm:$0xff]
    %v4179 = vld [vmem:[#allocation3 + $0x318] sm:$0xff]
    %v4180 = vld [vmem:[#allocation3 + $0x320] sm:$0xff]
    %v4181 = vld [vmem:[#allocation3 + $0x328] sm:$0xff]
    %v4182 = vld [vmem:[#allocation3 + $0x330] sm:$0xff]
    %v4183 = vld [vmem:[#allocation3 + $0x338] sm:$0xff]
    %v4184 = vld [vmem:[#allocation3 + $0x340] sm:$0xff]
    %v4185 = vld [vmem:[#allocation3 + $0x348] sm:$0xff]
    %v4186 = vld [vmem:[#allocation3 + $0x350] sm:$0xff]
    %v4187 = vld [vmem:[#allocation3 + $0x358] sm:$0xff]
    %v4188 = vld [vmem:[#allocation3 + $0x360] sm:$0xff]
    %v4189 = vld [vmem:[#allocation3 + $0x368] sm:$0xff]
    %v4190 = vld [vmem:[#allocation3 + $0x370] sm:$0xff]
    %v4191 = vld [vmem:[#allocation3 + $0x378] sm:$0xff]
    %v4192 = vld [vmem:[#allocation3 + $0x380] sm:$0xff]
    %v4193 = vld [vmem:[#allocation3 + $0x388] sm:$0xff]
    %v4194 = vld [vmem:[#allocation3 + $0x390] sm:$0xff]
    %v4195 = vld [vmem:[#allocation3 + $0x398] sm:$0xff]
    %v4196 = vld [vmem:[#allocation3 + $0x3a0] sm:$0xff]
    %v4197 = vld [vmem:[#allocation3 + $0x3a8] sm:$0xff]
    %v4198 = vld [vmem:[#allocation3 + $0x3b0] sm:$0xff]
    %v4199 = vld [vmem:[#allocation3 + $0x3b8] sm:$0xff]
    %v4200 = vld [vmem:[#allocation3 + $0x3c0] sm:$0xff]
    %v4201 = vld [vmem:[#allocation3 + $0x3c8] sm:$0xff]
    %v4202 = vld [vmem:[#allocation3 + $0x3d0] sm:$0xff]
    %v4203 = vld [vmem:[#allocation3 + $0x3d8] sm:$0xff]
    %v4204 = vld [vmem:[#allocation3 + $0x3e0] sm:$0xff]
    %v4205 = vld [vmem:[#allocation3 + $0x3e8] sm:$0xff]
    %v4206 = vld [vmem:[#allocation3 + $0x3f0] sm:$0xff]
    %v4207 = vld [vmem:[#allocation3 + $0x3f8] sm:$0xff]
    %v4208 = vadd.f32 %v4080, %v4081
    %v4209 = vadd.f32 %v4208, %v4082
    %v4210 = vadd.f32 %v4209, %v4083
    %v4211 = vadd.f32 %v4210, %v4084
    %v4212 = vadd.f32 %v4211, %v4085
    %v4213 = vadd.f32 %v4212, %v4086
    %v4214 = vadd.f32 %v4213, %v4087
    %v4215 = vadd.f32 %v4214, %v4088
    %v4216 = vadd.f32 %v4215, %v4089
    %v4217 = vadd.f32 %v4216, %v4090
    %v4218 = vadd.f32 %v4217, %v4091
    %v4219 = vadd.f32 %v4218, %v4092
    %v4220 = vadd.f32 %v4219, %v4093
    %v4221 = vadd.f32 %v4220, %v4094
    %v4222 = vadd.f32 %v4221, %v4095
    %v4223 = vadd.f32 %v4222, %v4096
    %v4224 = vadd.f32 %v4223, %v4097
    %v4225 = vadd.f32 %v4224, %v4098
    %v4226 = vadd.f32 %v4225, %v4099
    %v4227 = vadd.f32 %v4226, %v4100
    %v4228 = vadd.f32 %v4227, %v4101
    %v4229 = vadd.f32 %v4228, %v4102
    %v4230 = vadd.f32 %v4229, %v4103
    %v4231 = vadd.f32 %v4230, %v4104
    %v4232 = vadd.f32 %v4231, %v4105
    %v4233 = vadd.f32 %v4232, %v4106
    %v4234 = vadd.f32 %v4233, %v4107
    %v4235 = vadd.f32 %v4234, %v4108
    %v4236 = vadd.f32 %v4235, %v4109
    %v4237 = vadd.f32 %v4236, %v4110
    %v4238 = vadd.f32 %v4237, %v4111
    %v4239 = vadd.f32 %v4238, %v4112
    %v4240 = vadd.f32 %v4239, %v4113
    %v4241 = vadd.f32 %v4240, %v4114
    %v4242 = vadd.f32 %v4241, %v4115
    %v4243 = vadd.f32 %v4242, %v4116
    %v4244 = vadd.f32 %v4243, %v4117
    %v4245 = vadd.f32 %v4244, %v4118
    %v4246 = vadd.f32 %v4245, %v4119
    %v4247 = vadd.f32 %v4246, %v4120
    %v4248 = vadd.f32 %v4247, %v4121
    %v4249 = vadd.f32 %v4248, %v4122
    %v4250 = vadd.f32 %v4249, %v4123
    %v4251 = vadd.f32 %v4250, %v4124
    %v4252 = vadd.f32 %v4251, %v4125
    %v4253 = vadd.f32 %v4252, %v4126
    %v4254 = vadd.f32 %v4253, %v4127
    %v4255 = vadd.f32 %v4254, %v4128
    %v4256 = vadd.f32 %v4255, %v4129
    %v4257 = vadd.f32 %v4256, %v4130
    %v4258 = vadd.f32 %v4257, %v4131
    %v4259 = vadd.f32 %v4258, %v4132
    %v4260 = vadd.f32 %v4259, %v4133
    %v4261 = vadd.f32 %v4260, %v4134
    %v4262 = vadd.f32 %v4261, %v4135
    %v4263 = vadd.f32 %v4262, %v4136
    %v4264 = vadd.f32 %v4263, %v4137
    %v4265 = vadd.f32 %v4264, %v4138
    %v4266 = vadd.f32 %v4265, %v4139
    %v4267 = vadd.f32 %v4266, %v4140
    %v4268 = vadd.f32 %v4267, %v4141
    %v4269 = vadd.f32 %v4268, %v4142
    %v4270 = vadd.f32 %v4269, %v4143
    %v4271 = vadd.f32 %v4270, %v4144
    %v4272 = vadd.f32 %v4271, %v4145
    %v4273 = vadd.f32 %v4272, %v4146
    %v4274 = vadd.f32 %v4273, %v4147
    %v4275 = vadd.f32 %v4274, %v4148
    %v4276 = vadd.f32 %v4275, %v4149
    %v4277 = vadd.f32 %v4276, %v4150
    %v4278 = vadd.f32 %v4277, %v4151
    %v4279 = vadd.f32 %v4278, %v4152
    %v4280 = vadd.f32 %v4279, %v4153
    %v4281 = vadd.f32 %v4280, %v4154
    %v4282 = vadd.f32 %v4281, %v4155
    %v4283 = vadd.f32 %v4282, %v4156
    %v4284 = vadd.f32 %v4283, %v4157
    %v4285 = vadd.f32 %v4284, %v4158
    %v4286 = vadd.f32 %v4285, %v4159
    %v4287 = vadd.f32 %v4286, %v4160
    %v4288 = vadd.f32 %v4287, %v4161
    %v4289 = vadd.f32 %v4288, %v4162
    %v4290 = vadd.f32 %v4289, %v4163
    %v4291 = vadd.f32 %v4290, %v4164
    %v4292 = vadd.f32 %v4291, %v4165
    %v4293 = vadd.f32 %v4292, %v4166
    %v4294 = vadd.f32 %v4293, %v4167
    %v4295 = vadd.f32 %v4294, %v4168
    %v4296 = vadd.f32 %v4295, %v4169
    %v4297 = vadd.f32 %v4296, %v4170
    %v4298 = vadd.f32 %v4297, %v4171
    %v4299 = vadd.f32 %v4298, %v4172
    %v4300 = vadd.f32 %v4299, %v4173
    %v4301 = vadd.f32 %v4300, %v4174
    %v4302 = vadd.f32 %v4301, %v4175
    %v4303 = vadd.f32 %v4302, %v4176
    %v4304 = vadd.f32 %v4303, %v4177
    %v4305 = vadd.f32 %v4304, %v4178
    %v4306 = vadd.f32 %v4305, %v4179
    %v4307 = vadd.f32 %v4306, %v4180
    %v4308 = vadd.f32 %v4307, %v4181
    %v4309 = vadd.f32 %v4308, %v4182
    %v4310 = vadd.f32 %v4309, %v4183
    %v4311 = vadd.f32 %v4310, %v4184
    %v4312 = vadd.f32 %v4311, %v4185
    %v4313 = vadd.f32 %v4312, %v4186
    %v4314 = vadd.f32 %v4313, %v4187
    %v4315 = vadd.f32 %v4314, %v4188
    %v4316 = vadd.f32 %v4315, %v4189
    %v4317 = vadd.f32 %v4316, %v4190
    %v4318 = vadd.f32 %v4317, %v4191
    %v4319 = vadd.f32 %v4318, %v4192
    %v4320 = vadd.f32 %v4319, %v4193
    %v4321 = vadd.f32 %v4320, %v4194
    %v4322 = vadd.f32 %v4321, %v4195
    %v4323 = vadd.f32 %v4322, %v4196
    %v4324 = vadd.f32 %v4323, %v4197
    %v4325 = vadd.f32 %v4324, %v4198
    %v4326 = vadd.f32 %v4325, %v4199
    %v4327 = vadd.f32 %v4326, %v4200
    %v4328 = vadd.f32 %v4327, %v4201
    %v4329 = vadd.f32 %v4328, %v4202
    %v4330 = vadd.f32 %v4329, %v4203
    %v4331 = vadd.f32 %v4330, %v4204
    %v4332 = vadd.f32 %v4331, %v4205
    %v4333 = vadd.f32 %v4332, %v4206
    %v4334 = vadd.f32 %v4333, %v4207
    %v4335 = vrot.slane %v4334, 4
    %v4336 = vadd.f32 %v4334, %v4335
    %v4337 = vrot.slane %v4336, 2
    %v4338 = vadd.f32 %v4336, %v4337
    %v4339 = vrot.slane %v4338, 1
    %v4340 = vadd.f32 %v4338, %v4339
    %4341 = vst [vmem:[%s2 + $0x1] sm:$0x1] %v4340
  $region17: #{depth_loss.1} parent=0 // pred_fallthru
    _
  // Predicated region
  $region18: #{depth_loss.1} parent=0 // pred_check
    _
  $region19: #{depth_loss.1} parent=0 // pred_check_branch
    %4343 = sbr.rel (0) target = $region21
  $region20: #{depth_loss.1} parent=0 // pred_region
    _
  $region21: #{depth_loss.1} parent=0 // pred_fallthru
    _
  // Predicated region
  $region22: #{depth_loss.1} parent=0 // pred_check
    _
  $region23: #{depth_loss.1} parent=0 // pred_check_branch
    %4345 = sbr.rel (0) target = $region25
  $region24: #{depth_loss.1} parent=0 // pred_region
    _
  $region25: #{depth_loss.1} parent=0 // pred_fallthru
    _

</llo_original>
